<compile_context>
chip_gen: v5e
topology: v5e:2x2
jax: 0.10.0
libtpu: 0.0.40
codegen_flags: <defaults>
</compile_context>

<pallas_src>
import functools

import jax
import jax.numpy as jnp
import numpy as np
from jax import lax
from jax.experimental import pallas as pl
from jax.experimental.pallas import tpu as pltpu

NUM_ACTIONS = 18
IN_CHANNELS = 4
TB_MAX = 16                       # images per grid step (amortizes ~0.35us/step)
_VMEM_LIMIT = 32 * 1024 * 1024    # well above actual use; safe on v5e/v6e/v7x


def _pick_tb(batch):
    """>=2 grid steps whenever B>=2 (v7x dual-TC), capped at TB_MAX."""
    return max(1, min(TB_MAX, batch // 2))


# ---------------------------------------------------------------------------
# Implicit-GEMM conv kernel.
# Input per image is a (rows, channels)-flattened blocked map; for each tap t
# the contribution is a single contiguous shifted slab x[off_t : off_t+Jp] @ W_t
# accumulated in f32.  Padded output rows/columns compute finite garbage and
# are discarded (or reused as scratch) downstream.
# ---------------------------------------------------------------------------
def _conv_kernel(x_ref, w_ref, b_ref, o_ref, *, offsets, jp, relu):
    bias = b_ref[...]                                   # (1, O) f32
    tb = x_ref.shape[0]

    @pl.loop(0, tb)
    def _(bi):
        acc = jnp.dot(x_ref[bi, offsets[0]:offsets[0] + jp, :], w_ref[0],
                      preferred_element_type=jnp.float32)
        for t in range(1, len(offsets)):
            acc = acc + jnp.dot(x_ref[bi, offsets[t]:offsets[t] + jp, :],
                                w_ref[t], preferred_element_type=jnp.float32)
        y = acc + bias
        if relu:
            y = jnp.maximum(y, 0.0)
        o_ref[bi] = y.astype(o_ref.dtype)


def pallas_conv(x, w, b, *, offsets, jp, out_ch, tb, out_dtype=jnp.bfloat16):
    bp_, rows, ch = x.shape
    n_blk = bp_ // tb
    return pl.pallas_call(
        functools.partial(_conv_kernel, offsets=offsets, jp=jp, relu=True),
        grid=(n_blk,),
        in_specs=[pl.BlockSpec((tb, rows, ch), lambda i: (i, 0, 0)),
                  pl.BlockSpec(w.shape, lambda i: (0, 0, 0)),   # resident weight
                  pl.BlockSpec(b.shape, lambda i: (0, 0))],
        out_specs=pl.BlockSpec((tb, jp, out_ch), lambda i: (i, 0, 0)),
        out_shape=jax.ShapeDtypeStruct((bp_, jp, out_ch), out_dtype),
        compiler_params=pltpu.CompilerParams(
            dimension_semantics=("parallel",),
            vmem_limit_bytes=_VMEM_LIMIT),
    )(x, w, b)


# ---------------------------------------------------------------------------
# Fused attention core + fc4 + fc5 kernel (TB images per grid step).
# ---------------------------------------------------------------------------
def _attention_fc_kernel(fm_ref, goal_ref, wtpg_ref, btpg_ref, wp_ref, bp_ref,
                         wpt2_ref, bpt2_ref, wa_ref, ba_ref,
                         w4_ref, b4_ref, w5h_ref, w5g_ref, b5_ref,
                         q_ref, attn_ref, agg_sc):
    f32 = jnp.float32
    tb = goal_ref.shape[0]
    fm = fm_ref[...].astype(f32)                        # (TB*49, 64) bf16 -> f32
    goal = goal_ref[...]                                # (TB, 8) f32

    # Shared-weight 1x1 projections as whole-block 2-D matmuls (TB*49 MXU rows).
    proj = jnp.dot(fm, wtpg_ref[...],
                   preferred_element_type=f32) + btpg_ref[...]   # (TB*49, 96)
    ag = jnp.dot(goal, wa_ref[...],
                 preferred_element_type=f32) + ba_ref[...]       # (TB, 32)

    wp, bp = wp_ref[...], bp_ref[...]
    wpt2, bpt2 = wpt2_ref[...], bpt2_ref[...]
    dn_t = (((1,), (1,)), ((), ()))                     # A @ B^T (contract last dims)

    for b in range(tb):
        r0 = b * 49
        t1 = proj[r0:r0 + 49, 0:32]
        ph = proj[r0:r0 + 49, 32:64]
        gx = proj[r0:r0 + 49, 64:96]

        # Self-attention over the 49 positions.
        sim = lax.dot_general(t1, ph, dn_t, preferred_element_type=f32)  # (49,49)
        sim = sim - jnp.max(sim, axis=-1, keepdims=True)
        e = jnp.exp(sim)
        scores = e * pl.reciprocal(jnp.sum(e, axis=-1, keepdims=True), approx=True)

        sa = jnp.dot(scores, gx, preferred_element_type=f32)             # (49,32)
        sa_fm = jnp.dot(sa, wp, preferred_element_type=f32) + bp         # (49,64)
        # theta2 folded into p: t2 = sa @ (Wp@Wt2) + (bp@Wt2 + bt2)
        t2 = jnp.dot(sa, wpt2, preferred_element_type=f32) + bpt2        # (49,32)

        # Goal attention over positions (exact reciprocal for argmax stability).
        asc = lax.dot_general(ag[b:b + 1, :], t2, dn_t,
                              preferred_element_type=f32)                # (1,49)
        asc = asc - jnp.max(asc, axis=-1, keepdims=True)
        ea = jnp.exp(asc)
        attn = ea / jnp.sum(ea, axis=-1, keepdims=True)

        agg_sc[b:b + 1, :] = jnp.dot(attn, sa_fm,
                                     preferred_element_type=f32)         # (1,64)
        attn_ref[b:b + 1, :] = attn

    # Fused fc4 / fc5 tail over the whole TB block (w5 split -> no concat).
    h = jnp.maximum(jnp.dot(agg_sc[...], w4_ref[...],
                            preferred_element_type=f32) + b4_ref[...], 0.0)
    q = (jnp.dot(h, w5h_ref[...], preferred_element_type=f32)
         + jnp.dot(goal, w5g_ref[...], preferred_element_type=f32)
         + b5_ref[...])
    q_ref[...] = q


def attention_fc(fm, goals, ap, tb):
    """fm: (n_blk, TB*49, 64) bf16, goals: (n_blk, TB, 8) f32 -> q, attn."""
    n_blk = fm.shape[0]
    weights = [ap["w_tpg"], ap["b_tpg"], ap["wp"], ap["bp"], ap["wpt2"],
               ap["bpt2"], ap["wa"], ap["ba"], ap["w4"], ap["b4"],
               ap["w5h"], ap["w5g"], ap["b5"]]
    in_specs = ([pl.BlockSpec((None, tb * 49, 64), lambda i: (i, 0, 0)),
                 pl.BlockSpec((None, tb, 8), lambda i: (i, 0, 0))]
                + [pl.BlockSpec(w.shape, lambda i: (0, 0)) for w in weights])
    out_specs = (pl.BlockSpec((None, tb, NUM_ACTIONS), lambda i: (i, 0, 0)),
                 pl.BlockSpec((None, tb, 49), lambda i: (i, 0, 0)))
    out_shape = (jax.ShapeDtypeStruct((n_blk, tb, NUM_ACTIONS), jnp.float32),
                 jax.ShapeDtypeStruct((n_blk, tb, 49), jnp.float32))
    q, attn = pl.pallas_call(
        _attention_fc_kernel,
        grid=(n_blk,),
        in_specs=in_specs,
        out_specs=out_specs,
        out_shape=out_shape,
        scratch_shapes=[pltpu.VMEM((tb, 64), jnp.float32)],
        compiler_params=pltpu.CompilerParams(
            dimension_semantics=("parallel",),
            vmem_limit_bytes=_VMEM_LIMIT),
    )(fm, goals, *weights)
    return q.reshape(n_blk * tb, NUM_ACTIONS), attn.reshape(n_blk * tb, 49)


# ---------------------------------------------------------------------------
# One-time parameter preparation (hoisted out of the forward).
# ---------------------------------------------------------------------------
def prepare_params(p):
    def blk_conv1(w):   # (32,4,8,8) -> (4 taps, 64, 32); tap=(th,tw), ch=(hi,wi,c)
        w = w.reshape(32, 4, 2, 4, 2, 4)            # o, c, th, hi, tw, wi
        return w.transpose(2, 4, 3, 5, 1, 0).reshape(4, 64, 32).astype(jnp.bfloat16)

    def blk_conv2(w):   # (64,32,4,4) -> (4, 128, 64)
        w = w.reshape(64, 32, 2, 2, 2, 2)           # o, c, th, hi, tw, wi
        return w.transpose(2, 4, 3, 5, 1, 0).reshape(4, 128, 64).astype(jnp.bfloat16)

    def blk_conv3(w):   # (64,64,3,3) -> (9, 64, 64), tap = kh*3+kw
        return w.transpose(2, 3, 1, 0).reshape(9, 64, 64).astype(jnp.bfloat16)

    def w1x1(w):        # (O,C,1,1) -> (C,O)
        return w.reshape(w.shape[0], w.shape[1]).T

    hi = jax.lax.Precision.HIGHEST
    wt1, wphi, wg = w1x1(p["theta1_w"]), w1x1(p["phi_w"]), w1x1(p["g_w"])
    wp, wt2 = w1x1(p["p_w"]), w1x1(p["theta2_w"])
    bp = p["p_b"][None, :]
    w5 = p["fc5_w"]                                  # (18, 520)
    return dict(
        w1=blk_conv1(p["conv1_w"]), b1=p["conv1_b"][None, :],
        w2=blk_conv2(p["conv2_w"]), b2=p["conv2_b"][None, :],
        w3=blk_conv3(p["conv3_w"]), b3=p["conv3_b"][None, :],
        w_tpg=jnp.concatenate([wt1, wphi, wg], axis=1),                    # (64,96)
        b_tpg=jnp.concatenate([p["theta1_b"], p["phi_b"], p["g_b"]])[None, :],
        wp=wp, bp=bp,                                                      # (32,64),(1,64)
        wpt2=jnp.dot(wp, wt2, precision=hi),                               # (32,32)
        bpt2=jnp.dot(bp, wt2, precision=hi) + p["theta2_b"][None, :],      # (1,32)
        wa=p["alpha_w"].T, ba=p["alpha_b"][None, :],
        w4=p["fc4_w"].T, b4=p["fc4_b"][None, :],
        w5h=w5[:, :512].T, w5g=w5[:, 512:].T, b5=p["fc5_b"][None, :],
    )


def init_params(key):
    ks = jax.random.split(key, 24)

    def w(k, shape, scale=0.05):
        return jax.random.normal(k, shape, jnp.float32) * scale

    return dict(
        conv1_w=w(ks[0], (32, IN_CHANNELS, 8, 8)), conv1_b=w(ks[1], (32,)),
        conv2_w=w(ks[2], (64, 32, 4, 4)),          conv2_b=w(ks[3], (64,)),
        conv3_w=w(ks[4], (64, 64, 3, 3)),          conv3_b=w(ks[5], (64,)),
        theta1_w=w(ks[6], (32, 64, 1, 1)),         theta1_b=w(ks[7], (32,)),
        phi_w=w(ks[8], (32, 64, 1, 1)),            phi_b=w(ks[9], (32,)),
        g_w=w(ks[10], (32, 64, 1, 1)),             g_b=w(ks[11], (32,)),
        p_w=w(ks[12], (64, 32, 1, 1)),             p_b=w(ks[13], (64,)),
        theta2_w=w(ks[14], (32, 64, 1, 1)),        theta2_b=w(ks[15], (32,)),
        alpha_w=w(ks[16], (32, 8)),                alpha_b=w(ks[17], (32,)),
        fc4_w=w(ks[18], (512, 64)),                fc4_b=w(ks[19], (512,)),
        fc5_w=w(ks[20], (NUM_ACTIONS, 512 + 8)),   fc5_b=w(ks[21], (NUM_ACTIONS,)),
    )


# ---------------------------------------------------------------------------
# Forward pass.
# ---------------------------------------------------------------------------
def da2qn_forward(prep, frames, goals):
    B = goals.shape[0]
    assert frames.shape[1:] == (IN_CHANNELS, 84, 84), "DA2QN expects 84x84x4 frames"
    goals = goals.reshape(B, 8).astype(jnp.float32)

    tb = _pick_tb(B)
    n_blk = -(-B // tb)
    bp_ = n_blk * tb
    if bp_ != B:
        frames = jnp.pad(frames, ((0, bp_ - B), (0, 0), (0, 0), (0, 0)))
        goals_p = jnp.pad(goals, ((0, bp_ - B), (0, 0)))
    else:
        goals_p = goals

    # L0: NCHW -> 4x4-superpixel blocked rows (the single relayout of raw input).
    # Row index = hb*21 + wb, channel = hi*16 + wi*4 + c.
    x = frames.reshape(bp_, 4, 21, 4, 21, 4)            # b, c, hb, hi, wb, wi
    x = x.transpose(0, 2, 4, 3, 5, 1).reshape(bp_, 441, 64)
    x = jnp.pad(x, ((0, 0), (0, 7), (0, 0))).astype(jnp.bfloat16)   # (bp,448,64)

    # conv1 (k8,s4) == k2,s1 over 21x21 superpixels -> padded (20x21) rows, 32ch.
    y1 = pallas_conv(x, prep["w1"], prep["b1"],
                     offsets=(0, 1, 21, 22), jp=420, out_ch=32, tb=tb)

    # Re-block 2x2 for conv2 (k4,s2 -> k2,s1 over 10x10 superpixels, 128ch).
    y1 = y1.reshape(bp_, 20, 21, 32)[:, :, :20, :]
    y1 = y1.reshape(bp_, 10, 2, 10, 2, 32).transpose(0, 1, 3, 2, 4, 5)
    y1 = jnp.pad(y1.reshape(bp_, 100, 128), ((0, 0), (0, 12), (0, 0)))  # (bp,112,128)

    # conv2 -> rows on a 10-wide grid; extra rows/col are finite scratch that
    # only ever feeds invalid conv3 outputs.
    y2 = pallas_conv(y1, prep["w2"], prep["b2"],
                     offsets=(0, 1, 10, 11), jp=96, out_ch=64, tb=tb)

    # conv3 (k3,s1) consumes conv2's padded layout directly -> (bp, 70, 64) bf16.
    y3 = pallas_conv(y2, prep["w3"], prep["b3"],
                     offsets=(0, 1, 2, 10, 11, 12, 20, 21, 22),
                     jp=70, out_ch=64, tb=tb)

    # Extract the 7x7 valid positions -> (n_blk, tb*49, 64) bf16 feature map.
    fm = y3.reshape(bp_, 7, 10, 64)[:, :, :7, :].reshape(n_blk, tb * 49, 64)
    goal3 = goals_p.reshape(n_blk, tb, 8)

    q, attn = attention_fc(fm, goal3, prep, tb)         # fused attn + fc4 + fc5
    return q[:B], attn[:B].reshape(B, 49, 1)


# ---------------------------------------------------------------------------
# Pure-JAX reference (mirrors the PyTorch forward) for a sanity check.
# ---------------------------------------------------------------------------
def reference_forward(p, frames, goals):
    def conv(x, w, b, s):
        y = jax.lax.conv_general_dilated(
            x, w, (s, s), "VALID", dimension_numbers=("NCHW", "OIHW", "NCHW"),
            precision=jax.lax.Precision.HIGHEST)
        return y + b[None, :, None, None]

    def conv1x1(x, w, b):
        o, c = w.shape[0], w.shape[1]
        return (jnp.einsum("bchw,oc->bohw", x, w.reshape(o, c),
                           precision=jax.lax.Precision.HIGHEST)
                + b[None, :, None, None])

    B = goals.shape[0]
    x = jax.nn.relu(conv(frames, p["conv1_w"], p["conv1_b"], 4))
    x = jax.nn.relu(conv(x, p["conv2_w"], p["conv2_b"], 2))
    fmaps = jax.nn.relu(conv(x, p["conv3_w"], p["conv3_b"], 1))
    theta1_x = conv1x1(fmaps, p["theta1_w"], p["theta1_b"]).reshape(B, 32, 49).transpose(0, 2, 1)
    phi_x = conv1x1(fmaps, p["phi_w"], p["phi_b"]).reshape(B, 32, 49)
    scores = jax.nn.softmax(jnp.matmul(theta1_x, phi_x), axis=2)
    g_x = conv1x1(fmaps, p["g_w"], p["g_b"]).reshape(B, 32, 49).transpose(0, 2, 1)
    sa = jnp.matmul(scores, g_x)
    sa_fm = conv1x1(sa.transpose(0, 2, 1).reshape(B, 32, 7, 7), p["p_w"], p["p_b"])
    theta2_x = conv1x1(sa_fm, p["theta2_w"], p["theta2_b"]).reshape(B, 32, 49)
    alpha_g = (goals.reshape(B, 8) @ p["alpha_w"].T + p["alpha_b"])[:, None, :]
    attn_w = jax.nn.softmax(jnp.matmul(alpha_g, theta2_x).reshape(B, 49, 1), axis=1)
    sa_pc = sa_fm.reshape(B, 64, 49).transpose(0, 2, 1)
    agg = jnp.sum(sa_pc * attn_w, axis=1)
    h = jax.nn.relu(agg @ p["fc4_w"].T + p["fc4_b"])
    feat = jnp.concatenate([h, goals.reshape(B, -1)], axis=1)
    return feat @ p["fc5_w"].T + p["fc5_b"], attn_w


if __name__ == "__main__":
    key = jax.random.PRNGKey(0)
    kparam, kf, kg = jax.random.split(key, 3)

    B = 2
    # 84x84 input produces the 7x7 (=49) feature grid the module hardcodes.
    frames = jax.random.normal(kf, (B, IN_CHANNELS, 84, 84), jnp.float32)
    goals = jax.random.normal(kg, (B, 8), jnp.float32)
    params = init_params(kparam)

    prep = prepare_params(params)          # one-time weight relayout / fusion
    fwd = jax.jit(da2qn_forward)
    q, attn_w = fwd(prep, frames, goals)
    q = jax.block_until_ready(q)
    attn_w = jax.block_until_ready(attn_w)

    q_ref, attn_ref = reference_forward(params, frames, goals)

    assert q.shape == (B, NUM_ACTIONS) and attn_w.shape == (B, 49, 1)
    assert np.all(np.isfinite(np.asarray(q)))
    # Conv operands and the stored feature maps are bf16 (f32 MXU accumulation);
    # tolerance is sized accordingly.
    np.testing.assert_allclose(np.asarray(q), np.asarray(q_ref), atol=3e-2, rtol=3e-2)
    np.testing.assert_allclose(np.asarray(attn_w), np.asarray(attn_ref), atol=3e-2, rtol=3e-2)

    print("KERNEL_OK")
</pallas_src>

<mosaic_0001>
module attributes {stable_mosaic.version = 11 : i64} {
  func.func @_conv_kernel(%arg0: i32, %arg1: memref<1x448x64xbf16, #tpu.memory_space<vmem>>, %arg2: memref<4x64x32xbf16, #tpu.memory_space<vmem>>, %arg3: memref<1x32xf32, #tpu.memory_space<vmem>>, %arg4: memref<1x420x32xbf16, #tpu.memory_space<vmem>>) attributes {dimension_semantics = [#tpu.dimension_semantics<parallel>], iteration_bounds = array<i64: 2>, scalar_prefetch = 0 : i64, scratch_operands = 0 : i64, tpu.core_type = #tpu.core_type<tc>, window_params = [{transform_indices = @transform_0, window_bounds = array<i64: 1, 448, 64>}, {pipeline_mode = #tpu.pipeline_mode<synchronous>, transform_indices = @transform_1, window_bounds = array<i64: 4, 64, 32>}, {pipeline_mode = #tpu.pipeline_mode<synchronous>, transform_indices = @transform_2, window_bounds = array<i64: 1, 32>}, {transform_indices = @transform_3, window_bounds = array<i64: 1, 420, 32>}]} {
    %c0 = arith.constant 0 : index
    %c0_0 = arith.constant 0 : index
    %0 = vector.load %arg3[%c0, %c0_0] : memref<1x32xf32, #tpu.memory_space<vmem>>, vector<1x32xf32>
    %c0_i32 = arith.constant 0 : i32
    %c1_i32 = arith.constant 1 : i32
    %1 = arith.muli %c0_i32, %c1_i32 : i32
    %c0_i32_1 = arith.constant 0 : i32
    %2 = arith.addi %c0_i32_1, %1 : i32
    %3 = arith.index_cast %2 : i32 to index
    %c0_2 = arith.constant 0 : index
    %c0_3 = arith.constant 0 : index
    %4 = vector.load %arg1[%3, %c0_2, %c0_3] : memref<1x448x64xbf16, #tpu.memory_space<vmem>>, vector<1x420x64xbf16>
    %5 = vector.shape_cast %4 : vector<1x420x64xbf16> to vector<420x64xbf16>
    %c0_4 = arith.constant 0 : index
    %c0_5 = arith.constant 0 : index
    %c0_6 = arith.constant 0 : index
    %6 = vector.load %arg2[%c0_4, %c0_5, %c0_6] : memref<4x64x32xbf16, #tpu.memory_space<vmem>>, vector<1x64x32xbf16>
    %7 = vector.shape_cast %6 : vector<1x64x32xbf16> to vector<64x32xbf16>
    %cst = arith.constant dense<0.000000e+00> : vector<420x32xf32>
    %8 = tpu.matmul %5, %7, %cst {dimension_numbers = #tpu.dot_dimension_numbers<[1], [0], [0], [1], [0, 0, 1, 1], [], []>} : vector<420x64xbf16>, vector<64x32xbf16>, vector<420x32xf32> -> vector<420x32xf32>
    %9 = arith.index_cast %2 : i32 to index
    %c1 = arith.constant 1 : index
    %c0_7 = arith.constant 0 : index
    %10 = vector.load %arg1[%9, %c1, %c0_7] : memref<1x448x64xbf16, #tpu.memory_space<vmem>>, vector<1x420x64xbf16>
    %11 = vector.shape_cast %10 : vector<1x420x64xbf16> to vector<420x64xbf16>
    %c1_8 = arith.constant 1 : index
    %c0_9 = arith.constant 0 : index
    %c0_10 = arith.constant 0 : index
    %12 = vector.load %arg2[%c1_8, %c0_9, %c0_10] : memref<4x64x32xbf16, #tpu.memory_space<vmem>>, vector<1x64x32xbf16>
    %13 = vector.shape_cast %12 : vector<1x64x32xbf16> to vector<64x32xbf16>
    %cst_11 = arith.constant dense<0.000000e+00> : vector<420x32xf32>
    %14 = tpu.matmul %11, %13, %cst_11 {dimension_numbers = #tpu.dot_dimension_numbers<[1], [0], [0], [1], [0, 0, 1, 1], [], []>} : vector<420x64xbf16>, vector<64x32xbf16>, vector<420x32xf32> -> vector<420x32xf32>
    %15 = arith.addf %8, %14 : vector<420x32xf32>
    %16 = arith.index_cast %2 : i32 to index
    %c21 = arith.constant 21 : index
    %c0_12 = arith.constant 0 : index
    %17 = vector.load %arg1[%16, %c21, %c0_12] : memref<1x448x64xbf16, #tpu.memory_space<vmem>>, vector<1x420x64xbf16>
    %18 = vector.shape_cast %17 : vector<1x420x64xbf16> to vector<420x64xbf16>
    %c2 = arith.constant 2 : index
    %c0_13 = arith.constant 0 : index
    %c0_14 = arith.constant 0 : index
    %19 = vector.load %arg2[%c2, %c0_13, %c0_14] : memref<4x64x32xbf16, #tpu.memory_space<vmem>>, vector<1x64x32xbf16>
    %20 = vector.shape_cast %19 : vector<1x64x32xbf16> to vector<64x32xbf16>
    %cst_15 = arith.constant dense<0.000000e+00> : vector<420x32xf32>
    %21 = tpu.matmul %18, %20, %cst_15 {dimension_numbers = #tpu.dot_dimension_numbers<[1], [0], [0], [1], [0, 0, 1, 1], [], []>} : vector<420x64xbf16>, vector<64x32xbf16>, vector<420x32xf32> -> vector<420x32xf32>
    %22 = arith.addf %15, %21 : vector<420x32xf32>
    %23 = arith.index_cast %2 : i32 to index
    %c22 = arith.constant 22 : index
    %c0_16 = arith.constant 0 : index
    %24 = vector.load %arg1[%23, %c22, %c0_16] : memref<1x448x64xbf16, #tpu.memory_space<vmem>>, vector<1x420x64xbf16>
    %25 = vector.shape_cast %24 : vector<1x420x64xbf16> to vector<420x64xbf16>
    %c3 = arith.constant 3 : index
    %c0_17 = arith.constant 0 : index
    %c0_18 = arith.constant 0 : index
    %26 = vector.load %arg2[%c3, %c0_17, %c0_18] : memref<4x64x32xbf16, #tpu.memory_space<vmem>>, vector<1x64x32xbf16>
    %27 = vector.shape_cast %26 : vector<1x64x32xbf16> to vector<64x32xbf16>
    %cst_19 = arith.constant dense<0.000000e+00> : vector<420x32xf32>
    %28 = tpu.matmul %25, %27, %cst_19 {dimension_numbers = #tpu.dot_dimension_numbers<[1], [0], [0], [1], [0, 0, 1, 1], [], []>} : vector<420x64xbf16>, vector<64x32xbf16>, vector<420x32xf32> -> vector<420x32xf32>
    %29 = arith.addf %22, %28 : vector<420x32xf32>
    %30 = vector.broadcast %0 : vector<1x32xf32> to vector<420x32xf32>
    %31 = arith.addf %29, %30 : vector<420x32xf32>
    %cst_20 = arith.constant 0.000000e+00 : f32
    %32 = vector.broadcast %cst_20 : f32 to vector<420x32xf32>
    %33 = arith.maximumf %31, %32 : vector<420x32xf32>
    %34 = arith.truncf %33 : vector<420x32xf32> to vector<420x32xbf16>
    %35 = arith.index_cast %2 : i32 to index
    %c0_21 = arith.constant 0 : index
    %c0_22 = arith.constant 0 : index
    %36 = vector.load %arg4[%35, %c0_21, %c0_22] : memref<1x420x32xbf16, #tpu.memory_space<vmem>>, vector<1x420x32xbf16>
    %37 = vector.shape_cast %36 : vector<1x420x32xbf16> to vector<420x32xbf16>
    %38 = vector.shape_cast %34 : vector<420x32xbf16> to vector<1x420x32xbf16>
    tpu.vector_store %arg4[%35, %c0_21, %c0_22], %38 {strides = array<i32>} : memref<1x420x32xbf16, #tpu.memory_space<vmem>>, vector<1x420x32xbf16>,
    %c1_i32_23 = arith.constant 1 : i32
    return
  }
  func.func @transform_0(%arg0: i32) -> (i32, i32, i32) {
    %c0_i32 = arith.constant 0 : i32
    %c0_i32_0 = arith.constant 0 : i32
    %c0_i32_1 = arith.constant 0 : i32
    return %arg0, %c0_i32, %c0_i32_0 : i32, i32, i32
  }
  func.func @transform_1(%arg0: i32) -> (i32, i32, i32) {
    %c0_i32 = arith.constant 0 : i32
    %c0_i32_0 = arith.constant 0 : i32
    %c0_i32_1 = arith.constant 0 : i32
    %c0_i32_2 = arith.constant 0 : i32
    return %c0_i32, %c0_i32_0, %c0_i32_1 : i32, i32, i32
  }
  func.func @transform_2(%arg0: i32) -> (i32, i32) {
    %c0_i32 = arith.constant 0 : i32
    %c0_i32_0 = arith.constant 0 : i32
    %c0_i32_1 = arith.constant 0 : i32
    return %c0_i32, %c0_i32_0 : i32, i32
  }
  func.func @transform_3(%arg0: i32) -> (i32, i32, i32) {
    %c0_i32 = arith.constant 0 : i32
    %c0_i32_0 = arith.constant 0 : i32
    %c0_i32_1 = arith.constant 0 : i32
    return %arg0, %c0_i32, %c0_i32_0 : i32, i32, i32
  }
}

module attributes {stable_mosaic.version = 11 : i64} {
  func.func @_conv_kernel(%arg0: i32, %arg1: memref<1x112x128xbf16, #tpu.memory_space<vmem>>, %arg2: memref<4x128x64xbf16, #tpu.memory_space<vmem>>, %arg3: memref<1x64xf32, #tpu.memory_space<vmem>>, %arg4: memref<1x96x64xbf16, #tpu.memory_space<vmem>>) attributes {dimension_semantics = [#tpu.dimension_semantics<parallel>], iteration_bounds = array<i64: 2>, scalar_prefetch = 0 : i64, scratch_operands = 0 : i64, tpu.core_type = #tpu.core_type<tc>, window_params = [{transform_indices = @transform_0, window_bounds = array<i64: 1, 112, 128>}, {pipeline_mode = #tpu.pipeline_mode<synchronous>, transform_indices = @transform_1, window_bounds = array<i64: 4, 128, 64>}, {pipeline_mode = #tpu.pipeline_mode<synchronous>, transform_indices = @transform_2, window_bounds = array<i64: 1, 64>}, {transform_indices = @transform_3, window_bounds = array<i64: 1, 96, 64>}]} {
    %c0 = arith.constant 0 : index
    %c0_0 = arith.constant 0 : index
    %0 = vector.load %arg3[%c0, %c0_0] : memref<1x64xf32, #tpu.memory_space<vmem>>, vector<1x64xf32>
    %c0_i32 = arith.constant 0 : i32
    %c1_i32 = arith.constant 1 : i32
    %1 = arith.muli %c0_i32, %c1_i32 : i32
    %c0_i32_1 = arith.constant 0 : i32
    %2 = arith.addi %c0_i32_1, %1 : i32
    %3 = arith.index_cast %2 : i32 to index
    %c0_2 = arith.constant 0 : index
    %c0_3 = arith.constant 0 : index
    %4 = vector.load %arg1[%3, %c0_2, %c0_3] : memref<1x112x128xbf16, #tpu.memory_space<vmem>>, vector<1x96x128xbf16>
    %5 = vector.shape_cast %4 : vector<1x96x128xbf16> to vector<96x128xbf16>
    %c0_4 = arith.constant 0 : index
    %c0_5 = arith.constant 0 : index
    %c0_6 = arith.constant 0 : index
    %6 = vector.load %arg2[%c0_4, %c0_5, %c0_6] : memref<4x128x64xbf16, #tpu.memory_space<vmem>>, vector<1x128x64xbf16>
    %7 = vector.shape_cast %6 : vector<1x128x64xbf16> to vector<128x64xbf16>
    %cst = arith.constant dense<0.000000e+00> : vector<96x64xf32>
    %8 = tpu.matmul %5, %7, %cst {dimension_numbers = #tpu.dot_dimension_numbers<[1], [0], [0], [1], [0, 0, 1, 1], [], []>} : vector<96x128xbf16>, vector<128x64xbf16>, vector<96x64xf32> -> vector<96x64xf32>
    %9 = arith.index_cast %2 : i32 to index
    %c1 = arith.constant 1 : index
    %c0_7 = arith.constant 0 : index
    %10 = vector.load %arg1[%9, %c1, %c0_7] : memref<1x112x128xbf16, #tpu.memory_space<vmem>>, vector<1x96x128xbf16>
    %11 = vector.shape_cast %10 : vector<1x96x128xbf16> to vector<96x128xbf16>
    %c1_8 = arith.constant 1 : index
    %c0_9 = arith.constant 0 : index
    %c0_10 = arith.constant 0 : index
    %12 = vector.load %arg2[%c1_8, %c0_9, %c0_10] : memref<4x128x64xbf16, #tpu.memory_space<vmem>>, vector<1x128x64xbf16>
    %13 = vector.shape_cast %12 : vector<1x128x64xbf16> to vector<128x64xbf16>
    %cst_11 = arith.constant dense<0.000000e+00> : vector<96x64xf32>
    %14 = tpu.matmul %11, %13, %cst_11 {dimension_numbers = #tpu.dot_dimension_numbers<[1], [0], [0], [1], [0, 0, 1, 1], [], []>} : vector<96x128xbf16>, vector<128x64xbf16>, vector<96x64xf32> -> vector<96x64xf32>
    %15 = arith.addf %8, %14 : vector<96x64xf32>
    %16 = arith.index_cast %2 : i32 to index
    %c10 = arith.constant 10 : index
    %c0_12 = arith.constant 0 : index
    %17 = vector.load %arg1[%16, %c10, %c0_12] : memref<1x112x128xbf16, #tpu.memory_space<vmem>>, vector<1x96x128xbf16>
    %18 = vector.shape_cast %17 : vector<1x96x128xbf16> to vector<96x128xbf16>
    %c2 = arith.constant 2 : index
    %c0_13 = arith.constant 0 : index
    %c0_14 = arith.constant 0 : index
    %19 = vector.load %arg2[%c2, %c0_13, %c0_14] : memref<4x128x64xbf16, #tpu.memory_space<vmem>>, vector<1x128x64xbf16>
    %20 = vector.shape_cast %19 : vector<1x128x64xbf16> to vector<128x64xbf16>
    %cst_15 = arith.constant dense<0.000000e+00> : vector<96x64xf32>
    %21 = tpu.matmul %18, %20, %cst_15 {dimension_numbers = #tpu.dot_dimension_numbers<[1], [0], [0], [1], [0, 0, 1, 1], [], []>} : vector<96x128xbf16>, vector<128x64xbf16>, vector<96x64xf32> -> vector<96x64xf32>
    %22 = arith.addf %15, %21 : vector<96x64xf32>
    %23 = arith.index_cast %2 : i32 to index
    %c11 = arith.constant 11 : index
    %c0_16 = arith.constant 0 : index
    %24 = vector.load %arg1[%23, %c11, %c0_16] : memref<1x112x128xbf16, #tpu.memory_space<vmem>>, vector<1x96x128xbf16>
    %25 = vector.shape_cast %24 : vector<1x96x128xbf16> to vector<96x128xbf16>
    %c3 = arith.constant 3 : index
    %c0_17 = arith.constant 0 : index
    %c0_18 = arith.constant 0 : index
    %26 = vector.load %arg2[%c3, %c0_17, %c0_18] : memref<4x128x64xbf16, #tpu.memory_space<vmem>>, vector<1x128x64xbf16>
    %27 = vector.shape_cast %26 : vector<1x128x64xbf16> to vector<128x64xbf16>
    %cst_19 = arith.constant dense<0.000000e+00> : vector<96x64xf32>
    %28 = tpu.matmul %25, %27, %cst_19 {dimension_numbers = #tpu.dot_dimension_numbers<[1], [0], [0], [1], [0, 0, 1, 1], [], []>} : vector<96x128xbf16>, vector<128x64xbf16>, vector<96x64xf32> -> vector<96x64xf32>
    %29 = arith.addf %22, %28 : vector<96x64xf32>
    %30 = vector.broadcast %0 : vector<1x64xf32> to vector<96x64xf32>
    %31 = arith.addf %29, %30 : vector<96x64xf32>
    %cst_20 = arith.constant 0.000000e+00 : f32
    %32 = vector.broadcast %cst_20 : f32 to vector<96x64xf32>
    %33 = arith.maximumf %31, %32 : vector<96x64xf32>
    %34 = arith.truncf %33 : vector<96x64xf32> to vector<96x64xbf16>
    %35 = arith.index_cast %2 : i32 to index
    %c0_21 = arith.constant 0 : index
    %c0_22 = arith.constant 0 : index
    %36 = vector.load %arg4[%35, %c0_21, %c0_22] : memref<1x96x64xbf16, #tpu.memory_space<vmem>>, vector<1x96x64xbf16>
    %37 = vector.shape_cast %36 : vector<1x96x64xbf16> to vector<96x64xbf16>
    %38 = vector.shape_cast %34 : vector<96x64xbf16> to vector<1x96x64xbf16>
    tpu.vector_store %arg4[%35, %c0_21, %c0_22], %38 {strides = array<i32>} : memref<1x96x64xbf16, #tpu.memory_space<vmem>>, vector<1x96x64xbf16>,
    %c1_i32_23 = arith.constant 1 : i32
    return
  }
  func.func @transform_0(%arg0: i32) -> (i32, i32, i32) {
    %c0_i32 = arith.constant 0 : i32
    %c0_i32_0 = arith.constant 0 : i32
    %c0_i32_1 = arith.constant 0 : i32
    return %arg0, %c0_i32, %c0_i32_0 : i32, i32, i32
  }
  func.func @transform_1(%arg0: i32) -> (i32, i32, i32) {
    %c0_i32 = arith.constant 0 : i32
    %c0_i32_0 = arith.constant 0 : i32
    %c0_i32_1 = arith.constant 0 : i32
    %c0_i32_2 = arith.constant 0 : i32
    return %c0_i32, %c0_i32_0, %c0_i32_1 : i32, i32, i32
  }
  func.func @transform_2(%arg0: i32) -> (i32, i32) {
    %c0_i32 = arith.constant 0 : i32
    %c0_i32_0 = arith.constant 0 : i32
    %c0_i32_1 = arith.constant 0 : i32
    return %c0_i32, %c0_i32_0 : i32, i32
  }
  func.func @transform_3(%arg0: i32) -> (i32, i32, i32) {
    %c0_i32 = arith.constant 0 : i32
    %c0_i32_0 = arith.constant 0 : i32
    %c0_i32_1 = arith.constant 0 : i32
    return %arg0, %c0_i32, %c0_i32_0 : i32, i32, i32
  }
}

module attributes {stable_mosaic.version = 11 : i64} {
  func.func @_conv_kernel(%arg0: i32, %arg1: memref<1x96x64xbf16, #tpu.memory_space<vmem>>, %arg2: memref<9x64x64xbf16, #tpu.memory_space<vmem>>, %arg3: memref<1x64xf32, #tpu.memory_space<vmem>>, %arg4: memref<1x70x64xbf16, #tpu.memory_space<vmem>>) attributes {dimension_semantics = [#tpu.dimension_semantics<parallel>], iteration_bounds = array<i64: 2>, scalar_prefetch = 0 : i64, scratch_operands = 0 : i64, tpu.core_type = #tpu.core_type<tc>, window_params = [{transform_indices = @transform_0, window_bounds = array<i64: 1, 96, 64>}, {pipeline_mode = #tpu.pipeline_mode<synchronous>, transform_indices = @transform_1, window_bounds = array<i64: 9, 64, 64>}, {pipeline_mode = #tpu.pipeline_mode<synchronous>, transform_indices = @transform_2, window_bounds = array<i64: 1, 64>}, {transform_indices = @transform_3, window_bounds = array<i64: 1, 70, 64>}]} {
    %c0 = arith.constant 0 : index
    %c0_0 = arith.constant 0 : index
    %0 = vector.load %arg3[%c0, %c0_0] : memref<1x64xf32, #tpu.memory_space<vmem>>, vector<1x64xf32>
    %c0_i32 = arith.constant 0 : i32
    %c1_i32 = arith.constant 1 : i32
    %1 = arith.muli %c0_i32, %c1_i32 : i32
    %c0_i32_1 = arith.constant 0 : i32
    %2 = arith.addi %c0_i32_1, %1 : i32
    %3 = arith.index_cast %2 : i32 to index
    %c0_2 = arith.constant 0 : index
    %c0_3 = arith.constant 0 : index
    %4 = vector.load %arg1[%3, %c0_2, %c0_3] : memref<1x96x64xbf16, #tpu.memory_space<vmem>>, vector<1x70x64xbf16>
    %5 = vector.shape_cast %4 : vector<1x70x64xbf16> to vector<70x64xbf16>
    %c0_4 = arith.constant 0 : index
    %c0_5 = arith.constant 0 : index
    %c0_6 = arith.constant 0 : index
    %6 = vector.load %arg2[%c0_4, %c0_5, %c0_6] : memref<9x64x64xbf16, #tpu.memory_space<vmem>>, vector<1x64x64xbf16>
    %7 = vector.shape_cast %6 : vector<1x64x64xbf16> to vector<64x64xbf16>
    %cst = arith.constant dense<0.000000e+00> : vector<70x64xf32>
    %8 = tpu.matmul %5, %7, %cst {dimension_numbers = #tpu.dot_dimension_numbers<[1], [0], [0], [1], [0, 0, 1, 1], [], []>} : vector<70x64xbf16>, vector<64x64xbf16>, vector<70x64xf32> -> vector<70x64xf32>
    %9 = arith.index_cast %2 : i32 to index
    %c1 = arith.constant 1 : index
    %c0_7 = arith.constant 0 : index
    %10 = vector.load %arg1[%9, %c1, %c0_7] : memref<1x96x64xbf16, #tpu.memory_space<vmem>>, vector<1x70x64xbf16>
    %11 = vector.shape_cast %10 : vector<1x70x64xbf16> to vector<70x64xbf16>
    %c1_8 = arith.constant 1 : index
    %c0_9 = arith.constant 0 : index
    %c0_10 = arith.constant 0 : index
    %12 = vector.load %arg2[%c1_8, %c0_9, %c0_10] : memref<9x64x64xbf16, #tpu.memory_space<vmem>>, vector<1x64x64xbf16>
    %13 = vector.shape_cast %12 : vector<1x64x64xbf16> to vector<64x64xbf16>
    %cst_11 = arith.constant dense<0.000000e+00> : vector<70x64xf32>
    %14 = tpu.matmul %11, %13, %cst_11 {dimension_numbers = #tpu.dot_dimension_numbers<[1], [0], [0], [1], [0, 0, 1, 1], [], []>} : vector<70x64xbf16>, vector<64x64xbf16>, vector<70x64xf32> -> vector<70x64xf32>
    %15 = arith.addf %8, %14 : vector<70x64xf32>
    %16 = arith.index_cast %2 : i32 to index
    %c2 = arith.constant 2 : index
    %c0_12 = arith.constant 0 : index
    %17 = vector.load %arg1[%16, %c2, %c0_12] : memref<1x96x64xbf16, #tpu.memory_space<vmem>>, vector<1x70x64xbf16>
    %18 = vector.shape_cast %17 : vector<1x70x64xbf16> to vector<70x64xbf16>
    %c2_13 = arith.constant 2 : index
    %c0_14 = arith.constant 0 : index
    %c0_15 = arith.constant 0 : index
    %19 = vector.load %arg2[%c2_13, %c0_14, %c0_15] : memref<9x64x64xbf16, #tpu.memory_space<vmem>>, vector<1x64x64xbf16>
    %20 = vector.shape_cast %19 : vector<1x64x64xbf16> to vector<64x64xbf16>
    %cst_16 = arith.constant dense<0.000000e+00> : vector<70x64xf32>
    %21 = tpu.matmul %18, %20, %cst_16 {dimension_numbers = #tpu.dot_dimension_numbers<[1], [0], [0], [1], [0, 0, 1, 1], [], []>} : vector<70x64xbf16>, vector<64x64xbf16>, vector<70x64xf32> -> vector<70x64xf32>
    %22 = arith.addf %15, %21 : vector<70x64xf32>
    %23 = arith.index_cast %2 : i32 to index
    %c10 = arith.constant 10 : index
    %c0_17 = arith.constant 0 : index
    %24 = vector.load %arg1[%23, %c10, %c0_17] : memref<1x96x64xbf16, #tpu.memory_space<vmem>>, vector<1x70x64xbf16>
    %25 = vector.shape_cast %24 : vector<1x70x64xbf16> to vector<70x64xbf16>
    %c3 = arith.constant 3 : index
    %c0_18 = arith.constant 0 : index
    %c0_19 = arith.constant 0 : index
    %26 = vector.load %arg2[%c3, %c0_18, %c0_19] : memref<9x64x64xbf16, #tpu.memory_space<vmem>>, vector<1x64x64xbf16>
    %27 = vector.shape_cast %26 : vector<1x64x64xbf16> to vector<64x64xbf16>
    %cst_20 = arith.constant dense<0.000000e+00> : vector<70x64xf32>
    %28 = tpu.matmul %25, %27, %cst_20 {dimension_numbers = #tpu.dot_dimension_numbers<[1], [0], [0], [1], [0, 0, 1, 1], [], []>} : vector<70x64xbf16>, vector<64x64xbf16>, vector<70x64xf32> -> vector<70x64xf32>
    %29 = arith.addf %22, %28 : vector<70x64xf32>
    %30 = arith.index_cast %2 : i32 to index
    %c11 = arith.constant 11 : index
    %c0_21 = arith.constant 0 : index
    %31 = vector.load %arg1[%30, %c11, %c0_21] : memref<1x96x64xbf16, #tpu.memory_space<vmem>>, vector<1x70x64xbf16>
    %32 = vector.shape_cast %31 : vector<1x70x64xbf16> to vector<70x64xbf16>
    %c4 = arith.constant 4 : index
    %c0_22 = arith.constant 0 : index
    %c0_23 = arith.constant 0 : index
    %33 = vector.load %arg2[%c4, %c0_22, %c0_23] : memref<9x64x64xbf16, #tpu.memory_space<vmem>>, vector<1x64x64xbf16>
    %34 = vector.shape_cast %33 : vector<1x64x64xbf16> to vector<64x64xbf16>
    %cst_24 = arith.constant dense<0.000000e+00> : vector<70x64xf32>
    %35 = tpu.matmul %32, %34, %cst_24 {dimension_numbers = #tpu.dot_dimension_numbers<[1], [0], [0], [1], [0, 0, 1, 1], [], []>} : vector<70x64xbf16>, vector<64x64xbf16>, vector<70x64xf32> -> vector<70x64xf32>
    %36 = arith.addf %29, %35 : vector<70x64xf32>
    %37 = arith.index_cast %2 : i32 to index
    %c12 = arith.constant 12 : index
    %c0_25 = arith.constant 0 : index
    %38 = vector.load %arg1[%37, %c12, %c0_25] : memref<1x96x64xbf16, #tpu.memory_space<vmem>>, vector<1x70x64xbf16>
    %39 = vector.shape_cast %38 : vector<1x70x64xbf16> to vector<70x64xbf16>
    %c5 = arith.constant 5 : index
    %c0_26 = arith.constant 0 : index
    %c0_27 = arith.constant 0 : index
    %40 = vector.load %arg2[%c5, %c0_26, %c0_27] : memref<9x64x64xbf16, #tpu.memory_space<vmem>>, vector<1x64x64xbf16>
    %41 = vector.shape_cast %40 : vector<1x64x64xbf16> to vector<64x64xbf16>
    %cst_28 = arith.constant dense<0.000000e+00> : vector<70x64xf32>
    %42 = tpu.matmul %39, %41, %cst_28 {dimension_numbers = #tpu.dot_dimension_numbers<[1], [0], [0], [1], [0, 0, 1, 1], [], []>} : vector<70x64xbf16>, vector<64x64xbf16>, vector<70x64xf32> -> vector<70x64xf32>
    %43 = arith.addf %36, %42 : vector<70x64xf32>
    %44 = arith.index_cast %2 : i32 to index
    %c20 = arith.constant 20 : index
    %c0_29 = arith.constant 0 : index
    %45 = vector.load %arg1[%44, %c20, %c0_29] : memref<1x96x64xbf16, #tpu.memory_space<vmem>>, vector<1x70x64xbf16>
    %46 = vector.shape_cast %45 : vector<1x70x64xbf16> to vector<70x64xbf16>
    %c6 = arith.constant 6 : index
    %c0_30 = arith.constant 0 : index
    %c0_31 = arith.constant 0 : index
    %47 = vector.load %arg2[%c6, %c0_30, %c0_31] : memref<9x64x64xbf16, #tpu.memory_space<vmem>>, vector<1x64x64xbf16>
    %48 = vector.shape_cast %47 : vector<1x64x64xbf16> to vector<64x64xbf16>
    %cst_32 = arith.constant dense<0.000000e+00> : vector<70x64xf32>
    %49 = tpu.matmul %46, %48, %cst_32 {dimension_numbers = #tpu.dot_dimension_numbers<[1], [0], [0], [1], [0, 0, 1, 1], [], []>} : vector<70x64xbf16>, vector<64x64xbf16>, vector<70x64xf32> -> vector<70x64xf32>
    %50 = arith.addf %43, %49 : vector<70x64xf32>
    %51 = arith.index_cast %2 : i32 to index
    %c21 = arith.constant 21 : index
    %c0_33 = arith.constant 0 : index
    %52 = vector.load %arg1[%51, %c21, %c0_33] : memref<1x96x64xbf16, #tpu.memory_space<vmem>>, vector<1x70x64xbf16>
    %53 = vector.shape_cast %52 : vector<1x70x64xbf16> to vector<70x64xbf16>
    %c7 = arith.constant 7 : index
    %c0_34 = arith.constant 0 : index
    %c0_35 = arith.constant 0 : index
    %54 = vector.load %arg2[%c7, %c0_34, %c0_35] : memref<9x64x64xbf16, #tpu.memory_space<vmem>>, vector<1x64x64xbf16>
    %55 = vector.shape_cast %54 : vector<1x64x64xbf16> to vector<64x64xbf16>
    %cst_36 = arith.constant dense<0.000000e+00> : vector<70x64xf32>
    %56 = tpu.matmul %53, %55, %cst_36 {dimension_numbers = #tpu.dot_dimension_numbers<[1], [0], [0], [1], [0, 0, 1, 1], [], []>} : vector<70x64xbf16>, vector<64x64xbf16>, vector<70x64xf32> -> vector<70x64xf32>
    %57 = arith.addf %50, %56 : vector<70x64xf32>
    %58 = arith.index_cast %2 : i32 to index
    %c22 = arith.constant 22 : index
    %c0_37 = arith.constant 0 : index
    %59 = vector.load %arg1[%58, %c22, %c0_37] : memref<1x96x64xbf16, #tpu.memory_space<vmem>>, vector<1x70x64xbf16>
    %60 = vector.shape_cast %59 : vector<1x70x64xbf16> to vector<70x64xbf16>
    %c8 = arith.constant 8 : index
    %c0_38 = arith.constant 0 : index
    %c0_39 = arith.constant 0 : index
    %61 = vector.load %arg2[%c8, %c0_38, %c0_39] : memref<9x64x64xbf16, #tpu.memory_space<vmem>>, vector<1x64x64xbf16>
    %62 = vector.shape_cast %61 : vector<1x64x64xbf16> to vector<64x64xbf16>
    %cst_40 = arith.constant dense<0.000000e+00> : vector<70x64xf32>
    %63 = tpu.matmul %60, %62, %cst_40 {dimension_numbers = #tpu.dot_dimension_numbers<[1], [0], [0], [1], [0, 0, 1, 1], [], []>} : vector<70x64xbf16>, vector<64x64xbf16>, vector<70x64xf32> -> vector<70x64xf32>
    %64 = arith.addf %57, %63 : vector<70x64xf32>
    %65 = vector.broadcast %0 : vector<1x64xf32> to vector<70x64xf32>
    %66 = arith.addf %64, %65 : vector<70x64xf32>
    %cst_41 = arith.constant 0.000000e+00 : f32
    %67 = vector.broadcast %cst_41 : f32 to vector<70x64xf32>
    %68 = arith.maximumf %66, %67 : vector<70x64xf32>
    %69 = arith.truncf %68 : vector<70x64xf32> to vector<70x64xbf16>
    %70 = arith.index_cast %2 : i32 to index
    %c0_42 = arith.constant 0 : index
    %c0_43 = arith.constant 0 : index
    %71 = vector.load %arg4[%70, %c0_42, %c0_43] : memref<1x70x64xbf16, #tpu.memory_space<vmem>>, vector<1x70x64xbf16>
    %72 = vector.shape_cast %71 : vector<1x70x64xbf16> to vector<70x64xbf16>
    %73 = vector.shape_cast %69 : vector<70x64xbf16> to vector<1x70x64xbf16>
    tpu.vector_store %arg4[%70, %c0_42, %c0_43], %73 {strides = array<i32>} : memref<1x70x64xbf16, #tpu.memory_space<vmem>>, vector<1x70x64xbf16>,
    %c1_i32_44 = arith.constant 1 : i32
    return
  }
  func.func @transform_0(%arg0: i32) -> (i32, i32, i32) {
    %c0_i32 = arith.constant 0 : i32
    %c0_i32_0 = arith.constant 0 : i32
    %c0_i32_1 = arith.constant 0 : i32
    return %arg0, %c0_i32, %c0_i32_0 : i32, i32, i32
  }
  func.func @transform_1(%arg0: i32) -> (i32, i32, i32) {
    %c0_i32 = arith.constant 0 : i32
    %c0_i32_0 = arith.constant 0 : i32
    %c0_i32_1 = arith.constant 0 : i32
    %c0_i32_2 = arith.constant 0 : i32
    return %c0_i32, %c0_i32_0, %c0_i32_1 : i32, i32, i32
  }
  func.func @transform_2(%arg0: i32) -> (i32, i32) {
    %c0_i32 = arith.constant 0 : i32
    %c0_i32_0 = arith.constant 0 : i32
    %c0_i32_1 = arith.constant 0 : i32
    return %c0_i32, %c0_i32_0 : i32, i32
  }
  func.func @transform_3(%arg0: i32) -> (i32, i32, i32) {
    %c0_i32 = arith.constant 0 : i32
    %c0_i32_0 = arith.constant 0 : i32
    %c0_i32_1 = arith.constant 0 : i32
    return %arg0, %c0_i32, %c0_i32_0 : i32, i32, i32
  }
}

module attributes {stable_mosaic.version = 11 : i64} {
  func.func @_attention_fc_kernel(%arg0: i32, %arg1: memref<1x49x64xbf16, #tpu.memory_space<vmem>>, %arg2: memref<1x1x8xf32, #tpu.memory_space<vmem>>, %arg3: memref<64x96xf32, #tpu.memory_space<vmem>>, %arg4: memref<1x96xf32, #tpu.memory_space<vmem>>, %arg5: memref<32x64xf32, #tpu.memory_space<vmem>>, %arg6: memref<1x64xf32, #tpu.memory_space<vmem>>, %arg7: memref<32x32xf32, #tpu.memory_space<vmem>>, %arg8: memref<1x32xf32, #tpu.memory_space<vmem>>, %arg9: memref<8x32xf32, #tpu.memory_space<vmem>>, %arg10: memref<1x32xf32, #tpu.memory_space<vmem>>, %arg11: memref<64x512xf32, #tpu.memory_space<vmem>>, %arg12: memref<1x512xf32, #tpu.memory_space<vmem>>, %arg13: memref<512x18xf32, #tpu.memory_space<vmem>>, %arg14: memref<8x18xf32, #tpu.memory_space<vmem>>, %arg15: memref<1x18xf32, #tpu.memory_space<vmem>>, %arg16: memref<1x1x18xf32, #tpu.memory_space<vmem>>, %arg17: memref<1x1x49xf32, #tpu.memory_space<vmem>>, %arg18: memref<1x64xf32, #tpu.memory_space<vmem>>) attributes {dimension_semantics = [#tpu.dimension_semantics<parallel>], iteration_bounds = array<i64: 2>, scalar_prefetch = 0 : i64, scratch_operands = 1 : i64, tpu.core_type = #tpu.core_type<tc>, window_params = [{transform_indices = @transform_0, window_bounds = array<i64: 1, 49, 64>}, {transform_indices = @transform_1, window_bounds = array<i64: 1, 1, 8>}, {pipeline_mode = #tpu.pipeline_mode<synchronous>, transform_indices = @transform_2, window_bounds = array<i64: 64, 96>}, {pipeline_mode = #tpu.pipeline_mode<synchronous>, transform_indices = @transform_3, window_bounds = array<i64: 1, 96>}, {pipeline_mode = #tpu.pipeline_mode<synchronous>, transform_indices = @transform_4, window_bounds = array<i64: 32, 64>}, {pipeline_mode = #tpu.pipeline_mode<synchronous>, transform_indices = @transform_5, window_bounds = array<i64: 1, 64>}, {pipeline_mode = #tpu.pipeline_mode<synchronous>, transform_indices = @transform_6, window_bounds = array<i64: 32, 32>}, {pipeline_mode = #tpu.pipeline_mode<synchronous>, transform_indices = @transform_7, window_bounds = array<i64: 1, 32>}, {pipeline_mode = #tpu.pipeline_mode<synchronous>, transform_indices = @transform_8, window_bounds = array<i64: 8, 32>}, {pipeline_mode = #tpu.pipeline_mode<synchronous>, transform_indices = @transform_9, window_bounds = array<i64: 1, 32>}, {pipeline_mode = #tpu.pipeline_mode<synchronous>, transform_indices = @transform_10, window_bounds = array<i64: 64, 512>}, {pipeline_mode = #tpu.pipeline_mode<synchronous>, transform_indices = @transform_11, window_bounds = array<i64: 1, 512>}, {pipeline_mode = #tpu.pipeline_mode<synchronous>, transform_indices = @transform_12, window_bounds = array<i64: 512, 18>}, {pipeline_mode = #tpu.pipeline_mode<synchronous>, transform_indices = @transform_13, window_bounds = array<i64: 8, 18>}, {pipeline_mode = #tpu.pipeline_mode<synchronous>, transform_indices = @transform_14, window_bounds = array<i64: 1, 18>}, {transform_indices = @transform_15, window_bounds = array<i64: 1, 1, 18>}, {transform_indices = @transform_16, window_bounds = array<i64: 1, 1, 49>}]} {
    %c0 = arith.constant 0 : index
    %c0_0 = arith.constant 0 : index
    %c0_1 = arith.constant 0 : index
    %0 = vector.load %arg1[%c0, %c0_0, %c0_1] : memref<1x49x64xbf16, #tpu.memory_space<vmem>>, vector<1x49x64xbf16>
    %1 = vector.shape_cast %0 : vector<1x49x64xbf16> to vector<49x64xbf16>
    %2 = arith.extf %1 : vector<49x64xbf16> to vector<49x64xf32>
    %c0_2 = arith.constant 0 : index
    %c0_3 = arith.constant 0 : index
    %c0_4 = arith.constant 0 : index
    %3 = vector.load %arg2[%c0_2, %c0_3, %c0_4] : memref<1x1x8xf32, #tpu.memory_space<vmem>>, vector<1x1x8xf32>
    %4 = vector.shape_cast %3 : vector<1x1x8xf32> to vector<1x8xf32>
    %c0_5 = arith.constant 0 : index
    %c0_6 = arith.constant 0 : index
    %5 = vector.load %arg3[%c0_5, %c0_6] : memref<64x96xf32, #tpu.memory_space<vmem>>, vector<64x96xf32>
    %cst = arith.constant dense<0.000000e+00> : vector<49x96xf32>
    %6 = tpu.matmul %2, %5, %cst {dimension_numbers = #tpu.dot_dimension_numbers<[1], [0], [0], [1], [0, 0, 1, 1], [], []>} : vector<49x64xf32>, vector<64x96xf32>, vector<49x96xf32> -> vector<49x96xf32>
    %c0_7 = arith.constant 0 : index
    %c0_8 = arith.constant 0 : index
    %7 = vector.load %arg4[%c0_7, %c0_8] : memref<1x96xf32, #tpu.memory_space<vmem>>, vector<1x96xf32>
    %8 = vector.broadcast %7 : vector<1x96xf32> to vector<49x96xf32>
    %9 = arith.addf %6, %8 : vector<49x96xf32>
    %c0_9 = arith.constant 0 : index
    %c0_10 = arith.constant 0 : index
    %10 = vector.load %arg9[%c0_9, %c0_10] : memref<8x32xf32, #tpu.memory_space<vmem>>, vector<8x32xf32>
    %cst_11 = arith.constant dense<0.000000e+00> : vector<1x32xf32>
    %11 = tpu.matmul %4, %10, %cst_11 {dimension_numbers = #tpu.dot_dimension_numbers<[1], [0], [0], [1], [0, 0, 1, 1], [], []>} : vector<1x8xf32>, vector<8x32xf32>, vector<1x32xf32> -> vector<1x32xf32>
    %c0_12 = arith.constant 0 : index
    %c0_13 = arith.constant 0 : index
    %12 = vector.load %arg10[%c0_12, %c0_13] : memref<1x32xf32, #tpu.memory_space<vmem>>, vector<1x32xf32>
    %13 = arith.addf %11, %12 : vector<1x32xf32>
    %c0_14 = arith.constant 0 : index
    %c0_15 = arith.constant 0 : index
    %14 = vector.load %arg5[%c0_14, %c0_15] : memref<32x64xf32, #tpu.memory_space<vmem>>, vector<32x64xf32>
    %c0_16 = arith.constant 0 : index
    %c0_17 = arith.constant 0 : index
    %15 = vector.load %arg6[%c0_16, %c0_17] : memref<1x64xf32, #tpu.memory_space<vmem>>, vector<1x64xf32>
    %c0_18 = arith.constant 0 : index
    %c0_19 = arith.constant 0 : index
    %16 = vector.load %arg7[%c0_18, %c0_19] : memref<32x32xf32, #tpu.memory_space<vmem>>, vector<32x32xf32>
    %c0_20 = arith.constant 0 : index
    %c0_21 = arith.constant 0 : index
    %17 = vector.load %arg8[%c0_20, %c0_21] : memref<1x32xf32, #tpu.memory_space<vmem>>, vector<1x32xf32>
    %18 = vector.extract_strided_slice %9 {offsets = [0, 0], sizes = [49, 32], strides = [1, 1]} : vector<49x96xf32> to vector<49x32xf32>
    %19 = vector.extract_strided_slice %9 {offsets = [0, 32], sizes = [49, 32], strides = [1, 1]} : vector<49x96xf32> to vector<49x32xf32>
    %20 = vector.extract_strided_slice %9 {offsets = [0, 64], sizes = [49, 32], strides = [1, 1]} : vector<49x96xf32> to vector<49x32xf32>
    %cst_22 = arith.constant dense<0.000000e+00> : vector<49x49xf32>
    %21 = tpu.matmul %18, %19, %cst_22 {dimension_numbers = #tpu.dot_dimension_numbers<[1], [1], [0], [0], [0, 0, 1, 0], [], []>} : vector<49x32xf32>, vector<49x32xf32>, vector<49x49xf32> -> vector<49x49xf32>
    %cst_23 = arith.constant dense<0xFF800000> : vector<49xf32>
    %22 = vector.multi_reduction <maximumf>, %21, %cst_23 [1] : vector<49x49xf32> to vector<49xf32>
    %23 = vector.shape_cast %22 : vector<49xf32> to vector<49x1xf32>
    %24 = vector.broadcast %23 : vector<49x1xf32> to vector<49x49xf32>
    %25 = arith.subf %21, %24 : vector<49x49xf32>
    %26 = math.exp %25 : vector<49x49xf32>
    %cst_24 = arith.constant dense<0.000000e+00> : vector<49xf32>
    %27 = vector.multi_reduction <add>, %26, %cst_24 [1] : vector<49x49xf32> to vector<49xf32>
    %28 = vector.shape_cast %27 : vector<49xf32> to vector<49x1xf32>
    %29 = tpu.reciprocal %28 {approx = true} : vector<49x1xf32> -> vector<49x1xf32>
    %30 = vector.broadcast %29 : vector<49x1xf32> to vector<49x49xf32>
    %31 = arith.mulf %26, %30 : vector<49x49xf32>
    %cst_25 = arith.constant dense<0.000000e+00> : vector<49x32xf32>
    %32 = tpu.matmul %31, %20, %cst_25 {dimension_numbers = #tpu.dot_dimension_numbers<[1], [0], [0], [1], [0, 0, 1, 1], [], []>} : vector<49x49xf32>, vector<49x32xf32>, vector<49x32xf32> -> vector<49x32xf32>
    %cst_26 = arith.constant dense<0.000000e+00> : vector<49x64xf32>
    %33 = tpu.matmul %32, %14, %cst_26 {dimension_numbers = #tpu.dot_dimension_numbers<[1], [0], [0], [1], [0, 0, 1, 1], [], []>} : vector<49x32xf32>, vector<32x64xf32>, vector<49x64xf32> -> vector<49x64xf32>
    %34 = vector.broadcast %15 : vector<1x64xf32> to vector<49x64xf32>
    %35 = arith.addf %33, %34 : vector<49x64xf32>
    %cst_27 = arith.constant dense<0.000000e+00> : vector<49x32xf32>
    %36 = tpu.matmul %32, %16, %cst_27 {dimension_numbers = #tpu.dot_dimension_numbers<[1], [0], [0], [1], [0, 0, 1, 1], [], []>} : vector<49x32xf32>, vector<32x32xf32>, vector<49x32xf32> -> vector<49x32xf32>
    %37 = vector.broadcast %17 : vector<1x32xf32> to vector<49x32xf32>
    %38 = arith.addf %36, %37 : vector<49x32xf32>
    %cst_28 = arith.constant dense<0.000000e+00> : vector<1x49xf32>
    %39 = tpu.matmul %13, %38, %cst_28 {dimension_numbers = #tpu.dot_dimension_numbers<[1], [1], [0], [0], [0, 0, 1, 0], [], []>} : vector<1x32xf32>, vector<49x32xf32>, vector<1x49xf32> -> vector<1x49xf32>
    %cst_29 = arith.constant dense<0xFF800000> : vector<1xf32>
    %40 = vector.multi_reduction <maximumf>, %39, %cst_29 [1] : vector<1x49xf32> to vector<1xf32>
    %41 = vector.shape_cast %40 : vector<1xf32> to vector<1x1xf32>
    %42 = vector.broadcast %41 : vector<1x1xf32> to vector<1x49xf32>
    %43 = arith.subf %39, %42 : vector<1x49xf32>
    %44 = math.exp %43 : vector<1x49xf32>
    %cst_30 = arith.constant dense<0.000000e+00> : vector<1xf32>
    %45 = vector.multi_reduction <add>, %44, %cst_30 [1] : vector<1x49xf32> to vector<1xf32>
    %46 = vector.shape_cast %45 : vector<1xf32> to vector<1x1xf32>
    %47 = vector.broadcast %46 : vector<1x1xf32> to vector<1x49xf32>
    %48 = arith.divf %44, %47 : vector<1x49xf32>
    %cst_31 = arith.constant dense<0.000000e+00> : vector<1x64xf32>
    %49 = tpu.matmul %48, %35, %cst_31 {dimension_numbers = #tpu.dot_dimension_numbers<[1], [0], [0], [1], [0, 0, 1, 1], [], []>} : vector<1x49xf32>, vector<49x64xf32>, vector<1x64xf32> -> vector<1x64xf32>
    %c0_32 = arith.constant 0 : index
    %c0_33 = arith.constant 0 : index
    %50 = vector.load %arg18[%c0_32, %c0_33] : memref<1x64xf32, #tpu.memory_space<vmem>>, vector<1x64xf32>
    tpu.vector_store %arg18[%c0_32, %c0_33], %49 {strides = array<i32>} : memref<1x64xf32, #tpu.memory_space<vmem>>, vector<1x64xf32>,
    %c0_34 = arith.constant 0 : index
    %c0_35 = arith.constant 0 : index
    %c0_36 = arith.constant 0 : index
    %51 = vector.load %arg17[%c0_34, %c0_35, %c0_36] : memref<1x1x49xf32, #tpu.memory_space<vmem>>, vector<1x1x49xf32>
    %52 = vector.shape_cast %51 : vector<1x1x49xf32> to vector<1x49xf32>
    %53 = vector.shape_cast %48 : vector<1x49xf32> to vector<1x1x49xf32>
    tpu.vector_store %arg17[%c0_34, %c0_35, %c0_36], %53 {strides = array<i32>} : memref<1x1x49xf32, #tpu.memory_space<vmem>>, vector<1x1x49xf32>,
    %c0_37 = arith.constant 0 : index
    %c0_38 = arith.constant 0 : index
    %54 = vector.load %arg18[%c0_37, %c0_38] : memref<1x64xf32, #tpu.memory_space<vmem>>, vector<1x64xf32>
    %c0_39 = arith.constant 0 : index
    %c0_40 = arith.constant 0 : index
    %55 = vector.load %arg11[%c0_39, %c0_40] : memref<64x512xf32, #tpu.memory_space<vmem>>, vector<64x512xf32>
    %cst_41 = arith.constant dense<0.000000e+00> : vector<1x512xf32>
    %56 = tpu.matmul %54, %55, %cst_41 {dimension_numbers = #tpu.dot_dimension_numbers<[1], [0], [0], [1], [0, 0, 1, 1], [], []>} : vector<1x64xf32>, vector<64x512xf32>, vector<1x512xf32> -> vector<1x512xf32>
    %c0_42 = arith.constant 0 : index
    %c0_43 = arith.constant 0 : index
    %57 = vector.load %arg12[%c0_42, %c0_43] : memref<1x512xf32, #tpu.memory_space<vmem>>, vector<1x512xf32>
    %58 = arith.addf %56, %57 : vector<1x512xf32>
    %cst_44 = arith.constant 0.000000e+00 : f32
    %59 = vector.broadcast %cst_44 : f32 to vector<1x512xf32>
    %60 = arith.maximumf %58, %59 : vector<1x512xf32>
    %c0_45 = arith.constant 0 : index
    %c0_46 = arith.constant 0 : index
    %61 = vector.load %arg13[%c0_45, %c0_46] : memref<512x18xf32, #tpu.memory_space<vmem>>, vector<512x18xf32>
    %cst_47 = arith.constant dense<0.000000e+00> : vector<1x18xf32>
    %62 = tpu.matmul %60, %61, %cst_47 {dimension_numbers = #tpu.dot_dimension_numbers<[1], [0], [0], [1], [0, 0, 1, 1], [], []>} : vector<1x512xf32>, vector<512x18xf32>, vector<1x18xf32> -> vector<1x18xf32>
    %c0_48 = arith.constant 0 : index
    %c0_49 = arith.constant 0 : index
    %63 = vector.load %arg14[%c0_48, %c0_49] : memref<8x18xf32, #tpu.memory_space<vmem>>, vector<8x18xf32>
    %cst_50 = arith.constant dense<0.000000e+00> : vector<1x18xf32>
    %64 = tpu.matmul %4, %63, %cst_50 {dimension_numbers = #tpu.dot_dimension_numbers<[1], [0], [0], [1], [0, 0, 1, 1], [], []>} : vector<1x8xf32>, vector<8x18xf32>, vector<1x18xf32> -> vector<1x18xf32>
    %65 = arith.addf %62, %64 : vector<1x18xf32>
    %c0_51 = arith.constant 0 : index
    %c0_52 = arith.constant 0 : index
    %66 = vector.load %arg15[%c0_51, %c0_52] : memref<1x18xf32, #tpu.memory_space<vmem>>, vector<1x18xf32>
    %67 = arith.addf %65, %66 : vector<1x18xf32>
    %c0_53 = arith.constant 0 : index
    %c0_54 = arith.constant 0 : index
    %c0_55 = arith.constant 0 : index
    %68 = vector.load %arg16[%c0_53, %c0_54, %c0_55] : memref<1x1x18xf32, #tpu.memory_space<vmem>>, vector<1x1x18xf32>
    %69 = vector.shape_cast %68 : vector<1x1x18xf32> to vector<1x18xf32>
    %70 = vector.shape_cast %67 : vector<1x18xf32> to vector<1x1x18xf32>
    tpu.vector_store %arg16[%c0_53, %c0_54, %c0_55], %70 {strides = array<i32>} : memref<1x1x18xf32, #tpu.memory_space<vmem>>, vector<1x1x18xf32>,
    return
  }
  func.func @transform_0(%arg0: i32) -> (i32, i32, i32) {
    %c0_i32 = arith.constant 0 : i32
    %c0_i32_0 = arith.constant 0 : i32
    %c0_i32_1 = arith.constant 0 : i32
    return %arg0, %c0_i32, %c0_i32_0 : i32, i32, i32
  }
  func.func @transform_1(%arg0: i32) -> (i32, i32, i32) {
    %c0_i32 = arith.constant 0 : i32
    %c0_i32_0 = arith.constant 0 : i32
    %c0_i32_1 = arith.constant 0 : i32
    return %arg0, %c0_i32, %c0_i32_0 : i32, i32, i32
  }
  func.func @transform_2(%arg0: i32) -> (i32, i32) {
    %c0_i32 = arith.constant 0 : i32
    %c0_i32_0 = arith.constant 0 : i32
    %c0_i32_1 = arith.constant 0 : i32
    return %c0_i32, %c0_i32_0 : i32, i32
  }
  func.func @transform_3(%arg0: i32) -> (i32, i32) {
    %c0_i32 = arith.constant 0 : i32
    %c0_i32_0 = arith.constant 0 : i32
    %c0_i32_1 = arith.constant 0 : i32
    return %c0_i32, %c0_i32_0 : i32, i32
  }
  func.func @transform_4(%arg0: i32) -> (i32, i32) {
    %c0_i32 = arith.constant 0 : i32
    %c0_i32_0 = arith.constant 0 : i32
    %c0_i32_1 = arith.constant 0 : i32
    return %c0_i32, %c0_i32_0 : i32, i32
  }
  func.func @transform_5(%arg0: i32) -> (i32, i32) {
    %c0_i32 = arith.constant 0 : i32
    %c0_i32_0 = arith.constant 0 : i32
    %c0_i32_1 = arith.constant 0 : i32
    return %c0_i32, %c0_i32_0 : i32, i32
  }
  func.func @transform_6(%arg0: i32) -> (i32, i32) {
    %c0_i32 = arith.constant 0 : i32
    %c0_i32_0 = arith.constant 0 : i32
    %c0_i32_1 = arith.constant 0 : i32
    return %c0_i32, %c0_i32_0 : i32, i32
  }
  func.func @transform_7(%arg0: i32) -> (i32, i32) {
    %c0_i32 = arith.constant 0 : i32
    %c0_i32_0 = arith.constant 0 : i32
    %c0_i32_1 = arith.constant 0 : i32
    return %c0_i32, %c0_i32_0 : i32, i32
  }
  func.func @transform_8(%arg0: i32) -> (i32, i32) {
    %c0_i32 = arith.constant 0 : i32
    %c0_i32_0 = arith.constant 0 : i32
    %c0_i32_1 = arith.constant 0 : i32
    return %c0_i32, %c0_i32_0 : i32, i32
  }
  func.func @transform_9(%arg0: i32) -> (i32, i32) {
    %c0_i32 = arith.constant 0 : i32
    %c0_i32_0 = arith.constant 0 : i32
    %c0_i32_1 = arith.constant 0 : i32
    return %c0_i32, %c0_i32_0 : i32, i32
  }
  func.func @transform_10(%arg0: i32) -> (i32, i32) {
    %c0_i32 = arith.constant 0 : i32
    %c0_i32_0 = arith.constant 0 : i32
    %c0_i32_1 = arith.constant 0 : i32
    return %c0_i32, %c0_i32_0 : i32, i32
  }
  func.func @transform_11(%arg0: i32) -> (i32, i32) {
    %c0_i32 = arith.constant 0 : i32
    %c0_i32_0 = arith.constant 0 : i32
    %c0_i32_1 = arith.constant 0 : i32
    return %c0_i32, %c0_i32_0 : i32, i32
  }
  func.func @transform_12(%arg0: i32) -> (i32, i32) {
    %c0_i32 = arith.constant 0 : i32
    %c0_i32_0 = arith.constant 0 : i32
    %c0_i32_1 = arith.constant 0 : i32
    return %c0_i32, %c0_i32_0 : i32, i32
  }
  func.func @transform_13(%arg0: i32) -> (i32, i32) {
    %c0_i32 = arith.constant 0 : i32
    %c0_i32_0 = arith.constant 0 : i32
    %c0_i32_1 = arith.constant 0 : i32
    return %c0_i32, %c0_i32_0 : i32, i32
  }
  func.func @transform_14(%arg0: i32) -> (i32, i32) {
    %c0_i32 = arith.constant 0 : i32
    %c0_i32_0 = arith.constant 0 : i32
    %c0_i32_1 = arith.constant 0 : i32
    return %c0_i32, %c0_i32_0 : i32, i32
  }
  func.func @transform_15(%arg0: i32) -> (i32, i32, i32) {
    %c0_i32 = arith.constant 0 : i32
    %c0_i32_0 = arith.constant 0 : i32
    %c0_i32_1 = arith.constant 0 : i32
    return %arg0, %c0_i32, %c0_i32_0 : i32, i32, i32
  }
  func.func @transform_16(%arg0: i32) -> (i32, i32, i32) {
    %c0_i32 = arith.constant 0 : i32
    %c0_i32_0 = arith.constant 0 : i32
    %c0_i32_1 = arith.constant 0 : i32
    return %arg0, %c0_i32, %c0_i32_0 : i32, i32, i32
  }
}

</mosaic_0001>

<llo_original>
// kernel: da2qn_forward.4
$region0: #{da2qn_forward.4}
  #allocation0 [shape = 'u32[]', space=smem, size = 0x4, offset = 0x4, fixed_abs, tag = 'smem constant byte address 0x4 - core index']
  #allocation1 [shape = 'u32[72,128]{1,0:T(1,128)}', space=vmem, size = 0x9000, scoped, tag = 'internal scratch']
  %s0 = inlined_call_operand.vmem [shape: bf16[2,448,64], index: 0, kind: input, shape index: {}]
  %s1 = inlined_call_operand.vmem [shape: bf16[4,64,32], index: 1, kind: input, shape index: {}]
  %s2 = inlined_call_operand.vmem [shape: f32[1,32], index: 2, kind: input, shape index: {}]
  %s3 = inlined_call_operand.vmem [shape: bf16[2,420,32], index: 3, kind: output, shape index: {}]
  %s4 = sld [smem:[#allocation0]]
  $region45: #{da2qn_forward.4} parent=0
    _
  %s6 = ssub.s32 1, %s4
  %s7 = scalar_select 0, %s6, %s4
  loop: start=0, step=1, limit=4
  $region2: #{da2qn_forward.4} parent=0 // loop_pre_header
    _
  $region3: #{da2qn_forward.4} parent=0 // loop_header
    %s9 = sphi 0, %s13
    %p10 = scmp.ge.s32.totalorder %s9, 4
    %s19 = sphi 0, %s21
    %s22 = sphi 0, %s19
    %s23 = sphi 0, %s22
    %s39 = sphi 0, %s23
    %s43 = sphi 0, %s43
    %s45 = sphi 0, %s43
    %s46 = sphi 0, %s45
    %s60 = sphi 0, %s46
    %s64 = sphi 0, %s64
    %s66 = sphi 0, %s64
    %s67 = sphi 0, %s66
    %s81 = sphi 0, %s67
    %s87 = sphi 0, %s89
    %s90 = sphi 0, %s87
    %s91 = sphi 0, %s90
    %s107 = sphi 0, %s91
  $region4: #{da2qn_forward.4} parent=0 // loop_header_branch
    %12 = sbr.rel (%p10) target = $region8
  $region5: #{da2qn_forward.4} parent=0 // loop_body
    %s14 = ssub.s32 %s9, 1
    %s15 = ssub.s32 %s9, 2
    %s16 = sadd.s32 %s9, 1
    %s17 = ssub.s32 %s9, %s16
    %p18 = scmp.eq.s32.totalorder %s17, 0
    %s20 = sadd.s32 %s19, 1
    %s21 = scalar_select %p18, %s19, %s20
    %p24 = pneg %p18
    %p25 = scmp.eq.s32.totalorder %s9, 1
    %p26 = por %p24, %p25
    %p27 = scmp.ne.s32.totalorder %s19, %s22
    %p28 = scmp.eq.s32.totalorder %s9, 0
    %p29 = por %p27, %p28
    %p30 = scmp.ne.s32.totalorder %s19, %s22
    %p31 = scmp.eq.s32.totalorder %s14, 1
    %p32 = por %p30, %p31
    %p33 = scmp.ne.s32.totalorder %s22, %s23
    %p34 = scmp.eq.s32.totalorder %s14, 0
    %p35 = por %p33, %p34
    %p36 = scmp.ne.s32.totalorder %s22, %s23
    %p37 = scmp.eq.s32.totalorder %s15, 1
    %p38 = por %p36, %p37
    %p40 = scmp.ne.s32.totalorder %s23, %s39
    %p41 = scmp.eq.s32.totalorder %s15, 0
    %p42 = por %p40, %p41
    %s44 = sadd.s32 %s43, 1
    %p47 = scmp.eq.s32.totalorder %s9, 1
    %p48 = scmp.ne.s32.totalorder %s43, %s45
    %p49 = scmp.eq.s32.totalorder %s9, 0
    %p50 = por %p48, %p49
    %p51 = scmp.ne.s32.totalorder %s43, %s45
    %p52 = scmp.eq.s32.totalorder %s14, 1
    %p53 = por %p51, %p52
    %p54 = scmp.ne.s32.totalorder %s45, %s46
    %p55 = scmp.eq.s32.totalorder %s14, 0
    %p56 = por %p54, %p55
    %p57 = scmp.ne.s32.totalorder %s45, %s46
    %p58 = scmp.eq.s32.totalorder %s15, 1
    %p59 = por %p57, %p58
    %p61 = scmp.ne.s32.totalorder %s46, %s60
    %p62 = scmp.eq.s32.totalorder %s15, 0
    %p63 = por %p61, %p62
    %s65 = sadd.s32 %s64, 1
    %p68 = scmp.eq.s32.totalorder %s9, 1
    %p69 = scmp.ne.s32.totalorder %s64, %s66
    %p70 = scmp.eq.s32.totalorder %s9, 0
    %p71 = por %p69, %p70
    %p72 = scmp.ne.s32.totalorder %s64, %s66
    %p73 = scmp.eq.s32.totalorder %s14, 1
    %p74 = por %p72, %p73
    %p75 = scmp.ne.s32.totalorder %s66, %s67
    %p76 = scmp.eq.s32.totalorder %s14, 0
    %p77 = por %p75, %p76
    %p78 = scmp.ne.s32.totalorder %s66, %s67
    %p79 = scmp.eq.s32.totalorder %s15, 1
    %p80 = por %p78, %p79
    %p82 = scmp.ne.s32.totalorder %s67, %s81
    %p83 = scmp.eq.s32.totalorder %s15, 0
    %p84 = por %p82, %p83
    %s85 = ssub.s32 %s9, %s16
    %p86 = scmp.eq.s32.totalorder %s85, 0
    %s88 = sadd.s32 %s87, 1
    %s89 = scalar_select %p86, %s87, %s88
    %p92 = pneg %p86
    %p93 = scmp.eq.s32.totalorder %s9, 1
    %p94 = por %p92, %p93
    %p95 = scmp.ne.s32.totalorder %s87, %s90
    %p96 = scmp.eq.s32.totalorder %s9, 0
    %p97 = por %p95, %p96
    %p98 = scmp.ne.s32.totalorder %s87, %s90
    %p99 = scmp.eq.s32.totalorder %s14, 1
    %p100 = por %p98, %p99
    %p101 = scmp.ne.s32.totalorder %s90, %s91
    %p102 = scmp.eq.s32.totalorder %s14, 0
    %p103 = por %p101, %p102
    %p104 = scmp.ne.s32.totalorder %s90, %s91
    %p105 = scmp.eq.s32.totalorder %s15, 1
    %p106 = por %p104, %p105
    %p108 = scmp.ne.s32.totalorder %s91, %s107
    %p109 = scmp.eq.s32.totalorder %s15, 0
    %p110 = por %p108, %p109
    %p111 = scmp.le.s32.totalorder 1, %s9
    %p112 = scmp.lt.s32.totalorder %s9, 3
    %p113 = pnand %p111, %p112
    %p114 = pneg %p113
    // Predicated region
    $region9: #{da2qn_forward.4} parent=5 // pred_check
      _
    $region10: #{da2qn_forward.4} parent=5 // pred_check_branch
      %116 = sbr.rel (%p113) target = $region12
    $region11: #{da2qn_forward.4} parent=5 // pred_region
      %s117 = ssub.s32 %s9, 1
      // Predicated region
      $region13: #{da2qn_forward.4} parent=11 // pred_check
        %p118 = pneg %p56
      $region14: #{da2qn_forward.4} parent=11 // pred_check_branch
        %120 = sbr.rel (%p118) target = $region16
      $region15: #{da2qn_forward.4} parent=11 // pred_region
        _
      $region16: #{da2qn_forward.4} parent=11 // pred_fallthru
        _
      // Predicated region
      $region17: #{da2qn_forward.4} parent=11 // pred_check
        %p121 = pneg %p77
      $region18: #{da2qn_forward.4} parent=11 // pred_check_branch
        %123 = sbr.rel (%p121) target = $region20
      $region19: #{da2qn_forward.4} parent=11 // pred_region
        _
      $region20: #{da2qn_forward.4} parent=11 // pred_fallthru
        _
    $region12: #{da2qn_forward.4} parent=5 // pred_fallthru
      _
    %p124 = scmp.lt.s32.totalorder %s9, 2
    // Predicated region
    $region21: #{da2qn_forward.4} parent=5 // pred_check
      %p125 = pneg %p124
    $region22: #{da2qn_forward.4} parent=5 // pred_check_branch
      %127 = sbr.rel (%p125) target = $region24
    $region23: #{da2qn_forward.4} parent=5 // pred_region
      // Predicated region
      $region25: #{da2qn_forward.4} parent=23 // pred_check
        %p128 = pneg %p29
      $region26: #{da2qn_forward.4} parent=23 // pred_check_branch
        %130 = sbr.rel (%p128) target = $region28
      $region27: #{da2qn_forward.4} parent=23 // pred_region
        %p131 = scmp.lt.s32.totalorder %s9, 1
        %s132 = scalar_select %p131, %s9, 1
        %s133 = smul.addr %s132, 56
        %s134 = smul.addr %s133, 4
        %s135 = scalar_lea.vmem %s0, %s134
      $region28: #{da2qn_forward.4} parent=23 // pred_fallthru
        _
    $region24: #{da2qn_forward.4} parent=5 // pred_fallthru
      _
    %p136 = scmp.le.s32.totalorder 1, %s9
    %p137 = scmp.lt.s32.totalorder %s9, 3
    %p138 = pnand %p136, %p137
    %p139 = pneg %p138
    // Predicated region
    $region29: #{da2qn_forward.4} parent=5 // pred_check
      _
    $region30: #{da2qn_forward.4} parent=5 // pred_check_branch
      %141 = sbr.rel (%p138) target = $region32
    $region31: #{da2qn_forward.4} parent=5 // pred_region
      %s142 = ssub.s32 %s9, 1
      %p143 = scmp.lt.s32.totalorder %s14, 1
      %s144 = scalar_select %p143, %s14, 1
      %s145 = smul.addr %s144, 56
      %s146 = smul.addr %s145, 4
      %s147 = scalar_lea.vmem %s0, %s146
      %p148 = pneg %p35
      %p149 = pneg %p32
      %p150 = pneg %p56
      %p151 = pneg %p53
      %p152 = pneg %p77
      %p153 = pneg %p74
      %p154 = pneg %p103
      %p155 = pneg %p100
      %p156 = scmp.lt.s32.totalorder %s14, 1
      %s157 = scalar_select %p156, %s14, 1
      %s158 = smul.addr %s157, 53
      %s159 = smul.addr %s158, 4
      %s160 = scalar_lea.vmem %s3, %s159
      %p161 = scmp.lt.s32.totalorder %s14, 1
      %s162 = scalar_select %p161, %s14, 1
      %s163 = smul.addr %s162, 56
      %s164 = smul.addr %s163, 4
      %s165 = scalar_lea.vmem %s0, %s164
      %p166 = scmp.lt.s32.totalorder %s14, 1
      %s167 = scalar_select %p166, %s14, 1
      %s168 = smul.addr %s167, 53
      %s169 = smul.addr %s168, 4
      %s170 = scalar_lea.vmem %s3, %s169
      %v172 = vld [vmem:[%s2] sm:$0x1]
      %v173 = vld [vmem:[%s165] sm:$0xf]
      %v174 = vld [vmem:[%s165 + $0x4] sm:$0xf]
      %v175 = vld [vmem:[%s165 + $0x8] sm:$0xf]
      %v176 = vld [vmem:[%s165 + $0xc] sm:$0xf]
      %v177 = vld [vmem:[%s165 + $0x10] sm:$0xf]
      %v178 = vld [vmem:[%s165 + $0x14] sm:$0xf]
      %v179 = vld [vmem:[%s165 + $0x18] sm:$0xf]
      %v180 = vld [vmem:[%s165 + $0x1c] sm:$0xf]
      %v181 = vld [vmem:[%s165 + $0x20] sm:$0xf]
      %v182 = vld [vmem:[%s165 + $0x24] sm:$0xf]
      %v183 = vld [vmem:[%s165 + $0x28] sm:$0xf]
      %v184 = vld [vmem:[%s165 + $0x2c] sm:$0xf]
      %v185 = vld [vmem:[%s165 + $0x30] sm:$0xf]
      %v186 = vld [vmem:[%s165 + $0x34] sm:$0xf]
      %v187 = vld [vmem:[%s165 + $0x38] sm:$0xf]
      %v188 = vld [vmem:[%s165 + $0x3c] sm:$0xf]
      %v189 = vld [vmem:[%s165 + $0x40] sm:$0xf]
      %v190 = vld [vmem:[%s165 + $0x44] sm:$0xf]
      %v191 = vld [vmem:[%s165 + $0x48] sm:$0xf]
      %v192 = vld [vmem:[%s165 + $0x4c] sm:$0xf]
      %v193 = vld [vmem:[%s165 + $0x50] sm:$0xf]
      %v194 = vld [vmem:[%s165 + $0x54] sm:$0xf]
      %v195 = vld [vmem:[%s165 + $0x58] sm:$0xf]
      %v196 = vld [vmem:[%s165 + $0x5c] sm:$0xf]
      %v197 = vld [vmem:[%s165 + $0x60] sm:$0xf]
      %v198 = vld [vmem:[%s165 + $0x64] sm:$0xf]
      %v199 = vld [vmem:[%s165 + $0x68] sm:$0xf]
      %v200 = vld [vmem:[%s165 + $0x6c] sm:$0xf]
      %v201 = vld [vmem:[%s165 + $0x70] sm:$0xf]
      %v202 = vld [vmem:[%s165 + $0x74] sm:$0xf]
      %v203 = vld [vmem:[%s165 + $0x78] sm:$0xf]
      %v204 = vld [vmem:[%s165 + $0x7c] sm:$0xf]
      %v205 = vld [vmem:[%s165 + $0x80] sm:$0xf]
      %v206 = vld [vmem:[%s165 + $0x84] sm:$0xf]
      %v207 = vld [vmem:[%s165 + $0x88] sm:$0xf]
      %v208 = vld [vmem:[%s165 + $0x8c] sm:$0xf]
      %v209 = vld [vmem:[%s165 + $0x90] sm:$0xf]
      %v210 = vld [vmem:[%s165 + $0x94] sm:$0xf]
      %v211 = vld [vmem:[%s165 + $0x98] sm:$0xf]
      %v212 = vld [vmem:[%s165 + $0x9c] sm:$0xf]
      %v213 = vld [vmem:[%s165 + $0xa0] sm:$0xf]
      %v214 = vld [vmem:[%s165 + $0xa4] sm:$0xf]
      %v215 = vld [vmem:[%s165 + $0xa8] sm:$0xf]
      %v216 = vld [vmem:[%s165 + $0xac] sm:$0xf]
      %v217 = vld [vmem:[%s165 + $0xb0] sm:$0xf]
      %v218 = vld [vmem:[%s165 + $0xb4] sm:$0xf]
      %v219 = vld [vmem:[%s165 + $0xb8] sm:$0xf]
      %v220 = vld [vmem:[%s165 + $0xbc] sm:$0xf]
      %v221 = vld [vmem:[%s165 + $0xc0] sm:$0xf]
      %v222 = vld [vmem:[%s165 + $0xc4] sm:$0xf]
      %v223 = vld [vmem:[%s165 + $0xc8] sm:$0xf]
      %v224 = vld [vmem:[%s165 + $0xcc] sm:$0xf]
      %v225 = vld [vmem:[%s165 + $0xd0] sm:$0x3]
      %v226 = vld [vmem:[%s1] sm:$0xf]
      %v227 = vld [vmem:[%s1 + $0x4] sm:$0xf]
      %v228 = vld [vmem:[%s1 + $0x8] sm:$0xf]
      %v229 = vld [vmem:[%s1 + $0xc] sm:$0xf]
      %v230 = vld [vmem:[%s1 + $0x10] sm:$0xf]
      %v231 = vld [vmem:[%s1 + $0x14] sm:$0xf]
      %v232 = vld [vmem:[%s1 + $0x18] sm:$0xf]
      %v233 = vld [vmem:[%s1 + $0x1c] sm:$0xf]
      %v234 = vld [vmem:[%s165 + $0xd0] sm:$0x7]
      %s235 = scalar_lea.vmem %s1, 32
      %v236 = vld [vmem:[%s235] sm:$0xf]
      %v237 = vld [vmem:[%s235 + $0x4] sm:$0xf]
      %v238 = vld [vmem:[%s235 + $0x8] sm:$0xf]
      %v239 = vld [vmem:[%s235 + $0xc] sm:$0xf]
      %v240 = vld [vmem:[%s235 + $0x10] sm:$0xf]
      %v241 = vld [vmem:[%s235 + $0x14] sm:$0xf]
      %v242 = vld [vmem:[%s235 + $0x18] sm:$0xf]
      %v243 = vld [vmem:[%s235 + $0x1c] sm:$0xf]
      %v297 = vunpack.c.l.b16 %v173
      %v298 = vunpack.c.l.b16 %v174
      %v299 = vunpack.c.l.b16 %v175
      %v300 = vunpack.c.l.b16 %v176
      %v301 = vunpack.c.l.b16 %v177
      %v302 = vunpack.c.l.b16 %v178
      %v303 = vunpack.c.l.b16 %v179
      %v304 = vunpack.c.l.b16 %v180
      %v305 = vunpack.c.l.b16 %v181
      %v306 = vunpack.c.l.b16 %v182
      %v307 = vunpack.c.l.b16 %v183
      %v308 = vunpack.c.l.b16 %v184
      %v309 = vunpack.c.l.b16 %v185
      %v310 = vunpack.c.l.b16 %v186
      %v311 = vunpack.c.l.b16 %v187
      %v312 = vunpack.c.l.b16 %v188
      %v313 = vunpack.c.l.b16 %v189
      %v314 = vunpack.c.l.b16 %v190
      %v315 = vunpack.c.l.b16 %v191
      %v316 = vunpack.c.l.b16 %v192
      %v317 = vunpack.c.l.b16 %v193
      %v318 = vunpack.c.l.b16 %v194
      %v319 = vunpack.c.l.b16 %v195
      %v320 = vunpack.c.l.b16 %v196
      %v321 = vunpack.c.l.b16 %v197
      %v322 = vunpack.c.l.b16 %v198
      %v323 = vunpack.c.l.b16 %v199
      %v324 = vunpack.c.l.b16 %v200
      %v325 = vunpack.c.l.b16 %v201
      %v326 = vunpack.c.l.b16 %v202
      %v327 = vunpack.c.l.b16 %v203
      %v328 = vunpack.c.l.b16 %v204
      %v329 = vunpack.c.l.b16 %v205
      %v330 = vunpack.c.l.b16 %v206
      %v331 = vunpack.c.l.b16 %v207
      %v332 = vunpack.c.l.b16 %v208
      %v333 = vunpack.c.l.b16 %v209
      %v334 = vunpack.c.l.b16 %v210
      %v335 = vunpack.c.l.b16 %v211
      %v336 = vunpack.c.l.b16 %v212
      %v337 = vunpack.c.l.b16 %v213
      %v338 = vunpack.c.l.b16 %v214
      %v339 = vunpack.c.l.b16 %v215
      %v340 = vunpack.c.l.b16 %v216
      %v341 = vunpack.c.l.b16 %v217
      %v342 = vunpack.c.l.b16 %v218
      %v343 = vunpack.c.l.b16 %v219
      %v344 = vunpack.c.l.b16 %v220
      %v345 = vunpack.c.l.b16 %v221
      %v346 = vunpack.c.l.b16 %v222
      %v347 = vunpack.c.l.b16 %v223
      %v348 = vunpack.c.l.b16 %v224
      %v349 = vunpack.c.l.b16 %v234
      %v350 = vpack.c.b16 %v298, %v297
      %v351 = vpack.c.b16 %v300, %v299
      %v352 = vpack.c.b16 %v302, %v301
      %v353 = vpack.c.b16 %v304, %v303
      %v354 = vpack.c.b16 %v306, %v305
      %v355 = vpack.c.b16 %v308, %v307
      %v356 = vpack.c.b16 %v310, %v309
      %v357 = vpack.c.b16 %v312, %v311
      %v358 = vpack.c.b16 %v314, %v313
      %v359 = vpack.c.b16 %v316, %v315
      %v360 = vpack.c.b16 %v318, %v317
      %v361 = vpack.c.b16 %v320, %v319
      %v362 = vpack.c.b16 %v322, %v321
      %v363 = vpack.c.b16 %v324, %v323
      %v364 = vpack.c.b16 %v326, %v325
      %v365 = vpack.c.b16 %v328, %v327
      %v366 = vpack.c.b16 %v330, %v329
      %v367 = vpack.c.b16 %v332, %v331
      %v368 = vpack.c.b16 %v334, %v333
      %v369 = vpack.c.b16 %v336, %v335
      %v370 = vpack.c.b16 %v338, %v337
      %v371 = vpack.c.b16 %v340, %v339
      %v372 = vpack.c.b16 %v342, %v341
      %v373 = vpack.c.b16 %v344, %v343
      %v374 = vpack.c.b16 %v346, %v345
      %v375 = vpack.c.b16 %v348, %v347
      %v376 = vpack.c.b16 %v349, %v349
      %vm377 = vsmask.f32 7424
      %v379 = vshrl.u32 %v350, 16
      %v381 = vshll.u32 %v350, 16
      %v383 = vrot.slane %v381, 1
      %v384 = vor.u32 %v379, %v383
      %v386 = vshll.u32 %v351, 16
      %v388 = vrot.slane %v386, 1
      %v389 = vsel %vm377, %v384, %v388
      %v390 = vshrl.u32 %v351, 16
      %v392 = vor.u32 %v390, %v388
      %v394 = vshll.u32 %v352, 16
      %v396 = vrot.slane %v394, 1
      %v397 = vsel %vm377, %v392, %v396
      %v398 = vshrl.u32 %v352, 16
      %v400 = vor.u32 %v398, %v396
      %v402 = vshll.u32 %v353, 16
      %v404 = vrot.slane %v402, 1
      %v405 = vsel %vm377, %v400, %v404
      %v406 = vshrl.u32 %v353, 16
      %v408 = vor.u32 %v406, %v404
      %v410 = vshll.u32 %v354, 16
      %v412 = vrot.slane %v410, 1
      %v413 = vsel %vm377, %v408, %v412
      %v414 = vshrl.u32 %v354, 16
      %v416 = vor.u32 %v414, %v412
      %v418 = vshll.u32 %v355, 16
      %v420 = vrot.slane %v418, 1
      %v421 = vsel %vm377, %v416, %v420
      %v422 = vshrl.u32 %v355, 16
      %v424 = vor.u32 %v422, %v420
      %v426 = vshll.u32 %v356, 16
      %v428 = vrot.slane %v426, 1
      %v429 = vsel %vm377, %v424, %v428
      %v430 = vshrl.u32 %v356, 16
      %v432 = vor.u32 %v430, %v428
      %v434 = vshll.u32 %v357, 16
      %v436 = vrot.slane %v434, 1
      %v437 = vsel %vm377, %v432, %v436
      %v438 = vshrl.u32 %v357, 16
      %v440 = vor.u32 %v438, %v436
      %v442 = vshll.u32 %v358, 16
      %v444 = vrot.slane %v442, 1
      %v445 = vsel %vm377, %v440, %v444
      %v446 = vshrl.u32 %v358, 16
      %v448 = vor.u32 %v446, %v444
      %v450 = vshll.u32 %v359, 16
      %v452 = vrot.slane %v450, 1
      %v453 = vsel %vm377, %v448, %v452
      %v454 = vshrl.u32 %v359, 16
      %v456 = vor.u32 %v454, %v452
      %v458 = vshll.u32 %v360, 16
      %v460 = vrot.slane %v458, 1
      %v461 = vsel %vm377, %v456, %v460
      %v462 = vshrl.u32 %v360, 16
      %v464 = vor.u32 %v462, %v460
      %v466 = vshll.u32 %v361, 16
      %v468 = vrot.slane %v466, 1
      %v469 = vsel %vm377, %v464, %v468
      %v470 = vshrl.u32 %v361, 16
      %v472 = vor.u32 %v470, %v468
      %v474 = vshll.u32 %v362, 16
      %v476 = vrot.slane %v474, 1
      %v477 = vsel %vm377, %v472, %v476
      %v478 = vshrl.u32 %v362, 16
      %v480 = vor.u32 %v478, %v476
      %v482 = vshll.u32 %v363, 16
      %v484 = vrot.slane %v482, 1
      %v485 = vsel %vm377, %v480, %v484
      %v486 = vshrl.u32 %v363, 16
      %v488 = vor.u32 %v486, %v484
      %v490 = vshll.u32 %v364, 16
      %v492 = vrot.slane %v490, 1
      %v493 = vsel %vm377, %v488, %v492
      %v494 = vshrl.u32 %v364, 16
      %v496 = vor.u32 %v494, %v492
      %v498 = vshll.u32 %v365, 16
      %v500 = vrot.slane %v498, 1
      %v501 = vsel %vm377, %v496, %v500
      %v502 = vshrl.u32 %v365, 16
      %v504 = vor.u32 %v502, %v500
      %v506 = vshll.u32 %v366, 16
      %v508 = vrot.slane %v506, 1
      %v509 = vsel %vm377, %v504, %v508
      %v510 = vshrl.u32 %v366, 16
      %v512 = vor.u32 %v510, %v508
      %v514 = vshll.u32 %v367, 16
      %v516 = vrot.slane %v514, 1
      %v517 = vsel %vm377, %v512, %v516
      %v518 = vshrl.u32 %v367, 16
      %v520 = vor.u32 %v518, %v516
      %v522 = vshll.u32 %v368, 16
      %v524 = vrot.slane %v522, 1
      %v525 = vsel %vm377, %v520, %v524
      %v526 = vshrl.u32 %v368, 16
      %v528 = vor.u32 %v526, %v524
      %v530 = vshll.u32 %v369, 16
      %v532 = vrot.slane %v530, 1
      %v533 = vsel %vm377, %v528, %v532
      %v534 = vshrl.u32 %v369, 16
      %v536 = vor.u32 %v534, %v532
      %v538 = vshll.u32 %v370, 16
      %v540 = vrot.slane %v538, 1
      %v541 = vsel %vm377, %v536, %v540
      %v542 = vshrl.u32 %v370, 16
      %v544 = vor.u32 %v542, %v540
      %v546 = vshll.u32 %v371, 16
      %v548 = vrot.slane %v546, 1
      %v549 = vsel %vm377, %v544, %v548
      %v550 = vshrl.u32 %v371, 16
      %v552 = vor.u32 %v550, %v548
      %v554 = vshll.u32 %v372, 16
      %v556 = vrot.slane %v554, 1
      %v557 = vsel %vm377, %v552, %v556
      %v558 = vshrl.u32 %v372, 16
      %v560 = vor.u32 %v558, %v556
      %v562 = vshll.u32 %v373, 16
      %v564 = vrot.slane %v562, 1
      %v565 = vsel %vm377, %v560, %v564
      %v566 = vshrl.u32 %v373, 16
      %v568 = vor.u32 %v566, %v564
      %v570 = vshll.u32 %v374, 16
      %v572 = vrot.slane %v570, 1
      %v573 = vsel %vm377, %v568, %v572
      %v574 = vshrl.u32 %v374, 16
      %v576 = vor.u32 %v574, %v572
      %v578 = vshll.u32 %v375, 16
      %v580 = vrot.slane %v578, 1
      %v581 = vsel %vm377, %v576, %v580
      %v582 = vshrl.u32 %v375, 16
      %v584 = vor.u32 %v582, %v580
      %v586 = vshll.u32 %v376, 16
      %v588 = vrot.slane %v586, 1
      %v589 = vsel %vm377, %v584, %v588
      %v590 = vshrl.u32 %v376, 16
      %v592 = vor.u32 %v590, %v588
      %v601 = vunpack.c.l.b16 %v236
      %v602 = vunpack.c.l.b16 %v237
      %v603 = vunpack.c.l.b16 %v238
      %v604 = vunpack.c.l.b16 %v239
      %v605 = vunpack.c.l.b16 %v240
      %v606 = vunpack.c.l.b16 %v241
      %v607 = vunpack.c.l.b16 %v242
      %v608 = vunpack.c.l.b16 %v243
      %v609 = vpack.c.b16 %v602, %v601
      %v610 = vpack.c.b16 %v604, %v603
      %v611 = vpack.c.b16 %v606, %v605
      %v612 = vpack.c.b16 %v608, %v607
      %vm617 = vcmask 523264
      %v619 = vsel %vm617, %v389, 0
      %v622 = vsel %vm617, %v397, 0
      %v625 = vsel %vm617, %v405, 0
      %v628 = vsel %vm617, %v413, 0
      %v631 = vsel %vm617, %v421, 0
      %v634 = vsel %vm617, %v429, 0
      %v637 = vsel %vm617, %v437, 0
      %v640 = vsel %vm617, %v445, 0
      %v643 = vsel %vm617, %v453, 0
      %v646 = vsel %vm617, %v461, 0
      %v649 = vsel %vm617, %v469, 0
      %v652 = vsel %vm617, %v477, 0
      %v655 = vsel %vm617, %v485, 0
      %v658 = vsel %vm617, %v493, 0
      %v661 = vsel %vm617, %v501, 0
      %v664 = vsel %vm617, %v509, 0
      %v667 = vsel %vm617, %v517, 0
      %v670 = vsel %vm617, %v525, 0
      %v673 = vsel %vm617, %v533, 0
      %v676 = vsel %vm617, %v541, 0
      %v679 = vsel %vm617, %v549, 0
      %v682 = vsel %vm617, %v557, 0
      %v685 = vsel %vm617, %v565, 0
      %v688 = vsel %vm617, %v573, 0
      %v691 = vsel %vm617, %v581, 0
      %v694 = vsel %vm617, %v589, 0
      %v697 = vsel %vm617, %v592, 0
      %699 = vmatpush.bf16.msra.mxu0 0
      %700 = vmatpush.bf16.msra.mxu0 0
      %701 = vmatpush.bf16.msra.mxu0 0
      %702 = vmatpush.bf16.msra.mxu0 0
      %703 = vmatpush.bf16.msra.mxu0 %v612
      %704 = vmatpush.bf16.msra.mxu0 %v611
      %705 = vmatpush.bf16.msra.mxu0 %v610
      %706 = vmatpush.bf16.msra.mxu0 %v609
      %707 = vmatmul.bf16.gmra.mxu0 %v619
      %v708 = vpop.f32.mrf.mxu0
      %v709 = vadd.f32 0.0, %v708
      %v710 = vpop.f32.mrf.mxu0
      %v711 = vadd.f32 0.0, %v710
      %712 = vmatmul.bf16.gmra.mxu0 %v622
      %v713 = vpop.f32.mrf.mxu0
      %v714 = vadd.f32 0.0, %v713
      %v715 = vpop.f32.mrf.mxu0
      %v716 = vadd.f32 0.0, %v715
      %717 = vmatmul.bf16.gmra.mxu0 %v625
      %v718 = vpop.f32.mrf.mxu0
      %v719 = vadd.f32 0.0, %v718
      %v720 = vpop.f32.mrf.mxu0
      %v721 = vadd.f32 0.0, %v720
      %722 = vmatmul.bf16.gmra.mxu0 %v628
      %v723 = vpop.f32.mrf.mxu0
      %v724 = vadd.f32 0.0, %v723
      %v725 = vpop.f32.mrf.mxu0
      %v726 = vadd.f32 0.0, %v725
      %727 = vmatmul.bf16.gmra.mxu0 %v631
      %v728 = vpop.f32.mrf.mxu0
      %v729 = vadd.f32 0.0, %v728
      %v730 = vpop.f32.mrf.mxu0
      %v731 = vadd.f32 0.0, %v730
      %732 = vmatmul.bf16.gmra.mxu0 %v634
      %v733 = vpop.f32.mrf.mxu0
      %v734 = vadd.f32 0.0, %v733
      %v735 = vpop.f32.mrf.mxu0
      %v736 = vadd.f32 0.0, %v735
      %737 = vmatmul.bf16.gmra.mxu0 %v637
      %v738 = vpop.f32.mrf.mxu0
      %v739 = vadd.f32 0.0, %v738
      %v740 = vpop.f32.mrf.mxu0
      %v741 = vadd.f32 0.0, %v740
      %742 = vmatmul.bf16.gmra.mxu0 %v640
      %v743 = vpop.f32.mrf.mxu0
      %v744 = vadd.f32 0.0, %v743
      %v745 = vpop.f32.mrf.mxu0
      %v746 = vadd.f32 0.0, %v745
      %747 = vmatmul.bf16.gmra.mxu0 %v643
      %v748 = vpop.f32.mrf.mxu0
      %v749 = vadd.f32 0.0, %v748
      %v750 = vpop.f32.mrf.mxu0
      %v751 = vadd.f32 0.0, %v750
      %752 = vmatmul.bf16.gmra.mxu0 %v646
      %v753 = vpop.f32.mrf.mxu0
      %v754 = vadd.f32 0.0, %v753
      %v755 = vpop.f32.mrf.mxu0
      %v756 = vadd.f32 0.0, %v755
      %757 = vmatmul.bf16.gmra.mxu0 %v649
      %v758 = vpop.f32.mrf.mxu0
      %v759 = vadd.f32 0.0, %v758
      %v760 = vpop.f32.mrf.mxu0
      %v761 = vadd.f32 0.0, %v760
      %762 = vmatmul.bf16.gmra.mxu0 %v652
      %v763 = vpop.f32.mrf.mxu0
      %v764 = vadd.f32 0.0, %v763
      %v765 = vpop.f32.mrf.mxu0
      %v766 = vadd.f32 0.0, %v765
      %767 = vmatmul.bf16.gmra.mxu0 %v655
      %v768 = vpop.f32.mrf.mxu0
      %v769 = vadd.f32 0.0, %v768
      %v770 = vpop.f32.mrf.mxu0
      %v771 = vadd.f32 0.0, %v770
      %772 = vmatmul.bf16.gmra.mxu0 %v658
      %v773 = vpop.f32.mrf.mxu0
      %v774 = vadd.f32 0.0, %v773
      %v775 = vpop.f32.mrf.mxu0
      %v776 = vadd.f32 0.0, %v775
      %777 = vmatmul.bf16.gmra.mxu0 %v661
      %v778 = vpop.f32.mrf.mxu0
      %v779 = vadd.f32 0.0, %v778
      %v780 = vpop.f32.mrf.mxu0
      %v781 = vadd.f32 0.0, %v780
      %782 = vmatmul.bf16.gmra.mxu0 %v664
      %v783 = vpop.f32.mrf.mxu0
      %v784 = vadd.f32 0.0, %v783
      %v785 = vpop.f32.mrf.mxu0
      %v786 = vadd.f32 0.0, %v785
      %787 = vmatmul.bf16.gmra.mxu0 %v667
      %v788 = vpop.f32.mrf.mxu0
      %v789 = vadd.f32 0.0, %v788
      %v790 = vpop.f32.mrf.mxu0
      %v791 = vadd.f32 0.0, %v790
      %792 = vmatmul.bf16.gmra.mxu0 %v670
      %v793 = vpop.f32.mrf.mxu0
      %v794 = vadd.f32 0.0, %v793
      %v795 = vpop.f32.mrf.mxu0
      %v796 = vadd.f32 0.0, %v795
      %797 = vmatmul.bf16.gmra.mxu0 %v673
      %v798 = vpop.f32.mrf.mxu0
      %v799 = vadd.f32 0.0, %v798
      %v800 = vpop.f32.mrf.mxu0
      %v801 = vadd.f32 0.0, %v800
      %802 = vmatmul.bf16.gmra.mxu0 %v676
      %v803 = vpop.f32.mrf.mxu0
      %v804 = vadd.f32 0.0, %v803
      %v805 = vpop.f32.mrf.mxu0
      %v806 = vadd.f32 0.0, %v805
      %807 = vmatmul.bf16.gmra.mxu0 %v679
      %v808 = vpop.f32.mrf.mxu0
      %v809 = vadd.f32 0.0, %v808
      %v810 = vpop.f32.mrf.mxu0
      %v811 = vadd.f32 0.0, %v810
      %812 = vmatmul.bf16.gmra.mxu0 %v682
      %v813 = vpop.f32.mrf.mxu0
      %v814 = vadd.f32 0.0, %v813
      %v815 = vpop.f32.mrf.mxu0
      %v816 = vadd.f32 0.0, %v815
      %817 = vmatmul.bf16.gmra.mxu0 %v685
      %v818 = vpop.f32.mrf.mxu0
      %v819 = vadd.f32 0.0, %v818
      %v820 = vpop.f32.mrf.mxu0
      %v821 = vadd.f32 0.0, %v820
      %822 = vmatmul.bf16.gmra.mxu0 %v688
      %v823 = vpop.f32.mrf.mxu0
      %v824 = vadd.f32 0.0, %v823
      %v825 = vpop.f32.mrf.mxu0
      %v826 = vadd.f32 0.0, %v825
      %827 = vmatmul.bf16.gmra.mxu0 %v691
      %v828 = vpop.f32.mrf.mxu0
      %v829 = vadd.f32 0.0, %v828
      %v830 = vpop.f32.mrf.mxu0
      %v831 = vadd.f32 0.0, %v830
      %832 = vmatmul.bf16.gmra.mxu0 %v694
      %v833 = vpop.f32.mrf.mxu0
      %v834 = vadd.f32 0.0, %v833
      %v835 = vpop.f32.mrf.mxu0
      %v836 = vadd.f32 0.0, %v835
      %837 = vmatmul.bf16.gmra.mxu0 %v697
      %v838 = vpop.f32.mrf.mxu0
      %v839 = vadd.f32 0.0, %v838
      %v840 = vpop.f32.mrf.mxu0
      %841 = vdwg.mxu0
      %v843 = vunpack.c.l.b16 %v225
      %v844 = vpack.c.b16 %v843, %v843
      %v853 = vunpack.c.l.b16 %v226
      %v854 = vunpack.c.l.b16 %v227
      %v855 = vunpack.c.l.b16 %v228
      %v856 = vunpack.c.l.b16 %v229
      %v857 = vunpack.c.l.b16 %v230
      %v858 = vunpack.c.l.b16 %v231
      %v859 = vunpack.c.l.b16 %v232
      %v860 = vunpack.c.l.b16 %v233
      %v861 = vpack.c.b16 %v854, %v853
      %v862 = vpack.c.b16 %v856, %v855
      %v863 = vpack.c.b16 %v858, %v857
      %v864 = vpack.c.b16 %v860, %v859
      %v869 = vsel %vm617, %v350, 0
      %v871 = vsel %vm617, %v351, 0
      %v873 = vsel %vm617, %v352, 0
      %v875 = vsel %vm617, %v353, 0
      %v877 = vsel %vm617, %v354, 0
      %v879 = vsel %vm617, %v355, 0
      %v881 = vsel %vm617, %v356, 0
      %v883 = vsel %vm617, %v357, 0
      %v885 = vsel %vm617, %v358, 0
      %v887 = vsel %vm617, %v359, 0
      %v889 = vsel %vm617, %v360, 0
      %v891 = vsel %vm617, %v361, 0
      %v893 = vsel %vm617, %v362, 0
      %v895 = vsel %vm617, %v363, 0
      %v897 = vsel %vm617, %v364, 0
      %v899 = vsel %vm617, %v365, 0
      %v901 = vsel %vm617, %v366, 0
      %v903 = vsel %vm617, %v367, 0
      %v905 = vsel %vm617, %v368, 0
      %v907 = vsel %vm617, %v369, 0
      %v909 = vsel %vm617, %v370, 0
      %v911 = vsel %vm617, %v371, 0
      %v913 = vsel %vm617, %v372, 0
      %v915 = vsel %vm617, %v373, 0
      %v917 = vsel %vm617, %v374, 0
      %v919 = vsel %vm617, %v375, 0
      %v922 = vsel %vm617, %v844, 0
      %924 = vmatpush.bf16.msra.mxu0 0
      %925 = vmatpush.bf16.msra.mxu0 0
      %926 = vmatpush.bf16.msra.mxu0 0
      %927 = vmatpush.bf16.msra.mxu0 0
      %928 = vmatpush.bf16.msra.mxu0 %v864
      %929 = vmatpush.bf16.msra.mxu0 %v863
      %930 = vmatpush.bf16.msra.mxu0 %v862
      %931 = vmatpush.bf16.msra.mxu0 %v861
      %932 = vmatmul.bf16.gmra.mxu0 %v869
      %v933 = vpop.f32.mrf.mxu0
      %v934 = vadd.f32 %v709, %v933
      %v935 = vpop.f32.mrf.mxu0
      %v936 = vadd.f32 %v711, %v935
      %937 = vmatmul.bf16.gmra.mxu0 %v871
      %v938 = vpop.f32.mrf.mxu0
      %v939 = vadd.f32 %v714, %v938
      %v940 = vpop.f32.mrf.mxu0
      %v941 = vadd.f32 %v716, %v940
      %942 = vmatmul.bf16.gmra.mxu0 %v873
      %v943 = vpop.f32.mrf.mxu0
      %v944 = vadd.f32 %v719, %v943
      %v945 = vpop.f32.mrf.mxu0
      %v946 = vadd.f32 %v721, %v945
      %947 = vmatmul.bf16.gmra.mxu0 %v875
      %v948 = vpop.f32.mrf.mxu0
      %v949 = vadd.f32 %v724, %v948
      %v950 = vpop.f32.mrf.mxu0
      %v951 = vadd.f32 %v726, %v950
      %952 = vmatmul.bf16.gmra.mxu0 %v877
      %v953 = vpop.f32.mrf.mxu0
      %v954 = vadd.f32 %v729, %v953
      %v955 = vpop.f32.mrf.mxu0
      %v956 = vadd.f32 %v731, %v955
      %957 = vmatmul.bf16.gmra.mxu0 %v879
      %v958 = vpop.f32.mrf.mxu0
      %v959 = vadd.f32 %v734, %v958
      %v960 = vpop.f32.mrf.mxu0
      %v961 = vadd.f32 %v736, %v960
      %962 = vmatmul.bf16.gmra.mxu0 %v881
      %v963 = vpop.f32.mrf.mxu0
      %v964 = vadd.f32 %v739, %v963
      %v965 = vpop.f32.mrf.mxu0
      %v966 = vadd.f32 %v741, %v965
      %967 = vmatmul.bf16.gmra.mxu0 %v883
      %v968 = vpop.f32.mrf.mxu0
      %v969 = vadd.f32 %v744, %v968
      %v970 = vpop.f32.mrf.mxu0
      %v971 = vadd.f32 %v746, %v970
      %972 = vmatmul.bf16.gmra.mxu0 %v885
      %v973 = vpop.f32.mrf.mxu0
      %v974 = vadd.f32 %v749, %v973
      %v975 = vpop.f32.mrf.mxu0
      %v976 = vadd.f32 %v751, %v975
      %977 = vmatmul.bf16.gmra.mxu0 %v887
      %v978 = vpop.f32.mrf.mxu0
      %v979 = vadd.f32 %v754, %v978
      %v980 = vpop.f32.mrf.mxu0
      %v981 = vadd.f32 %v756, %v980
      %982 = vmatmul.bf16.gmra.mxu0 %v889
      %v983 = vpop.f32.mrf.mxu0
      %v984 = vadd.f32 %v759, %v983
      %v985 = vpop.f32.mrf.mxu0
      %v986 = vadd.f32 %v761, %v985
      %987 = vmatmul.bf16.gmra.mxu0 %v891
      %v988 = vpop.f32.mrf.mxu0
      %v989 = vadd.f32 %v764, %v988
      %v990 = vpop.f32.mrf.mxu0
      %v991 = vadd.f32 %v766, %v990
      %992 = vmatmul.bf16.gmra.mxu0 %v893
      %v993 = vpop.f32.mrf.mxu0
      %v994 = vadd.f32 %v769, %v993
      %v995 = vpop.f32.mrf.mxu0
      %v996 = vadd.f32 %v771, %v995
      %997 = vmatmul.bf16.gmra.mxu0 %v895
      %v998 = vpop.f32.mrf.mxu0
      %v999 = vadd.f32 %v774, %v998
      %v1000 = vpop.f32.mrf.mxu0
      %v1001 = vadd.f32 %v776, %v1000
      %1002 = vmatmul.bf16.gmra.mxu0 %v897
      %v1003 = vpop.f32.mrf.mxu0
      %v1004 = vadd.f32 %v779, %v1003
      %v1005 = vpop.f32.mrf.mxu0
      %v1006 = vadd.f32 %v781, %v1005
      %1007 = vmatmul.bf16.gmra.mxu0 %v899
      %v1008 = vpop.f32.mrf.mxu0
      %v1009 = vadd.f32 %v784, %v1008
      %v1010 = vpop.f32.mrf.mxu0
      %v1011 = vadd.f32 %v786, %v1010
      %1012 = vmatmul.bf16.gmra.mxu0 %v901
      %v1013 = vpop.f32.mrf.mxu0
      %v1014 = vadd.f32 %v789, %v1013
      %v1015 = vpop.f32.mrf.mxu0
      %v1016 = vadd.f32 %v791, %v1015
      %1017 = vmatmul.bf16.gmra.mxu0 %v903
      %v1018 = vpop.f32.mrf.mxu0
      %v1019 = vadd.f32 %v794, %v1018
      %v1020 = vpop.f32.mrf.mxu0
      %v1021 = vadd.f32 %v796, %v1020
      %1022 = vmatmul.bf16.gmra.mxu0 %v905
      %v1023 = vpop.f32.mrf.mxu0
      %v1024 = vadd.f32 %v799, %v1023
      %v1025 = vpop.f32.mrf.mxu0
      %v1026 = vadd.f32 %v801, %v1025
      %1027 = vmatmul.bf16.gmra.mxu0 %v907
      %v1028 = vpop.f32.mrf.mxu0
      %v1029 = vadd.f32 %v804, %v1028
      %v1030 = vpop.f32.mrf.mxu0
      %v1031 = vadd.f32 %v806, %v1030
      %1032 = vmatmul.bf16.gmra.mxu0 %v909
      %v1033 = vpop.f32.mrf.mxu0
      %v1034 = vadd.f32 %v809, %v1033
      %v1035 = vpop.f32.mrf.mxu0
      %v1036 = vadd.f32 %v811, %v1035
      %1037 = vmatmul.bf16.gmra.mxu0 %v911
      %v1038 = vpop.f32.mrf.mxu0
      %v1039 = vadd.f32 %v814, %v1038
      %v1040 = vpop.f32.mrf.mxu0
      %v1041 = vadd.f32 %v816, %v1040
      %1042 = vmatmul.bf16.gmra.mxu0 %v913
      %v1043 = vpop.f32.mrf.mxu0
      %v1044 = vadd.f32 %v819, %v1043
      %v1045 = vpop.f32.mrf.mxu0
      %v1046 = vadd.f32 %v821, %v1045
      %1047 = vmatmul.bf16.gmra.mxu0 %v915
      %v1048 = vpop.f32.mrf.mxu0
      %v1049 = vadd.f32 %v824, %v1048
      %v1050 = vpop.f32.mrf.mxu0
      %v1051 = vadd.f32 %v826, %v1050
      %1052 = vmatmul.bf16.gmra.mxu0 %v917
      %v1053 = vpop.f32.mrf.mxu0
      %v1054 = vadd.f32 %v829, %v1053
      %v1055 = vpop.f32.mrf.mxu0
      %v1056 = vadd.f32 %v831, %v1055
      %1057 = vmatmul.bf16.gmra.mxu0 %v919
      %v1058 = vpop.f32.mrf.mxu0
      %v1059 = vadd.f32 %v834, %v1058
      %v1060 = vpop.f32.mrf.mxu0
      %v1061 = vadd.f32 %v836, %v1060
      %1062 = vmatmul.bf16.gmra.mxu0 %v922
      %v1063 = vpop.f32.mrf.mxu0
      %v1064 = vadd.f32 %v839, %v1063
      %v1065 = vpop.f32.mrf.mxu0
      %1066 = vdwg.mxu0
      %v1067 = vld [vmem:[%s165 + $0x8] sm:$0xc]
      %v1068 = vld [vmem:[%s165 + $0xc] sm:$0xf]
      %v1069 = vld [vmem:[%s165 + $0x10] sm:$0xf]
      %v1070 = vld [vmem:[%s165 + $0x14] sm:$0xf]
      %v1071 = vld [vmem:[%s165 + $0x18] sm:$0xf]
      %v1072 = vld [vmem:[%s165 + $0x1c] sm:$0xf]
      %v1073 = vld [vmem:[%s165 + $0x20] sm:$0xf]
      %v1074 = vld [vmem:[%s165 + $0x24] sm:$0xf]
      %v1075 = vld [vmem:[%s165 + $0x28] sm:$0xf]
      %v1076 = vld [vmem:[%s165 + $0x2c] sm:$0xf]
      %v1077 = vld [vmem:[%s165 + $0x30] sm:$0xf]
      %v1078 = vld [vmem:[%s165 + $0x34] sm:$0xf]
      %v1079 = vld [vmem:[%s165 + $0x38] sm:$0xf]
      %v1080 = vld [vmem:[%s165 + $0x3c] sm:$0xf]
      %v1081 = vld [vmem:[%s165 + $0x40] sm:$0xf]
      %v1082 = vld [vmem:[%s165 + $0x44] sm:$0xf]
      %v1083 = vld [vmem:[%s165 + $0x48] sm:$0xf]
      %v1084 = vld [vmem:[%s165 + $0x4c] sm:$0xf]
      %v1085 = vld [vmem:[%s165 + $0x50] sm:$0xf]
      %v1086 = vld [vmem:[%s165 + $0x54] sm:$0xf]
      %v1087 = vld [vmem:[%s165 + $0x58] sm:$0xf]
      %v1088 = vld [vmem:[%s165 + $0x5c] sm:$0xf]
      %v1089 = vld [vmem:[%s165 + $0x60] sm:$0xf]
      %v1090 = vld [vmem:[%s165 + $0x64] sm:$0xf]
      %v1091 = vld [vmem:[%s165 + $0x68] sm:$0xf]
      %v1092 = vld [vmem:[%s165 + $0x6c] sm:$0xf]
      %v1093 = vld [vmem:[%s165 + $0x70] sm:$0xf]
      %v1094 = vld [vmem:[%s165 + $0x74] sm:$0xf]
      %v1095 = vld [vmem:[%s165 + $0x78] sm:$0xf]
      %v1096 = vld [vmem:[%s165 + $0x7c] sm:$0xf]
      %v1097 = vld [vmem:[%s165 + $0x80] sm:$0xf]
      %v1098 = vld [vmem:[%s165 + $0x84] sm:$0xf]
      %v1099 = vld [vmem:[%s165 + $0x88] sm:$0xf]
      %v1100 = vld [vmem:[%s165 + $0x8c] sm:$0xf]
      %v1101 = vld [vmem:[%s165 + $0x90] sm:$0xf]
      %v1102 = vld [vmem:[%s165 + $0x94] sm:$0xf]
      %v1103 = vld [vmem:[%s165 + $0x98] sm:$0xf]
      %v1104 = vld [vmem:[%s165 + $0x9c] sm:$0xf]
      %v1105 = vld [vmem:[%s165 + $0xa0] sm:$0xf]
      %v1106 = vld [vmem:[%s165 + $0xa4] sm:$0xf]
      %v1107 = vld [vmem:[%s165 + $0xa8] sm:$0xf]
      %v1108 = vld [vmem:[%s165 + $0xac] sm:$0xf]
      %v1109 = vld [vmem:[%s165 + $0xb0] sm:$0xf]
      %v1110 = vld [vmem:[%s165 + $0xb4] sm:$0xf]
      %v1111 = vld [vmem:[%s165 + $0xb8] sm:$0xf]
      %v1112 = vld [vmem:[%s165 + $0xbc] sm:$0xf]
      %v1113 = vld [vmem:[%s165 + $0xc0] sm:$0xf]
      %v1114 = vld [vmem:[%s165 + $0xc4] sm:$0xf]
      %v1115 = vld [vmem:[%s165 + $0xc8] sm:$0xf]
      %v1116 = vld [vmem:[%s165 + $0xcc] sm:$0xf]
      %v1117 = vld [vmem:[%s165 + $0xd0] sm:$0xf]
      %v1118 = vld [vmem:[%s165 + $0xd4] sm:$0xf]
      %v1119 = vld [vmem:[%s165 + $0xd8] sm:$0xf]
      %v1120 = vld [vmem:[%s165 + $0xdc] sm:$0x1]
      %s1121 = scalar_lea.vmem %s1, 64
      %v1122 = vld [vmem:[%s1121] sm:$0xf]
      %v1123 = vld [vmem:[%s1121 + $0x4] sm:$0xf]
      %v1124 = vld [vmem:[%s1121 + $0x8] sm:$0xf]
      %v1125 = vld [vmem:[%s1121 + $0xc] sm:$0xf]
      %v1126 = vld [vmem:[%s1121 + $0x10] sm:$0xf]
      %v1127 = vld [vmem:[%s1121 + $0x14] sm:$0xf]
      %v1128 = vld [vmem:[%s1121 + $0x18] sm:$0xf]
      %v1129 = vld [vmem:[%s1121 + $0x1c] sm:$0xf]
      %v1184 = vunpack.c.l.b16 %v1067
      %v1185 = vunpack.c.l.b16 %v1068
      %v1186 = vunpack.c.l.b16 %v1069
      %v1187 = vunpack.c.l.b16 %v1070
      %v1188 = vunpack.c.l.b16 %v1071
      %v1189 = vunpack.c.l.b16 %v1072
      %v1190 = vunpack.c.l.b16 %v1073
      %v1191 = vunpack.c.l.b16 %v1074
      %v1192 = vunpack.c.l.b16 %v1075
      %v1193 = vunpack.c.l.b16 %v1076
      %v1194 = vunpack.c.l.b16 %v1077
      %v1195 = vunpack.c.l.b16 %v1078
      %v1196 = vunpack.c.l.b16 %v1079
      %v1197 = vunpack.c.l.b16 %v1080
      %v1198 = vunpack.c.l.b16 %v1081
      %v1199 = vunpack.c.l.b16 %v1082
      %v1200 = vunpack.c.l.b16 %v1083
      %v1201 = vunpack.c.l.b16 %v1084
      %v1202 = vunpack.c.l.b16 %v1085
      %v1203 = vunpack.c.l.b16 %v1086
      %v1204 = vunpack.c.l.b16 %v1087
      %v1205 = vunpack.c.l.b16 %v1088
      %v1206 = vunpack.c.l.b16 %v1089
      %v1207 = vunpack.c.l.b16 %v1090
      %v1208 = vunpack.c.l.b16 %v1091
      %v1209 = vunpack.c.l.b16 %v1092
      %v1210 = vunpack.c.l.b16 %v1093
      %v1211 = vunpack.c.l.b16 %v1094
      %v1212 = vunpack.c.l.b16 %v1095
      %v1213 = vunpack.c.l.b16 %v1096
      %v1214 = vunpack.c.l.b16 %v1097
      %v1215 = vunpack.c.l.b16 %v1098
      %v1216 = vunpack.c.l.b16 %v1099
      %v1217 = vunpack.c.l.b16 %v1100
      %v1218 = vunpack.c.l.b16 %v1101
      %v1219 = vunpack.c.l.b16 %v1102
      %v1220 = vunpack.c.l.b16 %v1103
      %v1221 = vunpack.c.l.b16 %v1104
      %v1222 = vunpack.c.l.b16 %v1105
      %v1223 = vunpack.c.l.b16 %v1106
      %v1224 = vunpack.c.l.b16 %v1107
      %v1225 = vunpack.c.l.b16 %v1108
      %v1226 = vunpack.c.l.b16 %v1109
      %v1227 = vunpack.c.l.b16 %v1110
      %v1228 = vunpack.c.l.b16 %v1111
      %v1229 = vunpack.c.l.b16 %v1112
      %v1230 = vunpack.c.l.b16 %v1113
      %v1231 = vunpack.c.l.b16 %v1114
      %v1232 = vunpack.c.l.b16 %v1115
      %v1233 = vunpack.c.l.b16 %v1116
      %v1234 = vunpack.c.l.b16 %v1117
      %v1235 = vunpack.c.l.b16 %v1118
      %v1236 = vunpack.c.l.b16 %v1119
      %v1237 = vunpack.c.l.b16 %v1120
      %v1238 = vpack.c.b16 %v1185, %v1184
      %v1239 = vpack.c.b16 %v1187, %v1186
      %v1240 = vpack.c.b16 %v1189, %v1188
      %v1241 = vpack.c.b16 %v1191, %v1190
      %v1242 = vpack.c.b16 %v1193, %v1192
      %v1243 = vpack.c.b16 %v1195, %v1194
      %v1244 = vpack.c.b16 %v1197, %v1196
      %v1245 = vpack.c.b16 %v1199, %v1198
      %v1246 = vpack.c.b16 %v1201, %v1200
      %v1247 = vpack.c.b16 %v1203, %v1202
      %v1248 = vpack.c.b16 %v1205, %v1204
      %v1249 = vpack.c.b16 %v1207, %v1206
      %v1250 = vpack.c.b16 %v1209, %v1208
      %v1251 = vpack.c.b16 %v1211, %v1210
      %v1252 = vpack.c.b16 %v1213, %v1212
      %v1253 = vpack.c.b16 %v1215, %v1214
      %v1254 = vpack.c.b16 %v1217, %v1216
      %v1255 = vpack.c.b16 %v1219, %v1218
      %v1256 = vpack.c.b16 %v1221, %v1220
      %v1257 = vpack.c.b16 %v1223, %v1222
      %v1258 = vpack.c.b16 %v1225, %v1224
      %v1259 = vpack.c.b16 %v1227, %v1226
      %v1260 = vpack.c.b16 %v1229, %v1228
      %v1261 = vpack.c.b16 %v1231, %v1230
      %v1262 = vpack.c.b16 %v1233, %v1232
      %v1263 = vpack.c.b16 %v1235, %v1234
      %v1264 = vpack.c.b16 %v1237, %v1236
      %vm1265 = vsmask.f32 5376
      %v1267 = vshrl.u32 %v1238, 16
      %v1269 = vrot.slane %v1267, 2
      %v1270 = vshll.u32 %v1238, 16
      %v1272 = vrot.slane %v1270, 3
      %v1273 = vor.u32 %v1269, %v1272
      %v1275 = vshrl.u32 %v1239, 16
      %v1277 = vrot.slane %v1275, 2
      %v1278 = vshll.u32 %v1239, 16
      %v1280 = vrot.slane %v1278, 3
      %v1281 = vor.u32 %v1277, %v1280
      %v1282 = vsel %vm1265, %v1273, %v1281
      %v1284 = vshrl.u32 %v1240, 16
      %v1286 = vrot.slane %v1284, 2
      %v1287 = vshll.u32 %v1240, 16
      %v1289 = vrot.slane %v1287, 3
      %v1290 = vor.u32 %v1286, %v1289
      %v1291 = vsel %vm1265, %v1281, %v1290
      %v1293 = vshrl.u32 %v1241, 16
      %v1295 = vrot.slane %v1293, 2
      %v1296 = vshll.u32 %v1241, 16
      %v1298 = vrot.slane %v1296, 3
      %v1299 = vor.u32 %v1295, %v1298
      %v1300 = vsel %vm1265, %v1290, %v1299
      %v1302 = vshrl.u32 %v1242, 16
      %v1304 = vrot.slane %v1302, 2
      %v1305 = vshll.u32 %v1242, 16
      %v1307 = vrot.slane %v1305, 3
      %v1308 = vor.u32 %v1304, %v1307
      %v1309 = vsel %vm1265, %v1299, %v1308
      %v1311 = vshrl.u32 %v1243, 16
      %v1313 = vrot.slane %v1311, 2
      %v1314 = vshll.u32 %v1243, 16
      %v1316 = vrot.slane %v1314, 3
      %v1317 = vor.u32 %v1313, %v1316
      %v1318 = vsel %vm1265, %v1308, %v1317
      %v1320 = vshrl.u32 %v1244, 16
      %v1322 = vrot.slane %v1320, 2
      %v1323 = vshll.u32 %v1244, 16
      %v1325 = vrot.slane %v1323, 3
      %v1326 = vor.u32 %v1322, %v1325
      %v1327 = vsel %vm1265, %v1317, %v1326
      %v1329 = vshrl.u32 %v1245, 16
      %v1331 = vrot.slane %v1329, 2
      %v1332 = vshll.u32 %v1245, 16
      %v1334 = vrot.slane %v1332, 3
      %v1335 = vor.u32 %v1331, %v1334
      %v1336 = vsel %vm1265, %v1326, %v1335
      %v1338 = vshrl.u32 %v1246, 16
      %v1340 = vrot.slane %v1338, 2
      %v1341 = vshll.u32 %v1246, 16
      %v1343 = vrot.slane %v1341, 3
      %v1344 = vor.u32 %v1340, %v1343
      %v1345 = vsel %vm1265, %v1335, %v1344
      %v1347 = vshrl.u32 %v1247, 16
      %v1349 = vrot.slane %v1347, 2
      %v1350 = vshll.u32 %v1247, 16
      %v1352 = vrot.slane %v1350, 3
      %v1353 = vor.u32 %v1349, %v1352
      %v1354 = vsel %vm1265, %v1344, %v1353
      %v1356 = vshrl.u32 %v1248, 16
      %v1358 = vrot.slane %v1356, 2
      %v1359 = vshll.u32 %v1248, 16
      %v1361 = vrot.slane %v1359, 3
      %v1362 = vor.u32 %v1358, %v1361
      %v1363 = vsel %vm1265, %v1353, %v1362
      %v1365 = vshrl.u32 %v1249, 16
      %v1367 = vrot.slane %v1365, 2
      %v1368 = vshll.u32 %v1249, 16
      %v1370 = vrot.slane %v1368, 3
      %v1371 = vor.u32 %v1367, %v1370
      %v1372 = vsel %vm1265, %v1362, %v1371
      %v1374 = vshrl.u32 %v1250, 16
      %v1376 = vrot.slane %v1374, 2
      %v1377 = vshll.u32 %v1250, 16
      %v1379 = vrot.slane %v1377, 3
      %v1380 = vor.u32 %v1376, %v1379
      %v1381 = vsel %vm1265, %v1371, %v1380
      %v1383 = vshrl.u32 %v1251, 16
      %v1385 = vrot.slane %v1383, 2
      %v1386 = vshll.u32 %v1251, 16
      %v1388 = vrot.slane %v1386, 3
      %v1389 = vor.u32 %v1385, %v1388
      %v1390 = vsel %vm1265, %v1380, %v1389
      %v1392 = vshrl.u32 %v1252, 16
      %v1394 = vrot.slane %v1392, 2
      %v1395 = vshll.u32 %v1252, 16
      %v1397 = vrot.slane %v1395, 3
      %v1398 = vor.u32 %v1394, %v1397
      %v1399 = vsel %vm1265, %v1389, %v1398
      %v1401 = vshrl.u32 %v1253, 16
      %v1403 = vrot.slane %v1401, 2
      %v1404 = vshll.u32 %v1253, 16
      %v1406 = vrot.slane %v1404, 3
      %v1407 = vor.u32 %v1403, %v1406
      %v1408 = vsel %vm1265, %v1398, %v1407
      %v1410 = vshrl.u32 %v1254, 16
      %v1412 = vrot.slane %v1410, 2
      %v1413 = vshll.u32 %v1254, 16
      %v1415 = vrot.slane %v1413, 3
      %v1416 = vor.u32 %v1412, %v1415
      %v1417 = vsel %vm1265, %v1407, %v1416
      %v1419 = vshrl.u32 %v1255, 16
      %v1421 = vrot.slane %v1419, 2
      %v1422 = vshll.u32 %v1255, 16
      %v1424 = vrot.slane %v1422, 3
      %v1425 = vor.u32 %v1421, %v1424
      %v1426 = vsel %vm1265, %v1416, %v1425
      %v1428 = vshrl.u32 %v1256, 16
      %v1430 = vrot.slane %v1428, 2
      %v1431 = vshll.u32 %v1256, 16
      %v1433 = vrot.slane %v1431, 3
      %v1434 = vor.u32 %v1430, %v1433
      %v1435 = vsel %vm1265, %v1425, %v1434
      %v1437 = vshrl.u32 %v1257, 16
      %v1439 = vrot.slane %v1437, 2
      %v1440 = vshll.u32 %v1257, 16
      %v1442 = vrot.slane %v1440, 3
      %v1443 = vor.u32 %v1439, %v1442
      %v1444 = vsel %vm1265, %v1434, %v1443
      %v1446 = vshrl.u32 %v1258, 16
      %v1448 = vrot.slane %v1446, 2
      %v1449 = vshll.u32 %v1258, 16
      %v1451 = vrot.slane %v1449, 3
      %v1452 = vor.u32 %v1448, %v1451
      %v1453 = vsel %vm1265, %v1443, %v1452
      %v1455 = vshrl.u32 %v1259, 16
      %v1457 = vrot.slane %v1455, 2
      %v1458 = vshll.u32 %v1259, 16
      %v1460 = vrot.slane %v1458, 3
      %v1461 = vor.u32 %v1457, %v1460
      %v1462 = vsel %vm1265, %v1452, %v1461
      %v1464 = vshrl.u32 %v1260, 16
      %v1466 = vrot.slane %v1464, 2
      %v1467 = vshll.u32 %v1260, 16
      %v1469 = vrot.slane %v1467, 3
      %v1470 = vor.u32 %v1466, %v1469
      %v1471 = vsel %vm1265, %v1461, %v1470
      %v1473 = vshrl.u32 %v1261, 16
      %v1475 = vrot.slane %v1473, 2
      %v1476 = vshll.u32 %v1261, 16
      %v1478 = vrot.slane %v1476, 3
      %v1479 = vor.u32 %v1475, %v1478
      %v1480 = vsel %vm1265, %v1470, %v1479
      %v1482 = vshrl.u32 %v1262, 16
      %v1484 = vrot.slane %v1482, 2
      %v1485 = vshll.u32 %v1262, 16
      %v1487 = vrot.slane %v1485, 3
      %v1488 = vor.u32 %v1484, %v1487
      %v1489 = vsel %vm1265, %v1479, %v1488
      %v1491 = vshrl.u32 %v1263, 16
      %v1493 = vrot.slane %v1491, 2
      %v1494 = vshll.u32 %v1263, 16
      %v1496 = vrot.slane %v1494, 3
      %v1497 = vor.u32 %v1493, %v1496
      %v1498 = vsel %vm1265, %v1488, %v1497
      %v1500 = vshrl.u32 %v1264, 16
      %v1502 = vrot.slane %v1500, 2
      %v1503 = vshll.u32 %v1264, 16
      %v1505 = vrot.slane %v1503, 3
      %v1506 = vor.u32 %v1502, %v1505
      %v1507 = vsel %vm1265, %v1497, %v1506
      %v1516 = vunpack.c.l.b16 %v1122
      %v1517 = vunpack.c.l.b16 %v1123
      %v1518 = vunpack.c.l.b16 %v1124
      %v1519 = vunpack.c.l.b16 %v1125
      %v1520 = vunpack.c.l.b16 %v1126
      %v1521 = vunpack.c.l.b16 %v1127
      %v1522 = vunpack.c.l.b16 %v1128
      %v1523 = vunpack.c.l.b16 %v1129
      %v1524 = vpack.c.b16 %v1517, %v1516
      %v1525 = vpack.c.b16 %v1519, %v1518
      %v1526 = vpack.c.b16 %v1521, %v1520
      %v1527 = vpack.c.b16 %v1523, %v1522
      %v1533 = vsel %vm617, %v1282, 0
      %v1536 = vsel %vm617, %v1291, 0
      %v1539 = vsel %vm617, %v1300, 0
      %v1542 = vsel %vm617, %v1309, 0
      %v1545 = vsel %vm617, %v1318, 0
      %v1548 = vsel %vm617, %v1327, 0
      %v1551 = vsel %vm617, %v1336, 0
      %v1554 = vsel %vm617, %v1345, 0
      %v1557 = vsel %vm617, %v1354, 0
      %v1560 = vsel %vm617, %v1363, 0
      %v1563 = vsel %vm617, %v1372, 0
      %v1566 = vsel %vm617, %v1381, 0
      %v1569 = vsel %vm617, %v1390, 0
      %v1572 = vsel %vm617, %v1399, 0
      %v1575 = vsel %vm617, %v1408, 0
      %v1578 = vsel %vm617, %v1417, 0
      %v1581 = vsel %vm617, %v1426, 0
      %v1584 = vsel %vm617, %v1435, 0
      %v1587 = vsel %vm617, %v1444, 0
      %v1590 = vsel %vm617, %v1453, 0
      %v1593 = vsel %vm617, %v1462, 0
      %v1596 = vsel %vm617, %v1471, 0
      %v1599 = vsel %vm617, %v1480, 0
      %v1602 = vsel %vm617, %v1489, 0
      %v1605 = vsel %vm617, %v1498, 0
      %v1608 = vsel %vm617, %v1507, 0
      %v1611 = vsel %vm617, %v1506, 0
      %1613 = vmatpush.bf16.msra.mxu0 0
      %1614 = vmatpush.bf16.msra.mxu0 0
      %1615 = vmatpush.bf16.msra.mxu0 0
      %1616 = vmatpush.bf16.msra.mxu0 0
      %1617 = vmatpush.bf16.msra.mxu0 %v1527
      %1618 = vmatpush.bf16.msra.mxu0 %v1526
      %1619 = vmatpush.bf16.msra.mxu0 %v1525
      %1620 = vmatpush.bf16.msra.mxu0 %v1524
      %1621 = vmatmul.bf16.gmra.mxu0 %v1533
      %v1622 = vpop.f32.mrf.mxu0
      %v1623 = vadd.f32 0.0, %v1622
      %v1624 = vpop.f32.mrf.mxu0
      %v1625 = vadd.f32 0.0, %v1624
      %1626 = vmatmul.bf16.gmra.mxu0 %v1536
      %v1627 = vpop.f32.mrf.mxu0
      %v1628 = vadd.f32 0.0, %v1627
      %v1629 = vpop.f32.mrf.mxu0
      %v1630 = vadd.f32 0.0, %v1629
      %1631 = vmatmul.bf16.gmra.mxu0 %v1539
      %v1632 = vpop.f32.mrf.mxu0
      %v1633 = vadd.f32 0.0, %v1632
      %v1634 = vpop.f32.mrf.mxu0
      %v1635 = vadd.f32 0.0, %v1634
      %1636 = vmatmul.bf16.gmra.mxu0 %v1542
      %v1637 = vpop.f32.mrf.mxu0
      %v1638 = vadd.f32 0.0, %v1637
      %v1639 = vpop.f32.mrf.mxu0
      %v1640 = vadd.f32 0.0, %v1639
      %1641 = vmatmul.bf16.gmra.mxu0 %v1545
      %v1642 = vpop.f32.mrf.mxu0
      %v1643 = vadd.f32 0.0, %v1642
      %v1644 = vpop.f32.mrf.mxu0
      %v1645 = vadd.f32 0.0, %v1644
      %1646 = vmatmul.bf16.gmra.mxu0 %v1548
      %v1647 = vpop.f32.mrf.mxu0
      %v1648 = vadd.f32 0.0, %v1647
      %v1649 = vpop.f32.mrf.mxu0
      %v1650 = vadd.f32 0.0, %v1649
      %1651 = vmatmul.bf16.gmra.mxu0 %v1551
      %v1652 = vpop.f32.mrf.mxu0
      %v1653 = vadd.f32 0.0, %v1652
      %v1654 = vpop.f32.mrf.mxu0
      %v1655 = vadd.f32 0.0, %v1654
      %1656 = vmatmul.bf16.gmra.mxu0 %v1554
      %v1657 = vpop.f32.mrf.mxu0
      %v1658 = vadd.f32 0.0, %v1657
      %v1659 = vpop.f32.mrf.mxu0
      %v1660 = vadd.f32 0.0, %v1659
      %1661 = vmatmul.bf16.gmra.mxu0 %v1557
      %v1662 = vpop.f32.mrf.mxu0
      %v1663 = vadd.f32 0.0, %v1662
      %v1664 = vpop.f32.mrf.mxu0
      %v1665 = vadd.f32 0.0, %v1664
      %1666 = vmatmul.bf16.gmra.mxu0 %v1560
      %v1667 = vpop.f32.mrf.mxu0
      %v1668 = vadd.f32 0.0, %v1667
      %v1669 = vpop.f32.mrf.mxu0
      %v1670 = vadd.f32 0.0, %v1669
      %1671 = vmatmul.bf16.gmra.mxu0 %v1563
      %v1672 = vpop.f32.mrf.mxu0
      %v1673 = vadd.f32 0.0, %v1672
      %v1674 = vpop.f32.mrf.mxu0
      %v1675 = vadd.f32 0.0, %v1674
      %1676 = vmatmul.bf16.gmra.mxu0 %v1566
      %v1677 = vpop.f32.mrf.mxu0
      %v1678 = vadd.f32 0.0, %v1677
      %v1679 = vpop.f32.mrf.mxu0
      %v1680 = vadd.f32 0.0, %v1679
      %1681 = vmatmul.bf16.gmra.mxu0 %v1569
      %v1682 = vpop.f32.mrf.mxu0
      %v1683 = vadd.f32 0.0, %v1682
      %v1684 = vpop.f32.mrf.mxu0
      %v1685 = vadd.f32 0.0, %v1684
      %1686 = vmatmul.bf16.gmra.mxu0 %v1572
      %v1687 = vpop.f32.mrf.mxu0
      %v1688 = vadd.f32 0.0, %v1687
      %v1689 = vpop.f32.mrf.mxu0
      %v1690 = vadd.f32 0.0, %v1689
      %1691 = vmatmul.bf16.gmra.mxu0 %v1575
      %v1692 = vpop.f32.mrf.mxu0
      %v1693 = vadd.f32 0.0, %v1692
      %v1694 = vpop.f32.mrf.mxu0
      %v1695 = vadd.f32 0.0, %v1694
      %1696 = vmatmul.bf16.gmra.mxu0 %v1578
      %v1697 = vpop.f32.mrf.mxu0
      %v1698 = vadd.f32 0.0, %v1697
      %v1699 = vpop.f32.mrf.mxu0
      %v1700 = vadd.f32 0.0, %v1699
      %1701 = vmatmul.bf16.gmra.mxu0 %v1581
      %v1702 = vpop.f32.mrf.mxu0
      %v1703 = vadd.f32 0.0, %v1702
      %v1704 = vpop.f32.mrf.mxu0
      %v1705 = vadd.f32 0.0, %v1704
      %1706 = vmatmul.bf16.gmra.mxu0 %v1584
      %v1707 = vpop.f32.mrf.mxu0
      %v1708 = vadd.f32 0.0, %v1707
      %v1709 = vpop.f32.mrf.mxu0
      %v1710 = vadd.f32 0.0, %v1709
      %1711 = vmatmul.bf16.gmra.mxu0 %v1587
      %v1712 = vpop.f32.mrf.mxu0
      %v1713 = vadd.f32 0.0, %v1712
      %v1714 = vpop.f32.mrf.mxu0
      %v1715 = vadd.f32 0.0, %v1714
      %1716 = vmatmul.bf16.gmra.mxu0 %v1590
      %v1717 = vpop.f32.mrf.mxu0
      %v1718 = vadd.f32 0.0, %v1717
      %v1719 = vpop.f32.mrf.mxu0
      %v1720 = vadd.f32 0.0, %v1719
      %1721 = vmatmul.bf16.gmra.mxu0 %v1593
      %v1722 = vpop.f32.mrf.mxu0
      %v1723 = vadd.f32 0.0, %v1722
      %v1724 = vpop.f32.mrf.mxu0
      %v1725 = vadd.f32 0.0, %v1724
      %1726 = vmatmul.bf16.gmra.mxu0 %v1596
      %v1727 = vpop.f32.mrf.mxu0
      %v1728 = vadd.f32 0.0, %v1727
      %v1729 = vpop.f32.mrf.mxu0
      %v1730 = vadd.f32 0.0, %v1729
      %1731 = vmatmul.bf16.gmra.mxu0 %v1599
      %v1732 = vpop.f32.mrf.mxu0
      %v1733 = vadd.f32 0.0, %v1732
      %v1734 = vpop.f32.mrf.mxu0
      %v1735 = vadd.f32 0.0, %v1734
      %1736 = vmatmul.bf16.gmra.mxu0 %v1602
      %v1737 = vpop.f32.mrf.mxu0
      %v1738 = vadd.f32 0.0, %v1737
      %v1739 = vpop.f32.mrf.mxu0
      %v1740 = vadd.f32 0.0, %v1739
      %1741 = vmatmul.bf16.gmra.mxu0 %v1605
      %v1742 = vpop.f32.mrf.mxu0
      %v1743 = vadd.f32 0.0, %v1742
      %v1744 = vpop.f32.mrf.mxu0
      %v1745 = vadd.f32 0.0, %v1744
      %1746 = vmatmul.bf16.gmra.mxu0 %v1608
      %v1747 = vpop.f32.mrf.mxu0
      %v1748 = vadd.f32 0.0, %v1747
      %v1749 = vpop.f32.mrf.mxu0
      %v1750 = vadd.f32 0.0, %v1749
      %1751 = vmatmul.bf16.gmra.mxu0 %v1611
      %v1752 = vpop.f32.mrf.mxu0
      %v1753 = vadd.f32 0.0, %v1752
      %v1754 = vpop.f32.mrf.mxu0
      %1755 = vdwg.mxu0
      %v1756 = vadd.f32 %v934, %v1623
      %v1757 = vadd.f32 %v936, %v1625
      %v1758 = vadd.f32 %v939, %v1628
      %v1759 = vadd.f32 %v941, %v1630
      %v1760 = vadd.f32 %v944, %v1633
      %v1761 = vadd.f32 %v946, %v1635
      %v1762 = vadd.f32 %v949, %v1638
      %v1763 = vadd.f32 %v951, %v1640
      %v1764 = vadd.f32 %v954, %v1643
      %v1765 = vadd.f32 %v956, %v1645
      %v1766 = vadd.f32 %v959, %v1648
      %v1767 = vadd.f32 %v961, %v1650
      %v1768 = vadd.f32 %v964, %v1653
      %v1769 = vadd.f32 %v966, %v1655
      %v1770 = vadd.f32 %v969, %v1658
      %v1771 = vadd.f32 %v971, %v1660
      %v1772 = vadd.f32 %v974, %v1663
      %v1773 = vadd.f32 %v976, %v1665
      %v1774 = vadd.f32 %v979, %v1668
      %v1775 = vadd.f32 %v981, %v1670
      %v1776 = vadd.f32 %v984, %v1673
      %v1777 = vadd.f32 %v986, %v1675
      %v1778 = vadd.f32 %v989, %v1678
      %v1779 = vadd.f32 %v991, %v1680
      %v1780 = vadd.f32 %v994, %v1683
      %v1781 = vadd.f32 %v996, %v1685
      %v1782 = vadd.f32 %v999, %v1688
      %v1783 = vadd.f32 %v1001, %v1690
      %v1784 = vadd.f32 %v1004, %v1693
      %v1785 = vadd.f32 %v1006, %v1695
      %v1786 = vadd.f32 %v1009, %v1698
      %v1787 = vadd.f32 %v1011, %v1700
      %v1788 = vadd.f32 %v1014, %v1703
      %v1789 = vadd.f32 %v1016, %v1705
      %v1790 = vadd.f32 %v1019, %v1708
      %v1791 = vadd.f32 %v1021, %v1710
      %v1792 = vadd.f32 %v1024, %v1713
      %v1793 = vadd.f32 %v1026, %v1715
      %v1794 = vadd.f32 %v1029, %v1718
      %v1795 = vadd.f32 %v1031, %v1720
      %v1796 = vadd.f32 %v1034, %v1723
      %v1797 = vadd.f32 %v1036, %v1725
      %v1798 = vadd.f32 %v1039, %v1728
      %v1799 = vadd.f32 %v1041, %v1730
      %v1800 = vadd.f32 %v1044, %v1733
      %v1801 = vadd.f32 %v1046, %v1735
      %v1802 = vadd.f32 %v1049, %v1738
      %v1803 = vadd.f32 %v1051, %v1740
      %v1804 = vadd.f32 %v1054, %v1743
      %v1805 = vadd.f32 %v1056, %v1745
      %v1806 = vadd.f32 %v1059, %v1748
      %v1807 = vadd.f32 %v1061, %v1750
      %v1808 = vadd.f32 %v1064, %v1753
      %v1809 = vld [vmem:[%s165 + $0x8] sm:$0x8]
      %s1810 = scalar_lea.vmem %s1, 96
      %v1811 = vld [vmem:[%s1810] sm:$0xf]
      %v1812 = vld [vmem:[%s1810 + $0x4] sm:$0xf]
      %v1813 = vld [vmem:[%s1810 + $0x8] sm:$0xf]
      %v1814 = vld [vmem:[%s1810 + $0xc] sm:$0xf]
      %v1815 = vld [vmem:[%s1810 + $0x10] sm:$0xf]
      %v1816 = vld [vmem:[%s1810 + $0x14] sm:$0xf]
      %v1817 = vld [vmem:[%s1810 + $0x18] sm:$0xf]
      %v1818 = vld [vmem:[%s1810 + $0x1c] sm:$0xf]
      %v1820 = vunpack.c.l.b16 %v1809
      %v1821 = vpack.c.b16 %v1185, %v1820
      %vm1822 = vcmask 1044480
      %v1823 = vrot.slane %v1821, 3
      %v1824 = vrot.slane %v1239, 3
      %v1825 = vsel %vm1822, %v1823, %v1824
      %v1826 = vrot.slane %v1240, 3
      %v1827 = vsel %vm1822, %v1824, %v1826
      %v1828 = vrot.slane %v1241, 3
      %v1829 = vsel %vm1822, %v1826, %v1828
      %v1830 = vrot.slane %v1242, 3
      %v1831 = vsel %vm1822, %v1828, %v1830
      %v1832 = vrot.slane %v1243, 3
      %v1833 = vsel %vm1822, %v1830, %v1832
      %v1834 = vrot.slane %v1244, 3
      %v1835 = vsel %vm1822, %v1832, %v1834
      %v1836 = vrot.slane %v1245, 3
      %v1837 = vsel %vm1822, %v1834, %v1836
      %v1838 = vrot.slane %v1246, 3
      %v1839 = vsel %vm1822, %v1836, %v1838
      %v1840 = vrot.slane %v1247, 3
      %v1841 = vsel %vm1822, %v1838, %v1840
      %v1842 = vrot.slane %v1248, 3
      %v1843 = vsel %vm1822, %v1840, %v1842
      %v1844 = vrot.slane %v1249, 3
      %v1845 = vsel %vm1822, %v1842, %v1844
      %v1846 = vrot.slane %v1250, 3
      %v1847 = vsel %vm1822, %v1844, %v1846
      %v1848 = vrot.slane %v1251, 3
      %v1849 = vsel %vm1822, %v1846, %v1848
      %v1850 = vrot.slane %v1252, 3
      %v1851 = vsel %vm1822, %v1848, %v1850
      %v1852 = vrot.slane %v1253, 3
      %v1853 = vsel %vm1822, %v1850, %v1852
      %v1854 = vrot.slane %v1254, 3
      %v1855 = vsel %vm1822, %v1852, %v1854
      %v1856 = vrot.slane %v1255, 3
      %v1857 = vsel %vm1822, %v1854, %v1856
      %v1858 = vrot.slane %v1256, 3
      %v1859 = vsel %vm1822, %v1856, %v1858
      %v1860 = vrot.slane %v1257, 3
      %v1861 = vsel %vm1822, %v1858, %v1860
      %v1862 = vrot.slane %v1258, 3
      %v1863 = vsel %vm1822, %v1860, %v1862
      %v1864 = vrot.slane %v1259, 3
      %v1865 = vsel %vm1822, %v1862, %v1864
      %v1866 = vrot.slane %v1260, 3
      %v1867 = vsel %vm1822, %v1864, %v1866
      %v1868 = vrot.slane %v1261, 3
      %v1869 = vsel %vm1822, %v1866, %v1868
      %v1870 = vrot.slane %v1262, 3
      %v1871 = vsel %vm1822, %v1868, %v1870
      %v1872 = vrot.slane %v1263, 3
      %v1873 = vsel %vm1822, %v1870, %v1872
      %v1874 = vrot.slane %v1264, 3
      %v1875 = vsel %vm1822, %v1872, %v1874
      %v1884 = vunpack.c.l.b16 %v1811
      %v1885 = vunpack.c.l.b16 %v1812
      %v1886 = vunpack.c.l.b16 %v1813
      %v1887 = vunpack.c.l.b16 %v1814
      %v1888 = vunpack.c.l.b16 %v1815
      %v1889 = vunpack.c.l.b16 %v1816
      %v1890 = vunpack.c.l.b16 %v1817
      %v1891 = vunpack.c.l.b16 %v1818
      %v1892 = vpack.c.b16 %v1885, %v1884
      %v1893 = vpack.c.b16 %v1887, %v1886
      %v1894 = vpack.c.b16 %v1889, %v1888
      %v1895 = vpack.c.b16 %v1891, %v1890
      %v1901 = vsel %vm617, %v1825, 0
      %v1904 = vsel %vm617, %v1827, 0
      %v1907 = vsel %vm617, %v1829, 0
      %v1910 = vsel %vm617, %v1831, 0
      %v1913 = vsel %vm617, %v1833, 0
      %v1916 = vsel %vm617, %v1835, 0
      %v1919 = vsel %vm617, %v1837, 0
      %v1922 = vsel %vm617, %v1839, 0
      %v1925 = vsel %vm617, %v1841, 0
      %v1928 = vsel %vm617, %v1843, 0
      %v1931 = vsel %vm617, %v1845, 0
      %v1934 = vsel %vm617, %v1847, 0
      %v1937 = vsel %vm617, %v1849, 0
      %v1940 = vsel %vm617, %v1851, 0
      %v1943 = vsel %vm617, %v1853, 0
      %v1946 = vsel %vm617, %v1855, 0
      %v1949 = vsel %vm617, %v1857, 0
      %v1952 = vsel %vm617, %v1859, 0
      %v1955 = vsel %vm617, %v1861, 0
      %v1958 = vsel %vm617, %v1863, 0
      %v1961 = vsel %vm617, %v1865, 0
      %v1964 = vsel %vm617, %v1867, 0
      %v1967 = vsel %vm617, %v1869, 0
      %v1970 = vsel %vm617, %v1871, 0
      %v1973 = vsel %vm617, %v1873, 0
      %v1976 = vsel %vm617, %v1875, 0
      %v1979 = vsel %vm617, %v1874, 0
      %1981 = vmatpush.bf16.msra.mxu0 0
      %1982 = vmatpush.bf16.msra.mxu0 0
      %1983 = vmatpush.bf16.msra.mxu0 0
      %1984 = vmatpush.bf16.msra.mxu0 0
      %1985 = vmatpush.bf16.msra.mxu0 %v1895
      %1986 = vmatpush.bf16.msra.mxu0 %v1894
      %1987 = vmatpush.bf16.msra.mxu0 %v1893
      %1988 = vmatpush.bf16.msra.mxu0 %v1892
      %1989 = vmatmul.bf16.gmra.mxu0 %v1901
      %v1990 = vpop.f32.mrf.mxu0
      %v1991 = vadd.f32 0.0, %v1990
      %v1992 = vpop.f32.mrf.mxu0
      %v1993 = vadd.f32 0.0, %v1992
      %1994 = vmatmul.bf16.gmra.mxu0 %v1904
      %v1995 = vpop.f32.mrf.mxu0
      %v1996 = vadd.f32 0.0, %v1995
      %v1997 = vpop.f32.mrf.mxu0
      %v1998 = vadd.f32 0.0, %v1997
      %1999 = vmatmul.bf16.gmra.mxu0 %v1907
      %v2000 = vpop.f32.mrf.mxu0
      %v2001 = vadd.f32 0.0, %v2000
      %v2002 = vpop.f32.mrf.mxu0
      %v2003 = vadd.f32 0.0, %v2002
      %2004 = vmatmul.bf16.gmra.mxu0 %v1910
      %v2005 = vpop.f32.mrf.mxu0
      %v2006 = vadd.f32 0.0, %v2005
      %v2007 = vpop.f32.mrf.mxu0
      %v2008 = vadd.f32 0.0, %v2007
      %2009 = vmatmul.bf16.gmra.mxu0 %v1913
      %v2010 = vpop.f32.mrf.mxu0
      %v2011 = vadd.f32 0.0, %v2010
      %v2012 = vpop.f32.mrf.mxu0
      %v2013 = vadd.f32 0.0, %v2012
      %2014 = vmatmul.bf16.gmra.mxu0 %v1916
      %v2015 = vpop.f32.mrf.mxu0
      %v2016 = vadd.f32 0.0, %v2015
      %v2017 = vpop.f32.mrf.mxu0
      %v2018 = vadd.f32 0.0, %v2017
      %2019 = vmatmul.bf16.gmra.mxu0 %v1919
      %v2020 = vpop.f32.mrf.mxu0
      %v2021 = vadd.f32 0.0, %v2020
      %v2022 = vpop.f32.mrf.mxu0
      %v2023 = vadd.f32 0.0, %v2022
      %2024 = vmatmul.bf16.gmra.mxu0 %v1922
      %v2025 = vpop.f32.mrf.mxu0
      %v2026 = vadd.f32 0.0, %v2025
      %v2027 = vpop.f32.mrf.mxu0
      %v2028 = vadd.f32 0.0, %v2027
      %2029 = vmatmul.bf16.gmra.mxu0 %v1925
      %v2030 = vpop.f32.mrf.mxu0
      %v2031 = vadd.f32 0.0, %v2030
      %v2032 = vpop.f32.mrf.mxu0
      %v2033 = vadd.f32 0.0, %v2032
      %2034 = vmatmul.bf16.gmra.mxu0 %v1928
      %v2035 = vpop.f32.mrf.mxu0
      %v2036 = vadd.f32 0.0, %v2035
      %v2037 = vpop.f32.mrf.mxu0
      %v2038 = vadd.f32 0.0, %v2037
      %2039 = vmatmul.bf16.gmra.mxu0 %v1931
      %v2040 = vpop.f32.mrf.mxu0
      %v2041 = vadd.f32 0.0, %v2040
      %v2042 = vpop.f32.mrf.mxu0
      %v2043 = vadd.f32 0.0, %v2042
      %2044 = vmatmul.bf16.gmra.mxu0 %v1934
      %v2045 = vpop.f32.mrf.mxu0
      %v2046 = vadd.f32 0.0, %v2045
      %v2047 = vpop.f32.mrf.mxu0
      %v2048 = vadd.f32 0.0, %v2047
      %2049 = vmatmul.bf16.gmra.mxu0 %v1937
      %v2050 = vpop.f32.mrf.mxu0
      %v2051 = vadd.f32 0.0, %v2050
      %v2052 = vpop.f32.mrf.mxu0
      %v2053 = vadd.f32 0.0, %v2052
      %2054 = vmatmul.bf16.gmra.mxu0 %v1940
      %v2055 = vpop.f32.mrf.mxu0
      %v2056 = vadd.f32 0.0, %v2055
      %v2057 = vpop.f32.mrf.mxu0
      %v2058 = vadd.f32 0.0, %v2057
      %2059 = vmatmul.bf16.gmra.mxu0 %v1943
      %v2060 = vpop.f32.mrf.mxu0
      %v2061 = vadd.f32 0.0, %v2060
      %v2062 = vpop.f32.mrf.mxu0
      %v2063 = vadd.f32 0.0, %v2062
      %2064 = vmatmul.bf16.gmra.mxu0 %v1946
      %v2065 = vpop.f32.mrf.mxu0
      %v2066 = vadd.f32 0.0, %v2065
      %v2067 = vpop.f32.mrf.mxu0
      %v2068 = vadd.f32 0.0, %v2067
      %2069 = vmatmul.bf16.gmra.mxu0 %v1949
      %v2070 = vpop.f32.mrf.mxu0
      %v2071 = vadd.f32 0.0, %v2070
      %v2072 = vpop.f32.mrf.mxu0
      %v2073 = vadd.f32 0.0, %v2072
      %2074 = vmatmul.bf16.gmra.mxu0 %v1952
      %v2075 = vpop.f32.mrf.mxu0
      %v2076 = vadd.f32 0.0, %v2075
      %v2077 = vpop.f32.mrf.mxu0
      %v2078 = vadd.f32 0.0, %v2077
      %2079 = vmatmul.bf16.gmra.mxu0 %v1955
      %v2080 = vpop.f32.mrf.mxu0
      %v2081 = vadd.f32 0.0, %v2080
      %v2082 = vpop.f32.mrf.mxu0
      %v2083 = vadd.f32 0.0, %v2082
      %2084 = vmatmul.bf16.gmra.mxu0 %v1958
      %v2085 = vpop.f32.mrf.mxu0
      %v2086 = vadd.f32 0.0, %v2085
      %v2087 = vpop.f32.mrf.mxu0
      %v2088 = vadd.f32 0.0, %v2087
      %2089 = vmatmul.bf16.gmra.mxu0 %v1961
      %v2090 = vpop.f32.mrf.mxu0
      %v2091 = vadd.f32 0.0, %v2090
      %v2092 = vpop.f32.mrf.mxu0
      %v2093 = vadd.f32 0.0, %v2092
      %2094 = vmatmul.bf16.gmra.mxu0 %v1964
      %v2095 = vpop.f32.mrf.mxu0
      %v2096 = vadd.f32 0.0, %v2095
      %v2097 = vpop.f32.mrf.mxu0
      %v2098 = vadd.f32 0.0, %v2097
      %2099 = vmatmul.bf16.gmra.mxu0 %v1967
      %v2100 = vpop.f32.mrf.mxu0
      %v2101 = vadd.f32 0.0, %v2100
      %v2102 = vpop.f32.mrf.mxu0
      %v2103 = vadd.f32 0.0, %v2102
      %2104 = vmatmul.bf16.gmra.mxu0 %v1970
      %v2105 = vpop.f32.mrf.mxu0
      %v2106 = vadd.f32 0.0, %v2105
      %v2107 = vpop.f32.mrf.mxu0
      %v2108 = vadd.f32 0.0, %v2107
      %2109 = vmatmul.bf16.gmra.mxu0 %v1973
      %v2110 = vpop.f32.mrf.mxu0
      %v2111 = vadd.f32 0.0, %v2110
      %v2112 = vpop.f32.mrf.mxu0
      %v2113 = vadd.f32 0.0, %v2112
      %2114 = vmatmul.bf16.gmra.mxu0 %v1976
      %v2115 = vpop.f32.mrf.mxu0
      %v2116 = vadd.f32 0.0, %v2115
      %v2117 = vpop.f32.mrf.mxu0
      %v2118 = vadd.f32 0.0, %v2117
      %2119 = vmatmul.bf16.gmra.mxu0 %v1979
      %v2120 = vpop.f32.mrf.mxu0
      %v2121 = vadd.f32 0.0, %v2120
      %v2122 = vpop.f32.mrf.mxu0
      %2123 = vdwg.mxu0
      %v2124 = vadd.f32 %v1756, %v1991
      %v2125 = vadd.f32 %v1757, %v1993
      %v2126 = vadd.f32 %v1758, %v1996
      %v2127 = vadd.f32 %v1759, %v1998
      %v2128 = vadd.f32 %v1760, %v2001
      %v2129 = vadd.f32 %v1761, %v2003
      %v2130 = vadd.f32 %v1762, %v2006
      %v2131 = vadd.f32 %v1763, %v2008
      %v2132 = vadd.f32 %v1764, %v2011
      %v2133 = vadd.f32 %v1765, %v2013
      %v2134 = vadd.f32 %v1766, %v2016
      %v2135 = vadd.f32 %v1767, %v2018
      %v2136 = vadd.f32 %v1768, %v2021
      %v2137 = vadd.f32 %v1769, %v2023
      %v2138 = vadd.f32 %v1770, %v2026
      %v2139 = vadd.f32 %v1771, %v2028
      %v2140 = vadd.f32 %v1772, %v2031
      %v2141 = vadd.f32 %v1773, %v2033
      %v2142 = vadd.f32 %v1774, %v2036
      %v2143 = vadd.f32 %v1775, %v2038
      %v2144 = vadd.f32 %v1776, %v2041
      %v2145 = vadd.f32 %v1777, %v2043
      %v2146 = vadd.f32 %v1778, %v2046
      %v2147 = vadd.f32 %v1779, %v2048
      %v2148 = vadd.f32 %v1780, %v2051
      %v2149 = vadd.f32 %v1781, %v2053
      %v2150 = vadd.f32 %v1782, %v2056
      %v2151 = vadd.f32 %v1783, %v2058
      %v2152 = vadd.f32 %v1784, %v2061
      %v2153 = vadd.f32 %v1785, %v2063
      %v2154 = vadd.f32 %v1786, %v2066
      %v2155 = vadd.f32 %v1787, %v2068
      %v2156 = vadd.f32 %v1788, %v2071
      %v2157 = vadd.f32 %v1789, %v2073
      %v2158 = vadd.f32 %v1790, %v2076
      %v2159 = vadd.f32 %v1791, %v2078
      %v2160 = vadd.f32 %v1792, %v2081
      %v2161 = vadd.f32 %v1793, %v2083
      %v2162 = vadd.f32 %v1794, %v2086
      %v2163 = vadd.f32 %v1795, %v2088
      %v2164 = vadd.f32 %v1796, %v2091
      %v2165 = vadd.f32 %v1797, %v2093
      %v2166 = vadd.f32 %v1798, %v2096
      %v2167 = vadd.f32 %v1799, %v2098
      %v2168 = vadd.f32 %v1800, %v2101
      %v2169 = vadd.f32 %v1801, %v2103
      %v2170 = vadd.f32 %v1802, %v2106
      %v2171 = vadd.f32 %v1803, %v2108
      %v2172 = vadd.f32 %v1804, %v2111
      %v2173 = vadd.f32 %v1805, %v2113
      %v2174 = vadd.f32 %v1806, %v2116
      %v2175 = vadd.f32 %v1807, %v2118
      %v2176 = vadd.f32 %v1808, %v2121
      %v2178 = vperm.slane %v172, 0
      %v2180 = vadd.f32 %v2124, %v2178
      %v2181 = vadd.f32 %v2125, %v2178
      %v2182 = vadd.f32 %v2126, %v2178
      %v2183 = vadd.f32 %v2127, %v2178
      %v2184 = vadd.f32 %v2128, %v2178
      %v2185 = vadd.f32 %v2129, %v2178
      %v2186 = vadd.f32 %v2130, %v2178
      %v2187 = vadd.f32 %v2131, %v2178
      %v2188 = vadd.f32 %v2132, %v2178
      %v2189 = vadd.f32 %v2133, %v2178
      %v2190 = vadd.f32 %v2134, %v2178
      %v2191 = vadd.f32 %v2135, %v2178
      %v2192 = vadd.f32 %v2136, %v2178
      %v2193 = vadd.f32 %v2137, %v2178
      %v2194 = vadd.f32 %v2138, %v2178
      %v2195 = vadd.f32 %v2139, %v2178
      %v2196 = vadd.f32 %v2140, %v2178
      %v2197 = vadd.f32 %v2141, %v2178
      %v2198 = vadd.f32 %v2142, %v2178
      %v2199 = vadd.f32 %v2143, %v2178
      %v2200 = vadd.f32 %v2144, %v2178
      %v2201 = vadd.f32 %v2145, %v2178
      %v2202 = vadd.f32 %v2146, %v2178
      %v2203 = vadd.f32 %v2147, %v2178
      %v2204 = vadd.f32 %v2148, %v2178
      %v2205 = vadd.f32 %v2149, %v2178
      %v2206 = vadd.f32 %v2150, %v2178
      %v2207 = vadd.f32 %v2151, %v2178
      %v2208 = vadd.f32 %v2152, %v2178
      %v2209 = vadd.f32 %v2153, %v2178
      %v2210 = vadd.f32 %v2154, %v2178
      %v2211 = vadd.f32 %v2155, %v2178
      %v2212 = vadd.f32 %v2156, %v2178
      %v2213 = vadd.f32 %v2157, %v2178
      %v2214 = vadd.f32 %v2158, %v2178
      %v2215 = vadd.f32 %v2159, %v2178
      %v2216 = vadd.f32 %v2160, %v2178
      %v2217 = vadd.f32 %v2161, %v2178
      %v2218 = vadd.f32 %v2162, %v2178
      %v2219 = vadd.f32 %v2163, %v2178
      %v2220 = vadd.f32 %v2164, %v2178
      %v2221 = vadd.f32 %v2165, %v2178
      %v2222 = vadd.f32 %v2166, %v2178
      %v2223 = vadd.f32 %v2167, %v2178
      %v2224 = vadd.f32 %v2168, %v2178
      %v2225 = vadd.f32 %v2169, %v2178
      %v2226 = vadd.f32 %v2170, %v2178
      %v2227 = vadd.f32 %v2171, %v2178
      %v2228 = vadd.f32 %v2172, %v2178
      %v2229 = vadd.f32 %v2173, %v2178
      %v2230 = vadd.f32 %v2174, %v2178
      %v2231 = vadd.f32 %v2175, %v2178
      %v2232 = vadd.f32 %v2176, %v2178
      %v2233 = vmax.f32 %v2180, 0.0
      %v2234 = vmax.f32 %v2181, 0.0
      %v2235 = vmax.f32 %v2182, 0.0
      %v2236 = vmax.f32 %v2183, 0.0
      %v2237 = vmax.f32 %v2184, 0.0
      %v2238 = vmax.f32 %v2185, 0.0
      %v2239 = vmax.f32 %v2186, 0.0
      %v2240 = vmax.f32 %v2187, 0.0
      %v2241 = vmax.f32 %v2188, 0.0
      %v2242 = vmax.f32 %v2189, 0.0
      %v2243 = vmax.f32 %v2190, 0.0
      %v2244 = vmax.f32 %v2191, 0.0
      %v2245 = vmax.f32 %v2192, 0.0
      %v2246 = vmax.f32 %v2193, 0.0
      %v2247 = vmax.f32 %v2194, 0.0
      %v2248 = vmax.f32 %v2195, 0.0
      %v2249 = vmax.f32 %v2196, 0.0
      %v2250 = vmax.f32 %v2197, 0.0
      %v2251 = vmax.f32 %v2198, 0.0
      %v2252 = vmax.f32 %v2199, 0.0
      %v2253 = vmax.f32 %v2200, 0.0
      %v2254 = vmax.f32 %v2201, 0.0
      %v2255 = vmax.f32 %v2202, 0.0
      %v2256 = vmax.f32 %v2203, 0.0
      %v2257 = vmax.f32 %v2204, 0.0
      %v2258 = vmax.f32 %v2205, 0.0
      %v2259 = vmax.f32 %v2206, 0.0
      %v2260 = vmax.f32 %v2207, 0.0
      %v2261 = vmax.f32 %v2208, 0.0
      %v2262 = vmax.f32 %v2209, 0.0
      %v2263 = vmax.f32 %v2210, 0.0
      %v2264 = vmax.f32 %v2211, 0.0
      %v2265 = vmax.f32 %v2212, 0.0
      %v2266 = vmax.f32 %v2213, 0.0
      %v2267 = vmax.f32 %v2214, 0.0
      %v2268 = vmax.f32 %v2215, 0.0
      %v2269 = vmax.f32 %v2216, 0.0
      %v2270 = vmax.f32 %v2217, 0.0
      %v2271 = vmax.f32 %v2218, 0.0
      %v2272 = vmax.f32 %v2219, 0.0
      %v2273 = vmax.f32 %v2220, 0.0
      %v2274 = vmax.f32 %v2221, 0.0
      %v2275 = vmax.f32 %v2222, 0.0
      %v2276 = vmax.f32 %v2223, 0.0
      %v2277 = vmax.f32 %v2224, 0.0
      %v2278 = vmax.f32 %v2225, 0.0
      %v2279 = vmax.f32 %v2226, 0.0
      %v2280 = vmax.f32 %v2227, 0.0
      %v2281 = vmax.f32 %v2228, 0.0
      %v2282 = vmax.f32 %v2229, 0.0
      %v2283 = vmax.f32 %v2230, 0.0
      %v2284 = vmax.f32 %v2231, 0.0
      %v2285 = vmax.f32 %v2232, 0.0
      %v2286 = vpack.c.bf16 %v2233, %v2233
      %v2287 = vpack.c.bf16 %v2234, %v2234
      %v2288 = vpack.c.bf16 %v2235, %v2235
      %v2289 = vpack.c.bf16 %v2236, %v2236
      %v2290 = vpack.c.bf16 %v2237, %v2237
      %v2291 = vpack.c.bf16 %v2238, %v2238
      %v2292 = vpack.c.bf16 %v2239, %v2239
      %v2293 = vpack.c.bf16 %v2240, %v2240
      %v2294 = vpack.c.bf16 %v2241, %v2241
      %v2295 = vpack.c.bf16 %v2242, %v2242
      %v2296 = vpack.c.bf16 %v2243, %v2243
      %v2297 = vpack.c.bf16 %v2244, %v2244
      %v2298 = vpack.c.bf16 %v2245, %v2245
      %v2299 = vpack.c.bf16 %v2246, %v2246
      %v2300 = vpack.c.bf16 %v2247, %v2247
      %v2301 = vpack.c.bf16 %v2248, %v2248
      %v2302 = vpack.c.bf16 %v2249, %v2249
      %v2303 = vpack.c.bf16 %v2250, %v2250
      %v2304 = vpack.c.bf16 %v2251, %v2251
      %v2305 = vpack.c.bf16 %v2252, %v2252
      %v2306 = vpack.c.bf16 %v2253, %v2253
      %v2307 = vpack.c.bf16 %v2254, %v2254
      %v2308 = vpack.c.bf16 %v2255, %v2255
      %v2309 = vpack.c.bf16 %v2256, %v2256
      %v2310 = vpack.c.bf16 %v2257, %v2257
      %v2311 = vpack.c.bf16 %v2258, %v2258
      %v2312 = vpack.c.bf16 %v2259, %v2259
      %v2313 = vpack.c.bf16 %v2260, %v2260
      %v2314 = vpack.c.bf16 %v2261, %v2261
      %v2315 = vpack.c.bf16 %v2262, %v2262
      %v2316 = vpack.c.bf16 %v2263, %v2263
      %v2317 = vpack.c.bf16 %v2264, %v2264
      %v2318 = vpack.c.bf16 %v2265, %v2265
      %v2319 = vpack.c.bf16 %v2266, %v2266
      %v2320 = vpack.c.bf16 %v2267, %v2267
      %v2321 = vpack.c.bf16 %v2268, %v2268
      %v2322 = vpack.c.bf16 %v2269, %v2269
      %v2323 = vpack.c.bf16 %v2270, %v2270
      %v2324 = vpack.c.bf16 %v2271, %v2271
      %v2325 = vpack.c.bf16 %v2272, %v2272
      %v2326 = vpack.c.bf16 %v2273, %v2273
      %v2327 = vpack.c.bf16 %v2274, %v2274
      %v2328 = vpack.c.bf16 %v2275, %v2275
      %v2329 = vpack.c.bf16 %v2276, %v2276
      %v2330 = vpack.c.bf16 %v2277, %v2277
      %v2331 = vpack.c.bf16 %v2278, %v2278
      %v2332 = vpack.c.bf16 %v2279, %v2279
      %v2333 = vpack.c.bf16 %v2280, %v2280
      %v2334 = vpack.c.bf16 %v2281, %v2281
      %v2335 = vpack.c.bf16 %v2282, %v2282
      %v2336 = vpack.c.bf16 %v2283, %v2283
      %v2337 = vpack.c.bf16 %v2284, %v2284
      %v2338 = vpack.c.bf16 %v2285, %v2285
      %vm2339 = vcmask 257024
      %2340 = vst.msk [vmem:[%s170] sm:$0xf] %vm2339, %v2286
      %2341 = vst.msk [vmem:[%s170 + $0x4] sm:$0xf] %vm2339, %v2287
      %2342 = vst.msk [vmem:[%s170 + $0x8] sm:$0xf] %vm2339, %v2288
      %2343 = vst.msk [vmem:[%s170 + $0xc] sm:$0xf] %vm2339, %v2289
      %2344 = vst.msk [vmem:[%s170 + $0x10] sm:$0xf] %vm2339, %v2290
      %2345 = vst.msk [vmem:[%s170 + $0x14] sm:$0xf] %vm2339, %v2291
      %2346 = vst.msk [vmem:[%s170 + $0x18] sm:$0xf] %vm2339, %v2292
      %2347 = vst.msk [vmem:[%s170 + $0x1c] sm:$0xf] %vm2339, %v2293
      %2348 = vst.msk [vmem:[%s170 + $0x20] sm:$0xf] %vm2339, %v2294
      %2349 = vst.msk [vmem:[%s170 + $0x24] sm:$0xf] %vm2339, %v2295
      %2350 = vst.msk [vmem:[%s170 + $0x28] sm:$0xf] %vm2339, %v2296
      %2351 = vst.msk [vmem:[%s170 + $0x2c] sm:$0xf] %vm2339, %v2297
      %2352 = vst.msk [vmem:[%s170 + $0x30] sm:$0xf] %vm2339, %v2298
      %2353 = vst.msk [vmem:[%s170 + $0x34] sm:$0xf] %vm2339, %v2299
      %2354 = vst.msk [vmem:[%s170 + $0x38] sm:$0xf] %vm2339, %v2300
      %2355 = vst.msk [vmem:[%s170 + $0x3c] sm:$0xf] %vm2339, %v2301
      %2356 = vst.msk [vmem:[%s170 + $0x40] sm:$0xf] %vm2339, %v2302
      %2357 = vst.msk [vmem:[%s170 + $0x44] sm:$0xf] %vm2339, %v2303
      %2358 = vst.msk [vmem:[%s170 + $0x48] sm:$0xf] %vm2339, %v2304
      %2359 = vst.msk [vmem:[%s170 + $0x4c] sm:$0xf] %vm2339, %v2305
      %2360 = vst.msk [vmem:[%s170 + $0x50] sm:$0xf] %vm2339, %v2306
      %2361 = vst.msk [vmem:[%s170 + $0x54] sm:$0xf] %vm2339, %v2307
      %2362 = vst.msk [vmem:[%s170 + $0x58] sm:$0xf] %vm2339, %v2308
      %2363 = vst.msk [vmem:[%s170 + $0x5c] sm:$0xf] %vm2339, %v2309
      %2364 = vst.msk [vmem:[%s170 + $0x60] sm:$0xf] %vm2339, %v2310
      %2365 = vst.msk [vmem:[%s170 + $0x64] sm:$0xf] %vm2339, %v2311
      %2366 = vst.msk [vmem:[%s170 + $0x68] sm:$0xf] %vm2339, %v2312
      %2367 = vst.msk [vmem:[%s170 + $0x6c] sm:$0xf] %vm2339, %v2313
      %2368 = vst.msk [vmem:[%s170 + $0x70] sm:$0xf] %vm2339, %v2314
      %2369 = vst.msk [vmem:[%s170 + $0x74] sm:$0xf] %vm2339, %v2315
      %2370 = vst.msk [vmem:[%s170 + $0x78] sm:$0xf] %vm2339, %v2316
      %2371 = vst.msk [vmem:[%s170 + $0x7c] sm:$0xf] %vm2339, %v2317
      %2372 = vst.msk [vmem:[%s170 + $0x80] sm:$0xf] %vm2339, %v2318
      %2373 = vst.msk [vmem:[%s170 + $0x84] sm:$0xf] %vm2339, %v2319
      %2374 = vst.msk [vmem:[%s170 + $0x88] sm:$0xf] %vm2339, %v2320
      %2375 = vst.msk [vmem:[%s170 + $0x8c] sm:$0xf] %vm2339, %v2321
      %2376 = vst.msk [vmem:[%s170 + $0x90] sm:$0xf] %vm2339, %v2322
      %2377 = vst.msk [vmem:[%s170 + $0x94] sm:$0xf] %vm2339, %v2323
      %2378 = vst.msk [vmem:[%s170 + $0x98] sm:$0xf] %vm2339, %v2324
      %2379 = vst.msk [vmem:[%s170 + $0x9c] sm:$0xf] %vm2339, %v2325
      %2380 = vst.msk [vmem:[%s170 + $0xa0] sm:$0xf] %vm2339, %v2326
      %2381 = vst.msk [vmem:[%s170 + $0xa4] sm:$0xf] %vm2339, %v2327
      %2382 = vst.msk [vmem:[%s170 + $0xa8] sm:$0xf] %vm2339, %v2328
      %2383 = vst.msk [vmem:[%s170 + $0xac] sm:$0xf] %vm2339, %v2329
      %2384 = vst.msk [vmem:[%s170 + $0xb0] sm:$0xf] %vm2339, %v2330
      %2385 = vst.msk [vmem:[%s170 + $0xb4] sm:$0xf] %vm2339, %v2331
      %2386 = vst.msk [vmem:[%s170 + $0xb8] sm:$0xf] %vm2339, %v2332
      %2387 = vst.msk [vmem:[%s170 + $0xbc] sm:$0xf] %vm2339, %v2333
      %2388 = vst.msk [vmem:[%s170 + $0xc0] sm:$0xf] %vm2339, %v2334
      %2389 = vst.msk [vmem:[%s170 + $0xc4] sm:$0xf] %vm2339, %v2335
      %2390 = vst.msk [vmem:[%s170 + $0xc8] sm:$0xf] %vm2339, %v2336
      %2391 = vst.msk [vmem:[%s170 + $0xcc] sm:$0xf] %vm2339, %v2337
      %vm2392 = vcmask 254976
      %2393 = vst.msk [vmem:[%s170 + $0xd0] sm:$0x3] %vm2392, %v2338
      %p2394 = scmp.lt.s32.totalorder %s14, 1
      %s2395 = scalar_select %p2394, %s14, 1
      %s2396 = smul.addr %s2395, 53
      %s2397 = smul.addr %s2396, 4
      %s2398 = scalar_lea.vmem %s3, %s2397
      // Predicated region
      $region33: #{da2qn_forward.4} parent=31 // pred_check
        %p2399 = pneg %p100
      $region34: #{da2qn_forward.4} parent=31 // pred_check_branch
        %2401 = sbr.rel (%p2399) target = $region36
      $region35: #{da2qn_forward.4} parent=31 // pred_region
        _
      $region36: #{da2qn_forward.4} parent=31 // pred_fallthru
        _
    $region32: #{da2qn_forward.4} parent=5 // pred_fallthru
      _
    %p2402 = scmp.le.s32.totalorder 2, %s9
    // Predicated region
    $region37: #{da2qn_forward.4} parent=5 // pred_check
      %p2403 = pneg %p2402
    $region38: #{da2qn_forward.4} parent=5 // pred_check_branch
      %2405 = sbr.rel (%p2403) target = $region40
    $region39: #{da2qn_forward.4} parent=5 // pred_region
      %s2406 = ssub.s32 %s9, 2
      // Predicated region
      $region41: #{da2qn_forward.4} parent=39 // pred_check
        %p2407 = pneg %p106
      $region42: #{da2qn_forward.4} parent=39 // pred_check_branch
        %2409 = sbr.rel (%p2407) target = $region44
      $region43: #{da2qn_forward.4} parent=39 // pred_region
        %p2410 = scmp.lt.s32.totalorder %s15, 1
        %s2411 = scalar_select %p2410, %s15, 1
        %s2412 = smul.addr %s2411, 53
        %s2413 = smul.addr %s2412, 4
        %s2414 = scalar_lea.vmem %s3, %s2413
      $region44: #{da2qn_forward.4} parent=39 // pred_fallthru
        _
    $region40: #{da2qn_forward.4} parent=5 // pred_fallthru
      _
  $region6: #{da2qn_forward.4} parent=0 // loop_footer
    %s13 = sadd.s32 1, %s9
  $region7: #{da2qn_forward.4} parent=0 // loop_footer_branch
    %8 = sbr.rel target = $region3
  $region8: #{da2qn_forward.4} parent=0 // loop_exit
    _

// kernel: da2qn_forward.5
$region0: #{da2qn_forward.5}
  #allocation0 [shape = 'u32[]', space=smem, size = 0x4, offset = 0x4, fixed_abs, tag = 'smem constant byte address 0x4 - core index']
  #allocation1 [shape = 'u32[72,128]{1,0:T(1,128)}', space=vmem, size = 0x9000, scoped, tag = 'internal scratch']
  %s0 = inlined_call_operand.vmem [shape: bf16[2,112,128], index: 0, kind: input, shape index: {}]
  %s1 = inlined_call_operand.vmem [shape: bf16[4,128,64], index: 1, kind: input, shape index: {}]
  %s2 = inlined_call_operand.vmem [shape: f32[1,64], index: 2, kind: input, shape index: {}]
  %s3 = inlined_call_operand.vmem [shape: bf16[2,96,64], index: 3, kind: output, shape index: {}]
  %s4 = sld [smem:[#allocation0]]
  $region45: #{da2qn_forward.5} parent=0
    _
  %s6 = ssub.s32 1, %s4
  %s7 = scalar_select 0, %s6, %s4
  loop: start=0, step=1, limit=4
  $region2: #{da2qn_forward.5} parent=0 // loop_pre_header
    _
  $region3: #{da2qn_forward.5} parent=0 // loop_header
    %s9 = sphi 0, %s13
    %p10 = scmp.ge.s32.totalorder %s9, 4
    %s19 = sphi 0, %s21
    %s22 = sphi 0, %s19
    %s23 = sphi 0, %s22
    %s39 = sphi 0, %s23
    %s43 = sphi 0, %s43
    %s45 = sphi 0, %s43
    %s46 = sphi 0, %s45
    %s60 = sphi 0, %s46
    %s64 = sphi 0, %s64
    %s66 = sphi 0, %s64
    %s67 = sphi 0, %s66
    %s81 = sphi 0, %s67
    %s87 = sphi 0, %s89
    %s90 = sphi 0, %s87
    %s91 = sphi 0, %s90
    %s107 = sphi 0, %s91
  $region4: #{da2qn_forward.5} parent=0 // loop_header_branch
    %12 = sbr.rel (%p10) target = $region8
  $region5: #{da2qn_forward.5} parent=0 // loop_body
    %s14 = ssub.s32 %s9, 1
    %s15 = ssub.s32 %s9, 2
    %s16 = sadd.s32 %s9, 1
    %s17 = ssub.s32 %s9, %s16
    %p18 = scmp.eq.s32.totalorder %s17, 0
    %s20 = sadd.s32 %s19, 1
    %s21 = scalar_select %p18, %s19, %s20
    %p24 = pneg %p18
    %p25 = scmp.eq.s32.totalorder %s9, 1
    %p26 = por %p24, %p25
    %p27 = scmp.ne.s32.totalorder %s19, %s22
    %p28 = scmp.eq.s32.totalorder %s9, 0
    %p29 = por %p27, %p28
    %p30 = scmp.ne.s32.totalorder %s19, %s22
    %p31 = scmp.eq.s32.totalorder %s14, 1
    %p32 = por %p30, %p31
    %p33 = scmp.ne.s32.totalorder %s22, %s23
    %p34 = scmp.eq.s32.totalorder %s14, 0
    %p35 = por %p33, %p34
    %p36 = scmp.ne.s32.totalorder %s22, %s23
    %p37 = scmp.eq.s32.totalorder %s15, 1
    %p38 = por %p36, %p37
    %p40 = scmp.ne.s32.totalorder %s23, %s39
    %p41 = scmp.eq.s32.totalorder %s15, 0
    %p42 = por %p40, %p41
    %s44 = sadd.s32 %s43, 1
    %p47 = scmp.eq.s32.totalorder %s9, 1
    %p48 = scmp.ne.s32.totalorder %s43, %s45
    %p49 = scmp.eq.s32.totalorder %s9, 0
    %p50 = por %p48, %p49
    %p51 = scmp.ne.s32.totalorder %s43, %s45
    %p52 = scmp.eq.s32.totalorder %s14, 1
    %p53 = por %p51, %p52
    %p54 = scmp.ne.s32.totalorder %s45, %s46
    %p55 = scmp.eq.s32.totalorder %s14, 0
    %p56 = por %p54, %p55
    %p57 = scmp.ne.s32.totalorder %s45, %s46
    %p58 = scmp.eq.s32.totalorder %s15, 1
    %p59 = por %p57, %p58
    %p61 = scmp.ne.s32.totalorder %s46, %s60
    %p62 = scmp.eq.s32.totalorder %s15, 0
    %p63 = por %p61, %p62
    %s65 = sadd.s32 %s64, 1
    %p68 = scmp.eq.s32.totalorder %s9, 1
    %p69 = scmp.ne.s32.totalorder %s64, %s66
    %p70 = scmp.eq.s32.totalorder %s9, 0
    %p71 = por %p69, %p70
    %p72 = scmp.ne.s32.totalorder %s64, %s66
    %p73 = scmp.eq.s32.totalorder %s14, 1
    %p74 = por %p72, %p73
    %p75 = scmp.ne.s32.totalorder %s66, %s67
    %p76 = scmp.eq.s32.totalorder %s14, 0
    %p77 = por %p75, %p76
    %p78 = scmp.ne.s32.totalorder %s66, %s67
    %p79 = scmp.eq.s32.totalorder %s15, 1
    %p80 = por %p78, %p79
    %p82 = scmp.ne.s32.totalorder %s67, %s81
    %p83 = scmp.eq.s32.totalorder %s15, 0
    %p84 = por %p82, %p83
    %s85 = ssub.s32 %s9, %s16
    %p86 = scmp.eq.s32.totalorder %s85, 0
    %s88 = sadd.s32 %s87, 1
    %s89 = scalar_select %p86, %s87, %s88
    %p92 = pneg %p86
    %p93 = scmp.eq.s32.totalorder %s9, 1
    %p94 = por %p92, %p93
    %p95 = scmp.ne.s32.totalorder %s87, %s90
    %p96 = scmp.eq.s32.totalorder %s9, 0
    %p97 = por %p95, %p96
    %p98 = scmp.ne.s32.totalorder %s87, %s90
    %p99 = scmp.eq.s32.totalorder %s14, 1
    %p100 = por %p98, %p99
    %p101 = scmp.ne.s32.totalorder %s90, %s91
    %p102 = scmp.eq.s32.totalorder %s14, 0
    %p103 = por %p101, %p102
    %p104 = scmp.ne.s32.totalorder %s90, %s91
    %p105 = scmp.eq.s32.totalorder %s15, 1
    %p106 = por %p104, %p105
    %p108 = scmp.ne.s32.totalorder %s91, %s107
    %p109 = scmp.eq.s32.totalorder %s15, 0
    %p110 = por %p108, %p109
    %p111 = scmp.le.s32.totalorder 1, %s9
    %p112 = scmp.lt.s32.totalorder %s9, 3
    %p113 = pnand %p111, %p112
    %p114 = pneg %p113
    // Predicated region
    $region9: #{da2qn_forward.5} parent=5 // pred_check
      _
    $region10: #{da2qn_forward.5} parent=5 // pred_check_branch
      %116 = sbr.rel (%p113) target = $region12
    $region11: #{da2qn_forward.5} parent=5 // pred_region
      %s117 = ssub.s32 %s9, 1
      // Predicated region
      $region13: #{da2qn_forward.5} parent=11 // pred_check
        %p118 = pneg %p56
      $region14: #{da2qn_forward.5} parent=11 // pred_check_branch
        %120 = sbr.rel (%p118) target = $region16
      $region15: #{da2qn_forward.5} parent=11 // pred_region
        _
      $region16: #{da2qn_forward.5} parent=11 // pred_fallthru
        _
      // Predicated region
      $region17: #{da2qn_forward.5} parent=11 // pred_check
        %p121 = pneg %p77
      $region18: #{da2qn_forward.5} parent=11 // pred_check_branch
        %123 = sbr.rel (%p121) target = $region20
      $region19: #{da2qn_forward.5} parent=11 // pred_region
        _
      $region20: #{da2qn_forward.5} parent=11 // pred_fallthru
        _
    $region12: #{da2qn_forward.5} parent=5 // pred_fallthru
      _
    %p124 = scmp.lt.s32.totalorder %s9, 2
    // Predicated region
    $region21: #{da2qn_forward.5} parent=5 // pred_check
      %p125 = pneg %p124
    $region22: #{da2qn_forward.5} parent=5 // pred_check_branch
      %127 = sbr.rel (%p125) target = $region24
    $region23: #{da2qn_forward.5} parent=5 // pred_region
      // Predicated region
      $region25: #{da2qn_forward.5} parent=23 // pred_check
        %p128 = pneg %p29
      $region26: #{da2qn_forward.5} parent=23 // pred_check_branch
        %130 = sbr.rel (%p128) target = $region28
      $region27: #{da2qn_forward.5} parent=23 // pred_region
        %p131 = scmp.lt.s32.totalorder %s9, 1
        %s132 = scalar_select %p131, %s9, 1
        %s133 = smul.addr %s132, 14
        %s134 = smul.addr %s133, 4
        %s135 = scalar_lea.vmem %s0, %s134
      $region28: #{da2qn_forward.5} parent=23 // pred_fallthru
        _
    $region24: #{da2qn_forward.5} parent=5 // pred_fallthru
      _
    %p136 = scmp.le.s32.totalorder 1, %s9
    %p137 = scmp.lt.s32.totalorder %s9, 3
    %p138 = pnand %p136, %p137
    %p139 = pneg %p138
    // Predicated region
    $region29: #{da2qn_forward.5} parent=5 // pred_check
      _
    $region30: #{da2qn_forward.5} parent=5 // pred_check_branch
      %141 = sbr.rel (%p138) target = $region32
    $region31: #{da2qn_forward.5} parent=5 // pred_region
      %s142 = ssub.s32 %s9, 1
      %p143 = scmp.lt.s32.totalorder %s14, 1
      %s144 = scalar_select %p143, %s14, 1
      %s145 = smul.addr %s144, 14
      %s146 = smul.addr %s145, 4
      %s147 = scalar_lea.vmem %s0, %s146
      %p148 = pneg %p35
      %p149 = pneg %p32
      %p150 = pneg %p56
      %p151 = pneg %p53
      %p152 = pneg %p77
      %p153 = pneg %p74
      %p154 = pneg %p103
      %p155 = pneg %p100
      %p156 = scmp.lt.s32.totalorder %s14, 1
      %s157 = scalar_select %p156, %s14, 1
      %s158 = smul.addr %s157, 12
      %s159 = smul.addr %s158, 4
      %s160 = scalar_lea.vmem %s3, %s159
      %p161 = scmp.lt.s32.totalorder %s14, 1
      %s162 = scalar_select %p161, %s14, 1
      %s163 = smul.addr %s162, 14
      %s164 = smul.addr %s163, 4
      %s165 = scalar_lea.vmem %s0, %s164
      %p166 = scmp.lt.s32.totalorder %s14, 1
      %s167 = scalar_select %p166, %s14, 1
      %s168 = smul.addr %s167, 12
      %s169 = smul.addr %s168, 4
      %s170 = scalar_lea.vmem %s3, %s169
      %v171 = vld [vmem:[%s2] sm:$0x1]
      %v172 = vld [vmem:[%s165] sm:$0xf]
      %v173 = vld [vmem:[%s165 + $0x4] sm:$0xf]
      %v174 = vld [vmem:[%s165 + $0x8] sm:$0xf]
      %v175 = vld [vmem:[%s165 + $0xc] sm:$0xf]
      %v176 = vld [vmem:[%s165 + $0x10] sm:$0xf]
      %v177 = vld [vmem:[%s165 + $0x14] sm:$0xf]
      %v178 = vld [vmem:[%s165 + $0x18] sm:$0xf]
      %v179 = vld [vmem:[%s165 + $0x1c] sm:$0xf]
      %v180 = vld [vmem:[%s165 + $0x20] sm:$0xf]
      %v181 = vld [vmem:[%s165 + $0x24] sm:$0xf]
      %v182 = vld [vmem:[%s165 + $0x28] sm:$0xf]
      %v183 = vld [vmem:[%s165 + $0x2c] sm:$0xf]
      %v184 = vld [vmem:[%s1] sm:$0xf]
      %v185 = vld [vmem:[%s1 + $0x4] sm:$0xf]
      %v186 = vld [vmem:[%s1 + $0x8] sm:$0xf]
      %v187 = vld [vmem:[%s1 + $0xc] sm:$0xf]
      %v188 = vld [vmem:[%s1 + $0x10] sm:$0xf]
      %v189 = vld [vmem:[%s1 + $0x14] sm:$0xf]
      %v190 = vld [vmem:[%s1 + $0x18] sm:$0xf]
      %v191 = vld [vmem:[%s1 + $0x1c] sm:$0xf]
      %v192 = vld [vmem:[%s1 + $0x20] sm:$0xf]
      %v193 = vld [vmem:[%s1 + $0x24] sm:$0xf]
      %v194 = vld [vmem:[%s1 + $0x28] sm:$0xf]
      %v195 = vld [vmem:[%s1 + $0x2c] sm:$0xf]
      %v196 = vld [vmem:[%s1 + $0x30] sm:$0xf]
      %v197 = vld [vmem:[%s1 + $0x34] sm:$0xf]
      %v198 = vld [vmem:[%s1 + $0x38] sm:$0xf]
      %v199 = vld [vmem:[%s1 + $0x3c] sm:$0xf]
      %v200 = vld [vmem:[%s165 + $0x30] sm:$0x1]
      %s201 = scalar_lea.vmem %s1, 64
      %v202 = vld [vmem:[%s201] sm:$0xf]
      %v203 = vld [vmem:[%s201 + $0x4] sm:$0xf]
      %v204 = vld [vmem:[%s201 + $0x8] sm:$0xf]
      %v205 = vld [vmem:[%s201 + $0xc] sm:$0xf]
      %v206 = vld [vmem:[%s201 + $0x10] sm:$0xf]
      %v207 = vld [vmem:[%s201 + $0x14] sm:$0xf]
      %v208 = vld [vmem:[%s201 + $0x18] sm:$0xf]
      %v209 = vld [vmem:[%s201 + $0x1c] sm:$0xf]
      %v210 = vld [vmem:[%s201 + $0x20] sm:$0xf]
      %v211 = vld [vmem:[%s201 + $0x24] sm:$0xf]
      %v212 = vld [vmem:[%s201 + $0x28] sm:$0xf]
      %v213 = vld [vmem:[%s201 + $0x2c] sm:$0xf]
      %v214 = vld [vmem:[%s201 + $0x30] sm:$0xf]
      %v215 = vld [vmem:[%s201 + $0x34] sm:$0xf]
      %v216 = vld [vmem:[%s201 + $0x38] sm:$0xf]
      %v217 = vld [vmem:[%s201 + $0x3c] sm:$0xf]
      %v231 = vunpack.c.l.b16 %v172
      %v232 = vunpack.c.l.b16 %v173
      %v233 = vunpack.c.l.b16 %v174
      %v234 = vunpack.c.l.b16 %v175
      %v235 = vunpack.c.l.b16 %v176
      %v236 = vunpack.c.l.b16 %v177
      %v237 = vunpack.c.l.b16 %v178
      %v238 = vunpack.c.l.b16 %v179
      %v239 = vunpack.c.l.b16 %v180
      %v240 = vunpack.c.l.b16 %v181
      %v241 = vunpack.c.l.b16 %v182
      %v242 = vunpack.c.l.b16 %v183
      %v243 = vunpack.c.l.b16 %v200
      %v244 = vpack.c.b16 %v232, %v231
      %v245 = vpack.c.b16 %v234, %v233
      %v246 = vpack.c.b16 %v236, %v235
      %v247 = vpack.c.b16 %v238, %v237
      %v248 = vpack.c.b16 %v240, %v239
      %v249 = vpack.c.b16 %v242, %v241
      %v250 = vpack.c.b16 %v243, %v243
      %vm251 = vsmask.f32 7424
      %v253 = vshrl.u32 %v244, 16
      %v255 = vshll.u32 %v244, 16
      %v257 = vrot.slane %v255, 1
      %v258 = vor.u32 %v253, %v257
      %v260 = vshll.u32 %v245, 16
      %v262 = vrot.slane %v260, 1
      %v263 = vsel %vm251, %v258, %v262
      %v264 = vshrl.u32 %v245, 16
      %v266 = vor.u32 %v264, %v262
      %v268 = vshll.u32 %v246, 16
      %v270 = vrot.slane %v268, 1
      %v271 = vsel %vm251, %v266, %v270
      %v272 = vshrl.u32 %v246, 16
      %v274 = vor.u32 %v272, %v270
      %v276 = vshll.u32 %v247, 16
      %v278 = vrot.slane %v276, 1
      %v279 = vsel %vm251, %v274, %v278
      %v280 = vshrl.u32 %v247, 16
      %v282 = vor.u32 %v280, %v278
      %v284 = vshll.u32 %v248, 16
      %v286 = vrot.slane %v284, 1
      %v287 = vsel %vm251, %v282, %v286
      %v288 = vshrl.u32 %v248, 16
      %v290 = vor.u32 %v288, %v286
      %v292 = vshll.u32 %v249, 16
      %v294 = vrot.slane %v292, 1
      %v295 = vsel %vm251, %v290, %v294
      %v296 = vshrl.u32 %v249, 16
      %v298 = vor.u32 %v296, %v294
      %v300 = vshll.u32 %v250, 16
      %v302 = vrot.slane %v300, 1
      %v303 = vsel %vm251, %v298, %v302
      %v326 = vunpack.c.l.b16 %v202
      %v327 = vunpack.c.l.b16 %v203
      %v328 = vunpack.c.l.b16 %v204
      %v329 = vunpack.c.l.b16 %v205
      %v330 = vunpack.c.l.b16 %v206
      %v331 = vunpack.c.l.b16 %v207
      %v332 = vunpack.c.l.b16 %v208
      %v333 = vunpack.c.l.b16 %v209
      %v334 = vunpack.c.l.b16 %v210
      %v335 = vunpack.c.l.b16 %v211
      %v336 = vunpack.c.l.b16 %v212
      %v337 = vunpack.c.l.b16 %v213
      %v338 = vunpack.c.l.b16 %v214
      %v339 = vunpack.c.l.b16 %v215
      %v340 = vunpack.c.l.b16 %v216
      %v341 = vunpack.c.l.b16 %v217
      %v342 = vpack.c.b16 %v327, %v326
      %v343 = vpack.c.b16 %v329, %v328
      %v344 = vpack.c.b16 %v331, %v330
      %v345 = vpack.c.b16 %v333, %v332
      %v346 = vpack.c.b16 %v335, %v334
      %v347 = vpack.c.b16 %v337, %v336
      %v348 = vpack.c.b16 %v339, %v338
      %v349 = vpack.c.b16 %v341, %v340
      %358 = vmatpush.bf16.msra.mxu0 %v349
      %359 = vmatpush.bf16.msra.mxu0 %v348
      %360 = vmatpush.bf16.msra.mxu0 %v347
      %361 = vmatpush.bf16.msra.mxu0 %v346
      %362 = vmatpush.bf16.msra.mxu0 %v345
      %363 = vmatpush.bf16.msra.mxu0 %v344
      %364 = vmatpush.bf16.msra.mxu0 %v343
      %365 = vmatpush.bf16.msra.mxu0 %v342
      %366 = vmatmul.bf16.gmra.mxu0 %v263
      %v367 = vpop.f32.mrf.mxu0
      %v368 = vadd.f32 0.0, %v367
      %v369 = vpop.f32.mrf.mxu0
      %v370 = vadd.f32 0.0, %v369
      %371 = vmatmul.bf16.gmra.mxu0 %v271
      %v372 = vpop.f32.mrf.mxu0
      %v373 = vadd.f32 0.0, %v372
      %v374 = vpop.f32.mrf.mxu0
      %v375 = vadd.f32 0.0, %v374
      %376 = vmatmul.bf16.gmra.mxu0 %v279
      %v377 = vpop.f32.mrf.mxu0
      %v378 = vadd.f32 0.0, %v377
      %v379 = vpop.f32.mrf.mxu0
      %v380 = vadd.f32 0.0, %v379
      %381 = vmatmul.bf16.gmra.mxu0 %v287
      %v382 = vpop.f32.mrf.mxu0
      %v383 = vadd.f32 0.0, %v382
      %v384 = vpop.f32.mrf.mxu0
      %v385 = vadd.f32 0.0, %v384
      %386 = vmatmul.bf16.gmra.mxu0 %v295
      %v387 = vpop.f32.mrf.mxu0
      %v388 = vadd.f32 0.0, %v387
      %v389 = vpop.f32.mrf.mxu0
      %v390 = vadd.f32 0.0, %v389
      %391 = vmatmul.bf16.gmra.mxu0 %v303
      %v392 = vpop.f32.mrf.mxu0
      %v393 = vadd.f32 0.0, %v392
      %v394 = vpop.f32.mrf.mxu0
      %v395 = vadd.f32 0.0, %v394
      %396 = vdwg.mxu0
      %v419 = vunpack.c.l.b16 %v184
      %v420 = vunpack.c.l.b16 %v185
      %v421 = vunpack.c.l.b16 %v186
      %v422 = vunpack.c.l.b16 %v187
      %v423 = vunpack.c.l.b16 %v188
      %v424 = vunpack.c.l.b16 %v189
      %v425 = vunpack.c.l.b16 %v190
      %v426 = vunpack.c.l.b16 %v191
      %v427 = vunpack.c.l.b16 %v192
      %v428 = vunpack.c.l.b16 %v193
      %v429 = vunpack.c.l.b16 %v194
      %v430 = vunpack.c.l.b16 %v195
      %v431 = vunpack.c.l.b16 %v196
      %v432 = vunpack.c.l.b16 %v197
      %v433 = vunpack.c.l.b16 %v198
      %v434 = vunpack.c.l.b16 %v199
      %v435 = vpack.c.b16 %v420, %v419
      %v436 = vpack.c.b16 %v422, %v421
      %v437 = vpack.c.b16 %v424, %v423
      %v438 = vpack.c.b16 %v426, %v425
      %v439 = vpack.c.b16 %v428, %v427
      %v440 = vpack.c.b16 %v430, %v429
      %v441 = vpack.c.b16 %v432, %v431
      %v442 = vpack.c.b16 %v434, %v433
      %451 = vmatpush.bf16.msra.mxu0 %v442
      %452 = vmatpush.bf16.msra.mxu0 %v441
      %453 = vmatpush.bf16.msra.mxu0 %v440
      %454 = vmatpush.bf16.msra.mxu0 %v439
      %455 = vmatpush.bf16.msra.mxu0 %v438
      %456 = vmatpush.bf16.msra.mxu0 %v437
      %457 = vmatpush.bf16.msra.mxu0 %v436
      %458 = vmatpush.bf16.msra.mxu0 %v435
      %459 = vmatmul.bf16.gmra.mxu0 %v244
      %v460 = vpop.f32.mrf.mxu0
      %v461 = vadd.f32 %v368, %v460
      %v462 = vpop.f32.mrf.mxu0
      %v463 = vadd.f32 %v370, %v462
      %464 = vmatmul.bf16.gmra.mxu0 %v245
      %v465 = vpop.f32.mrf.mxu0
      %v466 = vadd.f32 %v373, %v465
      %v467 = vpop.f32.mrf.mxu0
      %v468 = vadd.f32 %v375, %v467
      %469 = vmatmul.bf16.gmra.mxu0 %v246
      %v470 = vpop.f32.mrf.mxu0
      %v471 = vadd.f32 %v378, %v470
      %v472 = vpop.f32.mrf.mxu0
      %v473 = vadd.f32 %v380, %v472
      %474 = vmatmul.bf16.gmra.mxu0 %v247
      %v475 = vpop.f32.mrf.mxu0
      %v476 = vadd.f32 %v383, %v475
      %v477 = vpop.f32.mrf.mxu0
      %v478 = vadd.f32 %v385, %v477
      %479 = vmatmul.bf16.gmra.mxu0 %v248
      %v480 = vpop.f32.mrf.mxu0
      %v481 = vadd.f32 %v388, %v480
      %v482 = vpop.f32.mrf.mxu0
      %v483 = vadd.f32 %v390, %v482
      %484 = vmatmul.bf16.gmra.mxu0 %v249
      %v485 = vpop.f32.mrf.mxu0
      %v486 = vadd.f32 %v393, %v485
      %v487 = vpop.f32.mrf.mxu0
      %v488 = vadd.f32 %v395, %v487
      %489 = vdwg.mxu0
      %v490 = vld [vmem:[%s165 + $0x4] sm:$0xe]
      %v491 = vld [vmem:[%s165 + $0x8] sm:$0xf]
      %v492 = vld [vmem:[%s165 + $0xc] sm:$0xf]
      %v493 = vld [vmem:[%s165 + $0x10] sm:$0xf]
      %v494 = vld [vmem:[%s165 + $0x14] sm:$0xf]
      %v495 = vld [vmem:[%s165 + $0x18] sm:$0xf]
      %v496 = vld [vmem:[%s165 + $0x1c] sm:$0xf]
      %v497 = vld [vmem:[%s165 + $0x20] sm:$0xf]
      %v498 = vld [vmem:[%s165 + $0x24] sm:$0xf]
      %v499 = vld [vmem:[%s165 + $0x28] sm:$0xf]
      %v500 = vld [vmem:[%s165 + $0x2c] sm:$0xf]
      %v501 = vld [vmem:[%s165 + $0x30] sm:$0xf]
      %v502 = vld [vmem:[%s165 + $0x34] sm:$0x1]
      %s503 = scalar_lea.vmem %s1, 128
      %v504 = vld [vmem:[%s503] sm:$0xf]
      %v505 = vld [vmem:[%s503 + $0x4] sm:$0xf]
      %v506 = vld [vmem:[%s503 + $0x8] sm:$0xf]
      %v507 = vld [vmem:[%s503 + $0xc] sm:$0xf]
      %v508 = vld [vmem:[%s503 + $0x10] sm:$0xf]
      %v509 = vld [vmem:[%s503 + $0x14] sm:$0xf]
      %v510 = vld [vmem:[%s503 + $0x18] sm:$0xf]
      %v511 = vld [vmem:[%s503 + $0x1c] sm:$0xf]
      %v512 = vld [vmem:[%s503 + $0x20] sm:$0xf]
      %v513 = vld [vmem:[%s503 + $0x24] sm:$0xf]
      %v514 = vld [vmem:[%s503 + $0x28] sm:$0xf]
      %v515 = vld [vmem:[%s503 + $0x2c] sm:$0xf]
      %v516 = vld [vmem:[%s503 + $0x30] sm:$0xf]
      %v517 = vld [vmem:[%s503 + $0x34] sm:$0xf]
      %v518 = vld [vmem:[%s503 + $0x38] sm:$0xf]
      %v519 = vld [vmem:[%s503 + $0x3c] sm:$0xf]
      %v533 = vunpack.c.l.b16 %v490
      %v534 = vunpack.c.l.b16 %v491
      %v535 = vunpack.c.l.b16 %v492
      %v536 = vunpack.c.l.b16 %v493
      %v537 = vunpack.c.l.b16 %v494
      %v538 = vunpack.c.l.b16 %v495
      %v539 = vunpack.c.l.b16 %v496
      %v540 = vunpack.c.l.b16 %v497
      %v541 = vunpack.c.l.b16 %v498
      %v542 = vunpack.c.l.b16 %v499
      %v543 = vunpack.c.l.b16 %v500
      %v544 = vunpack.c.l.b16 %v501
      %v545 = vunpack.c.l.b16 %v502
      %v546 = vpack.c.b16 %v534, %v533
      %v547 = vpack.c.b16 %v536, %v535
      %v548 = vpack.c.b16 %v538, %v537
      %v549 = vpack.c.b16 %v540, %v539
      %v550 = vpack.c.b16 %v542, %v541
      %v551 = vpack.c.b16 %v544, %v543
      %v552 = vpack.c.b16 %v545, %v545
      %vm553 = vcmask 1046528
      %v554 = vrot.slane %v546, 1
      %v555 = vrot.slane %v547, 1
      %v556 = vsel %vm553, %v554, %v555
      %v557 = vrot.slane %v548, 1
      %v558 = vsel %vm553, %v555, %v557
      %v559 = vrot.slane %v549, 1
      %v560 = vsel %vm553, %v557, %v559
      %v561 = vrot.slane %v550, 1
      %v562 = vsel %vm553, %v559, %v561
      %v563 = vrot.slane %v551, 1
      %v564 = vsel %vm553, %v561, %v563
      %v565 = vrot.slane %v552, 1
      %v566 = vsel %vm553, %v563, %v565
      %v589 = vunpack.c.l.b16 %v504
      %v590 = vunpack.c.l.b16 %v505
      %v591 = vunpack.c.l.b16 %v506
      %v592 = vunpack.c.l.b16 %v507
      %v593 = vunpack.c.l.b16 %v508
      %v594 = vunpack.c.l.b16 %v509
      %v595 = vunpack.c.l.b16 %v510
      %v596 = vunpack.c.l.b16 %v511
      %v597 = vunpack.c.l.b16 %v512
      %v598 = vunpack.c.l.b16 %v513
      %v599 = vunpack.c.l.b16 %v514
      %v600 = vunpack.c.l.b16 %v515
      %v601 = vunpack.c.l.b16 %v516
      %v602 = vunpack.c.l.b16 %v517
      %v603 = vunpack.c.l.b16 %v518
      %v604 = vunpack.c.l.b16 %v519
      %v605 = vpack.c.b16 %v590, %v589
      %v606 = vpack.c.b16 %v592, %v591
      %v607 = vpack.c.b16 %v594, %v593
      %v608 = vpack.c.b16 %v596, %v595
      %v609 = vpack.c.b16 %v598, %v597
      %v610 = vpack.c.b16 %v600, %v599
      %v611 = vpack.c.b16 %v602, %v601
      %v612 = vpack.c.b16 %v604, %v603
      %621 = vmatpush.bf16.msra.mxu0 %v612
      %622 = vmatpush.bf16.msra.mxu0 %v611
      %623 = vmatpush.bf16.msra.mxu0 %v610
      %624 = vmatpush.bf16.msra.mxu0 %v609
      %625 = vmatpush.bf16.msra.mxu0 %v608
      %626 = vmatpush.bf16.msra.mxu0 %v607
      %627 = vmatpush.bf16.msra.mxu0 %v606
      %628 = vmatpush.bf16.msra.mxu0 %v605
      %629 = vmatmul.bf16.gmra.mxu0 %v556
      %v630 = vpop.f32.mrf.mxu0
      %v631 = vadd.f32 0.0, %v630
      %v632 = vpop.f32.mrf.mxu0
      %v633 = vadd.f32 0.0, %v632
      %634 = vmatmul.bf16.gmra.mxu0 %v558
      %v635 = vpop.f32.mrf.mxu0
      %v636 = vadd.f32 0.0, %v635
      %v637 = vpop.f32.mrf.mxu0
      %v638 = vadd.f32 0.0, %v637
      %639 = vmatmul.bf16.gmra.mxu0 %v560
      %v640 = vpop.f32.mrf.mxu0
      %v641 = vadd.f32 0.0, %v640
      %v642 = vpop.f32.mrf.mxu0
      %v643 = vadd.f32 0.0, %v642
      %644 = vmatmul.bf16.gmra.mxu0 %v562
      %v645 = vpop.f32.mrf.mxu0
      %v646 = vadd.f32 0.0, %v645
      %v647 = vpop.f32.mrf.mxu0
      %v648 = vadd.f32 0.0, %v647
      %649 = vmatmul.bf16.gmra.mxu0 %v564
      %v650 = vpop.f32.mrf.mxu0
      %v651 = vadd.f32 0.0, %v650
      %v652 = vpop.f32.mrf.mxu0
      %v653 = vadd.f32 0.0, %v652
      %654 = vmatmul.bf16.gmra.mxu0 %v566
      %v655 = vpop.f32.mrf.mxu0
      %v656 = vadd.f32 0.0, %v655
      %v657 = vpop.f32.mrf.mxu0
      %v658 = vadd.f32 0.0, %v657
      %659 = vdwg.mxu0
      %v660 = vadd.f32 %v461, %v631
      %v661 = vadd.f32 %v463, %v633
      %v662 = vadd.f32 %v466, %v636
      %v663 = vadd.f32 %v468, %v638
      %v664 = vadd.f32 %v471, %v641
      %v665 = vadd.f32 %v473, %v643
      %v666 = vadd.f32 %v476, %v646
      %v667 = vadd.f32 %v478, %v648
      %v668 = vadd.f32 %v481, %v651
      %v669 = vadd.f32 %v483, %v653
      %v670 = vadd.f32 %v486, %v656
      %v671 = vadd.f32 %v488, %v658
      %v672 = vld [vmem:[%s165 + $0x34] sm:$0x3]
      %s673 = scalar_lea.vmem %s1, 192
      %v674 = vld [vmem:[%s673] sm:$0xf]
      %v675 = vld [vmem:[%s673 + $0x4] sm:$0xf]
      %v676 = vld [vmem:[%s673 + $0x8] sm:$0xf]
      %v677 = vld [vmem:[%s673 + $0xc] sm:$0xf]
      %v678 = vld [vmem:[%s673 + $0x10] sm:$0xf]
      %v679 = vld [vmem:[%s673 + $0x14] sm:$0xf]
      %v680 = vld [vmem:[%s673 + $0x18] sm:$0xf]
      %v681 = vld [vmem:[%s673 + $0x1c] sm:$0xf]
      %v682 = vld [vmem:[%s673 + $0x20] sm:$0xf]
      %v683 = vld [vmem:[%s673 + $0x24] sm:$0xf]
      %v684 = vld [vmem:[%s673 + $0x28] sm:$0xf]
      %v685 = vld [vmem:[%s673 + $0x2c] sm:$0xf]
      %v686 = vld [vmem:[%s673 + $0x30] sm:$0xf]
      %v687 = vld [vmem:[%s673 + $0x34] sm:$0xf]
      %v688 = vld [vmem:[%s673 + $0x38] sm:$0xf]
      %v689 = vld [vmem:[%s673 + $0x3c] sm:$0xf]
      %v691 = vunpack.c.l.b16 %v672
      %v692 = vpack.c.b16 %v691, %v691
      %vm693 = vsmask.f32 6400
      %v695 = vshrl.u32 %v546, 16
      %v697 = vrot.slane %v695, 1
      %v698 = vshll.u32 %v546, 16
      %v700 = vrot.slane %v698, 2
      %v701 = vor.u32 %v697, %v700
      %v703 = vshrl.u32 %v547, 16
      %v705 = vrot.slane %v703, 1
      %v706 = vshll.u32 %v547, 16
      %v708 = vrot.slane %v706, 2
      %v709 = vor.u32 %v705, %v708
      %v710 = vsel %vm693, %v701, %v709
      %v712 = vshrl.u32 %v548, 16
      %v714 = vrot.slane %v712, 1
      %v715 = vshll.u32 %v548, 16
      %v717 = vrot.slane %v715, 2
      %v718 = vor.u32 %v714, %v717
      %v719 = vsel %vm693, %v709, %v718
      %v721 = vshrl.u32 %v549, 16
      %v723 = vrot.slane %v721, 1
      %v724 = vshll.u32 %v549, 16
      %v726 = vrot.slane %v724, 2
      %v727 = vor.u32 %v723, %v726
      %v728 = vsel %vm693, %v718, %v727
      %v730 = vshrl.u32 %v550, 16
      %v732 = vrot.slane %v730, 1
      %v733 = vshll.u32 %v550, 16
      %v735 = vrot.slane %v733, 2
      %v736 = vor.u32 %v732, %v735
      %v737 = vsel %vm693, %v727, %v736
      %v739 = vshrl.u32 %v551, 16
      %v741 = vrot.slane %v739, 1
      %v742 = vshll.u32 %v551, 16
      %v744 = vrot.slane %v742, 2
      %v745 = vor.u32 %v741, %v744
      %v746 = vsel %vm693, %v736, %v745
      %v748 = vshrl.u32 %v692, 16
      %v750 = vrot.slane %v748, 1
      %v751 = vshll.u32 %v692, 16
      %v753 = vrot.slane %v751, 2
      %v754 = vor.u32 %v750, %v753
      %v755 = vsel %vm693, %v745, %v754
      %v778 = vunpack.c.l.b16 %v674
      %v779 = vunpack.c.l.b16 %v675
      %v780 = vunpack.c.l.b16 %v676
      %v781 = vunpack.c.l.b16 %v677
      %v782 = vunpack.c.l.b16 %v678
      %v783 = vunpack.c.l.b16 %v679
      %v784 = vunpack.c.l.b16 %v680
      %v785 = vunpack.c.l.b16 %v681
      %v786 = vunpack.c.l.b16 %v682
      %v787 = vunpack.c.l.b16 %v683
      %v788 = vunpack.c.l.b16 %v684
      %v789 = vunpack.c.l.b16 %v685
      %v790 = vunpack.c.l.b16 %v686
      %v791 = vunpack.c.l.b16 %v687
      %v792 = vunpack.c.l.b16 %v688
      %v793 = vunpack.c.l.b16 %v689
      %v794 = vpack.c.b16 %v779, %v778
      %v795 = vpack.c.b16 %v781, %v780
      %v796 = vpack.c.b16 %v783, %v782
      %v797 = vpack.c.b16 %v785, %v784
      %v798 = vpack.c.b16 %v787, %v786
      %v799 = vpack.c.b16 %v789, %v788
      %v800 = vpack.c.b16 %v791, %v790
      %v801 = vpack.c.b16 %v793, %v792
      %810 = vmatpush.bf16.msra.mxu0 %v801
      %811 = vmatpush.bf16.msra.mxu0 %v800
      %812 = vmatpush.bf16.msra.mxu0 %v799
      %813 = vmatpush.bf16.msra.mxu0 %v798
      %814 = vmatpush.bf16.msra.mxu0 %v797
      %815 = vmatpush.bf16.msra.mxu0 %v796
      %816 = vmatpush.bf16.msra.mxu0 %v795
      %817 = vmatpush.bf16.msra.mxu0 %v794
      %818 = vmatmul.bf16.gmra.mxu0 %v710
      %v819 = vpop.f32.mrf.mxu0
      %v820 = vadd.f32 0.0, %v819
      %v821 = vpop.f32.mrf.mxu0
      %v822 = vadd.f32 0.0, %v821
      %823 = vmatmul.bf16.gmra.mxu0 %v719
      %v824 = vpop.f32.mrf.mxu0
      %v825 = vadd.f32 0.0, %v824
      %v826 = vpop.f32.mrf.mxu0
      %v827 = vadd.f32 0.0, %v826
      %828 = vmatmul.bf16.gmra.mxu0 %v728
      %v829 = vpop.f32.mrf.mxu0
      %v830 = vadd.f32 0.0, %v829
      %v831 = vpop.f32.mrf.mxu0
      %v832 = vadd.f32 0.0, %v831
      %833 = vmatmul.bf16.gmra.mxu0 %v737
      %v834 = vpop.f32.mrf.mxu0
      %v835 = vadd.f32 0.0, %v834
      %v836 = vpop.f32.mrf.mxu0
      %v837 = vadd.f32 0.0, %v836
      %838 = vmatmul.bf16.gmra.mxu0 %v746
      %v839 = vpop.f32.mrf.mxu0
      %v840 = vadd.f32 0.0, %v839
      %v841 = vpop.f32.mrf.mxu0
      %v842 = vadd.f32 0.0, %v841
      %843 = vmatmul.bf16.gmra.mxu0 %v755
      %v844 = vpop.f32.mrf.mxu0
      %v845 = vadd.f32 0.0, %v844
      %v846 = vpop.f32.mrf.mxu0
      %v847 = vadd.f32 0.0, %v846
      %848 = vdwg.mxu0
      %v849 = vadd.f32 %v660, %v820
      %v850 = vadd.f32 %v661, %v822
      %v851 = vadd.f32 %v662, %v825
      %v852 = vadd.f32 %v663, %v827
      %v853 = vadd.f32 %v664, %v830
      %v854 = vadd.f32 %v665, %v832
      %v855 = vadd.f32 %v666, %v835
      %v856 = vadd.f32 %v667, %v837
      %v857 = vadd.f32 %v668, %v840
      %v858 = vadd.f32 %v669, %v842
      %v859 = vadd.f32 %v670, %v845
      %v860 = vadd.f32 %v671, %v847
      %v862 = vperm.slane %v171, 0
      %v864 = vadd.f32 %v849, %v862
      %v865 = vadd.f32 %v850, %v862
      %v866 = vadd.f32 %v851, %v862
      %v867 = vadd.f32 %v852, %v862
      %v868 = vadd.f32 %v853, %v862
      %v869 = vadd.f32 %v854, %v862
      %v870 = vadd.f32 %v855, %v862
      %v871 = vadd.f32 %v856, %v862
      %v872 = vadd.f32 %v857, %v862
      %v873 = vadd.f32 %v858, %v862
      %v874 = vadd.f32 %v859, %v862
      %v875 = vadd.f32 %v860, %v862
      %v876 = vmax.f32 %v864, 0.0
      %v877 = vmax.f32 %v865, 0.0
      %v878 = vmax.f32 %v866, 0.0
      %v879 = vmax.f32 %v867, 0.0
      %v880 = vmax.f32 %v868, 0.0
      %v881 = vmax.f32 %v869, 0.0
      %v882 = vmax.f32 %v870, 0.0
      %v883 = vmax.f32 %v871, 0.0
      %v884 = vmax.f32 %v872, 0.0
      %v885 = vmax.f32 %v873, 0.0
      %v886 = vmax.f32 %v874, 0.0
      %v887 = vmax.f32 %v875, 0.0
      %v888 = vpack.c.bf16 %v876, %v876
      %v889 = vpack.c.bf16 %v877, %v877
      %v890 = vpack.c.bf16 %v878, %v878
      %v891 = vpack.c.bf16 %v879, %v879
      %v892 = vpack.c.bf16 %v880, %v880
      %v893 = vpack.c.bf16 %v881, %v881
      %v894 = vpack.c.bf16 %v882, %v882
      %v895 = vpack.c.bf16 %v883, %v883
      %v896 = vpack.c.bf16 %v884, %v884
      %v897 = vpack.c.bf16 %v885, %v885
      %v898 = vpack.c.bf16 %v886, %v886
      %v899 = vpack.c.bf16 %v887, %v887
      %vm900 = vcmask 519168
      %901 = vst.msk [vmem:[%s170] sm:$0xf] %vm900, %v888
      %902 = vst.msk [vmem:[%s170 + $0x4] sm:$0xf] %vm900, %v889
      %903 = vst.msk [vmem:[%s170 + $0x8] sm:$0xf] %vm900, %v890
      %904 = vst.msk [vmem:[%s170 + $0xc] sm:$0xf] %vm900, %v891
      %905 = vst.msk [vmem:[%s170 + $0x10] sm:$0xf] %vm900, %v892
      %906 = vst.msk [vmem:[%s170 + $0x14] sm:$0xf] %vm900, %v893
      %907 = vst.msk [vmem:[%s170 + $0x18] sm:$0xf] %vm900, %v894
      %908 = vst.msk [vmem:[%s170 + $0x1c] sm:$0xf] %vm900, %v895
      %909 = vst.msk [vmem:[%s170 + $0x20] sm:$0xf] %vm900, %v896
      %910 = vst.msk [vmem:[%s170 + $0x24] sm:$0xf] %vm900, %v897
      %911 = vst.msk [vmem:[%s170 + $0x28] sm:$0xf] %vm900, %v898
      %912 = vst.msk [vmem:[%s170 + $0x2c] sm:$0xf] %vm900, %v899
      %p913 = scmp.lt.s32.totalorder %s14, 1
      %s914 = scalar_select %p913, %s14, 1
      %s915 = smul.addr %s914, 12
      %s916 = smul.addr %s915, 4
      %s917 = scalar_lea.vmem %s3, %s916
      // Predicated region
      $region33: #{da2qn_forward.5} parent=31 // pred_check
        %p918 = pneg %p100
      $region34: #{da2qn_forward.5} parent=31 // pred_check_branch
        %920 = sbr.rel (%p918) target = $region36
      $region35: #{da2qn_forward.5} parent=31 // pred_region
        _
      $region36: #{da2qn_forward.5} parent=31 // pred_fallthru
        _
    $region32: #{da2qn_forward.5} parent=5 // pred_fallthru
      _
    %p921 = scmp.le.s32.totalorder 2, %s9
    // Predicated region
    $region37: #{da2qn_forward.5} parent=5 // pred_check
      %p922 = pneg %p921
    $region38: #{da2qn_forward.5} parent=5 // pred_check_branch
      %924 = sbr.rel (%p922) target = $region40
    $region39: #{da2qn_forward.5} parent=5 // pred_region
      %s925 = ssub.s32 %s9, 2
      // Predicated region
      $region41: #{da2qn_forward.5} parent=39 // pred_check
        %p926 = pneg %p106
      $region42: #{da2qn_forward.5} parent=39 // pred_check_branch
        %928 = sbr.rel (%p926) target = $region44
      $region43: #{da2qn_forward.5} parent=39 // pred_region
        %p929 = scmp.lt.s32.totalorder %s15, 1
        %s930 = scalar_select %p929, %s15, 1
        %s931 = smul.addr %s930, 12
        %s932 = smul.addr %s931, 4
        %s933 = scalar_lea.vmem %s3, %s932
      $region44: #{da2qn_forward.5} parent=39 // pred_fallthru
        _
    $region40: #{da2qn_forward.5} parent=5 // pred_fallthru
      _
  $region6: #{da2qn_forward.5} parent=0 // loop_footer
    %s13 = sadd.s32 1, %s9
  $region7: #{da2qn_forward.5} parent=0 // loop_footer_branch
    %8 = sbr.rel target = $region3
  $region8: #{da2qn_forward.5} parent=0 // loop_exit
    _

// kernel: da2qn_forward.6
$region0: #{da2qn_forward.6}
  #allocation0 [shape = 'u32[]', space=smem, size = 0x4, offset = 0x4, fixed_abs, tag = 'smem constant byte address 0x4 - core index']
  #allocation1 [shape = 'u32[72,128]{1,0:T(1,128)}', space=vmem, size = 0x9000, scoped, tag = 'internal scratch']
  %s0 = inlined_call_operand.vmem [shape: bf16[2,96,64], index: 0, kind: input, shape index: {}]
  %s1 = inlined_call_operand.vmem [shape: bf16[9,64,64], index: 1, kind: input, shape index: {}]
  %s2 = inlined_call_operand.vmem [shape: f32[1,64], index: 2, kind: input, shape index: {}]
  %s3 = inlined_call_operand.vmem [shape: bf16[2,70,64], index: 3, kind: output, shape index: {}]
  %s4 = sld [smem:[#allocation0]]
  $region45: #{da2qn_forward.6} parent=0
    _
  %s6 = ssub.s32 1, %s4
  %s7 = scalar_select 0, %s6, %s4
  loop: start=0, step=1, limit=4
  $region2: #{da2qn_forward.6} parent=0 // loop_pre_header
    _
  $region3: #{da2qn_forward.6} parent=0 // loop_header
    %s9 = sphi 0, %s13
    %p10 = scmp.ge.s32.totalorder %s9, 4
    %s19 = sphi 0, %s21
    %s22 = sphi 0, %s19
    %s23 = sphi 0, %s22
    %s39 = sphi 0, %s23
    %s43 = sphi 0, %s43
    %s45 = sphi 0, %s43
    %s46 = sphi 0, %s45
    %s60 = sphi 0, %s46
    %s64 = sphi 0, %s64
    %s66 = sphi 0, %s64
    %s67 = sphi 0, %s66
    %s81 = sphi 0, %s67
    %s87 = sphi 0, %s89
    %s90 = sphi 0, %s87
    %s91 = sphi 0, %s90
    %s107 = sphi 0, %s91
  $region4: #{da2qn_forward.6} parent=0 // loop_header_branch
    %12 = sbr.rel (%p10) target = $region8
  $region5: #{da2qn_forward.6} parent=0 // loop_body
    %s14 = ssub.s32 %s9, 1
    %s15 = ssub.s32 %s9, 2
    %s16 = sadd.s32 %s9, 1
    %s17 = ssub.s32 %s9, %s16
    %p18 = scmp.eq.s32.totalorder %s17, 0
    %s20 = sadd.s32 %s19, 1
    %s21 = scalar_select %p18, %s19, %s20
    %p24 = pneg %p18
    %p25 = scmp.eq.s32.totalorder %s9, 1
    %p26 = por %p24, %p25
    %p27 = scmp.ne.s32.totalorder %s19, %s22
    %p28 = scmp.eq.s32.totalorder %s9, 0
    %p29 = por %p27, %p28
    %p30 = scmp.ne.s32.totalorder %s19, %s22
    %p31 = scmp.eq.s32.totalorder %s14, 1
    %p32 = por %p30, %p31
    %p33 = scmp.ne.s32.totalorder %s22, %s23
    %p34 = scmp.eq.s32.totalorder %s14, 0
    %p35 = por %p33, %p34
    %p36 = scmp.ne.s32.totalorder %s22, %s23
    %p37 = scmp.eq.s32.totalorder %s15, 1
    %p38 = por %p36, %p37
    %p40 = scmp.ne.s32.totalorder %s23, %s39
    %p41 = scmp.eq.s32.totalorder %s15, 0
    %p42 = por %p40, %p41
    %s44 = sadd.s32 %s43, 1
    %p47 = scmp.eq.s32.totalorder %s9, 1
    %p48 = scmp.ne.s32.totalorder %s43, %s45
    %p49 = scmp.eq.s32.totalorder %s9, 0
    %p50 = por %p48, %p49
    %p51 = scmp.ne.s32.totalorder %s43, %s45
    %p52 = scmp.eq.s32.totalorder %s14, 1
    %p53 = por %p51, %p52
    %p54 = scmp.ne.s32.totalorder %s45, %s46
    %p55 = scmp.eq.s32.totalorder %s14, 0
    %p56 = por %p54, %p55
    %p57 = scmp.ne.s32.totalorder %s45, %s46
    %p58 = scmp.eq.s32.totalorder %s15, 1
    %p59 = por %p57, %p58
    %p61 = scmp.ne.s32.totalorder %s46, %s60
    %p62 = scmp.eq.s32.totalorder %s15, 0
    %p63 = por %p61, %p62
    %s65 = sadd.s32 %s64, 1
    %p68 = scmp.eq.s32.totalorder %s9, 1
    %p69 = scmp.ne.s32.totalorder %s64, %s66
    %p70 = scmp.eq.s32.totalorder %s9, 0
    %p71 = por %p69, %p70
    %p72 = scmp.ne.s32.totalorder %s64, %s66
    %p73 = scmp.eq.s32.totalorder %s14, 1
    %p74 = por %p72, %p73
    %p75 = scmp.ne.s32.totalorder %s66, %s67
    %p76 = scmp.eq.s32.totalorder %s14, 0
    %p77 = por %p75, %p76
    %p78 = scmp.ne.s32.totalorder %s66, %s67
    %p79 = scmp.eq.s32.totalorder %s15, 1
    %p80 = por %p78, %p79
    %p82 = scmp.ne.s32.totalorder %s67, %s81
    %p83 = scmp.eq.s32.totalorder %s15, 0
    %p84 = por %p82, %p83
    %s85 = ssub.s32 %s9, %s16
    %p86 = scmp.eq.s32.totalorder %s85, 0
    %s88 = sadd.s32 %s87, 1
    %s89 = scalar_select %p86, %s87, %s88
    %p92 = pneg %p86
    %p93 = scmp.eq.s32.totalorder %s9, 1
    %p94 = por %p92, %p93
    %p95 = scmp.ne.s32.totalorder %s87, %s90
    %p96 = scmp.eq.s32.totalorder %s9, 0
    %p97 = por %p95, %p96
    %p98 = scmp.ne.s32.totalorder %s87, %s90
    %p99 = scmp.eq.s32.totalorder %s14, 1
    %p100 = por %p98, %p99
    %p101 = scmp.ne.s32.totalorder %s90, %s91
    %p102 = scmp.eq.s32.totalorder %s14, 0
    %p103 = por %p101, %p102
    %p104 = scmp.ne.s32.totalorder %s90, %s91
    %p105 = scmp.eq.s32.totalorder %s15, 1
    %p106 = por %p104, %p105
    %p108 = scmp.ne.s32.totalorder %s91, %s107
    %p109 = scmp.eq.s32.totalorder %s15, 0
    %p110 = por %p108, %p109
    %p111 = scmp.le.s32.totalorder 1, %s9
    %p112 = scmp.lt.s32.totalorder %s9, 3
    %p113 = pnand %p111, %p112
    %p114 = pneg %p113
    // Predicated region
    $region9: #{da2qn_forward.6} parent=5 // pred_check
      _
    $region10: #{da2qn_forward.6} parent=5 // pred_check_branch
      %116 = sbr.rel (%p113) target = $region12
    $region11: #{da2qn_forward.6} parent=5 // pred_region
      %s117 = ssub.s32 %s9, 1
      // Predicated region
      $region13: #{da2qn_forward.6} parent=11 // pred_check
        %p118 = pneg %p56
      $region14: #{da2qn_forward.6} parent=11 // pred_check_branch
        %120 = sbr.rel (%p118) target = $region16
      $region15: #{da2qn_forward.6} parent=11 // pred_region
        _
      $region16: #{da2qn_forward.6} parent=11 // pred_fallthru
        _
      // Predicated region
      $region17: #{da2qn_forward.6} parent=11 // pred_check
        %p121 = pneg %p77
      $region18: #{da2qn_forward.6} parent=11 // pred_check_branch
        %123 = sbr.rel (%p121) target = $region20
      $region19: #{da2qn_forward.6} parent=11 // pred_region
        _
      $region20: #{da2qn_forward.6} parent=11 // pred_fallthru
        _
    $region12: #{da2qn_forward.6} parent=5 // pred_fallthru
      _
    %p124 = scmp.lt.s32.totalorder %s9, 2
    // Predicated region
    $region21: #{da2qn_forward.6} parent=5 // pred_check
      %p125 = pneg %p124
    $region22: #{da2qn_forward.6} parent=5 // pred_check_branch
      %127 = sbr.rel (%p125) target = $region24
    $region23: #{da2qn_forward.6} parent=5 // pred_region
      // Predicated region
      $region25: #{da2qn_forward.6} parent=23 // pred_check
        %p128 = pneg %p29
      $region26: #{da2qn_forward.6} parent=23 // pred_check_branch
        %130 = sbr.rel (%p128) target = $region28
      $region27: #{da2qn_forward.6} parent=23 // pred_region
        %p131 = scmp.lt.s32.totalorder %s9, 1
        %s132 = scalar_select %p131, %s9, 1
        %s133 = smul.addr %s132, 12
        %s134 = smul.addr %s133, 4
        %s135 = scalar_lea.vmem %s0, %s134
      $region28: #{da2qn_forward.6} parent=23 // pred_fallthru
        _
    $region24: #{da2qn_forward.6} parent=5 // pred_fallthru
      _
    %p136 = scmp.le.s32.totalorder 1, %s9
    %p137 = scmp.lt.s32.totalorder %s9, 3
    %p138 = pnand %p136, %p137
    %p139 = pneg %p138
    // Predicated region
    $region29: #{da2qn_forward.6} parent=5 // pred_check
      _
    $region30: #{da2qn_forward.6} parent=5 // pred_check_branch
      %141 = sbr.rel (%p138) target = $region32
    $region31: #{da2qn_forward.6} parent=5 // pred_region
      %s142 = ssub.s32 %s9, 1
      %p143 = scmp.lt.s32.totalorder %s14, 1
      %s144 = scalar_select %p143, %s14, 1
      %s145 = smul.addr %s144, 12
      %s146 = smul.addr %s145, 4
      %s147 = scalar_lea.vmem %s0, %s146
      %p148 = pneg %p35
      %p149 = pneg %p32
      %p150 = pneg %p56
      %p151 = pneg %p53
      %p152 = pneg %p77
      %p153 = pneg %p74
      %p154 = pneg %p103
      %p155 = pneg %p100
      %p156 = scmp.lt.s32.totalorder %s14, 1
      %s157 = scalar_select %p156, %s14, 1
      %s158 = smul.addr %s157, 9
      %s159 = smul.addr %s158, 4
      %s160 = scalar_lea.vmem %s3, %s159
      %p161 = scmp.lt.s32.totalorder %s14, 1
      %s162 = scalar_select %p161, %s14, 1
      %s163 = smul.addr %s162, 12
      %s164 = smul.addr %s163, 4
      %s165 = scalar_lea.vmem %s0, %s164
      %p166 = scmp.lt.s32.totalorder %s14, 1
      %s167 = scalar_select %p166, %s14, 1
      %s168 = smul.addr %s167, 9
      %s169 = smul.addr %s168, 4
      %s170 = scalar_lea.vmem %s3, %s169
      %v172 = vld [vmem:[%s2] sm:$0x1]
      %v173 = vld [vmem:[%s165] sm:$0xf]
      %v174 = vld [vmem:[%s165 + $0x4] sm:$0xf]
      %v175 = vld [vmem:[%s165 + $0x8] sm:$0xf]
      %v176 = vld [vmem:[%s165 + $0xc] sm:$0xf]
      %v177 = vld [vmem:[%s165 + $0x10] sm:$0xf]
      %v178 = vld [vmem:[%s165 + $0x14] sm:$0xf]
      %v179 = vld [vmem:[%s165 + $0x18] sm:$0xf]
      %v180 = vld [vmem:[%s165 + $0x1c] sm:$0xf]
      %v181 = vld [vmem:[%s165 + $0x20] sm:$0x7]
      %v182 = vld [vmem:[%s1] sm:$0xf]
      %v183 = vld [vmem:[%s1 + $0x4] sm:$0xf]
      %v184 = vld [vmem:[%s1 + $0x8] sm:$0xf]
      %v185 = vld [vmem:[%s1 + $0xc] sm:$0xf]
      %v186 = vld [vmem:[%s1 + $0x10] sm:$0xf]
      %v187 = vld [vmem:[%s1 + $0x14] sm:$0xf]
      %v188 = vld [vmem:[%s1 + $0x18] sm:$0xf]
      %v189 = vld [vmem:[%s1 + $0x1c] sm:$0xf]
      %v190 = vld [vmem:[%s165 + $0x20] sm:$0xf]
      %s191 = scalar_lea.vmem %s1, 32
      %v192 = vld [vmem:[%s191] sm:$0xf]
      %v193 = vld [vmem:[%s191 + $0x4] sm:$0xf]
      %v194 = vld [vmem:[%s191 + $0x8] sm:$0xf]
      %v195 = vld [vmem:[%s191 + $0xc] sm:$0xf]
      %v196 = vld [vmem:[%s191 + $0x10] sm:$0xf]
      %v197 = vld [vmem:[%s191 + $0x14] sm:$0xf]
      %v198 = vld [vmem:[%s191 + $0x18] sm:$0xf]
      %v199 = vld [vmem:[%s191 + $0x1c] sm:$0xf]
      %v209 = vunpack.c.l.b16 %v173
      %v210 = vunpack.c.l.b16 %v174
      %v211 = vunpack.c.l.b16 %v175
      %v212 = vunpack.c.l.b16 %v176
      %v213 = vunpack.c.l.b16 %v177
      %v214 = vunpack.c.l.b16 %v178
      %v215 = vunpack.c.l.b16 %v179
      %v216 = vunpack.c.l.b16 %v180
      %v217 = vunpack.c.l.b16 %v190
      %v218 = vpack.c.b16 %v210, %v209
      %v219 = vpack.c.b16 %v212, %v211
      %v220 = vpack.c.b16 %v214, %v213
      %v221 = vpack.c.b16 %v216, %v215
      %v222 = vpack.c.b16 %v217, %v217
      %vm223 = vsmask.f32 7424
      %v225 = vshrl.u32 %v218, 16
      %v227 = vshll.u32 %v218, 16
      %v229 = vrot.slane %v227, 1
      %v230 = vor.u32 %v225, %v229
      %v232 = vshll.u32 %v219, 16
      %v234 = vrot.slane %v232, 1
      %v235 = vsel %vm223, %v230, %v234
      %v236 = vshrl.u32 %v219, 16
      %v238 = vor.u32 %v236, %v234
      %v240 = vshll.u32 %v220, 16
      %v242 = vrot.slane %v240, 1
      %v243 = vsel %vm223, %v238, %v242
      %v244 = vshrl.u32 %v220, 16
      %v246 = vor.u32 %v244, %v242
      %v248 = vshll.u32 %v221, 16
      %v250 = vrot.slane %v248, 1
      %v251 = vsel %vm223, %v246, %v250
      %v252 = vshrl.u32 %v221, 16
      %v254 = vor.u32 %v252, %v250
      %v256 = vshll.u32 %v222, 16
      %v258 = vrot.slane %v256, 1
      %v259 = vsel %vm223, %v254, %v258
      %v260 = vshrl.u32 %v222, 16
      %v262 = vor.u32 %v260, %v258
      %v271 = vunpack.c.l.b16 %v192
      %v272 = vunpack.c.l.b16 %v193
      %v273 = vunpack.c.l.b16 %v194
      %v274 = vunpack.c.l.b16 %v195
      %v275 = vunpack.c.l.b16 %v196
      %v276 = vunpack.c.l.b16 %v197
      %v277 = vunpack.c.l.b16 %v198
      %v278 = vunpack.c.l.b16 %v199
      %v279 = vpack.c.b16 %v272, %v271
      %v280 = vpack.c.b16 %v274, %v273
      %v281 = vpack.c.b16 %v276, %v275
      %v282 = vpack.c.b16 %v278, %v277
      %vm287 = vcmask 523264
      %v289 = vsel %vm287, %v235, 0
      %v292 = vsel %vm287, %v243, 0
      %v295 = vsel %vm287, %v251, 0
      %v298 = vsel %vm287, %v259, 0
      %v301 = vsel %vm287, %v262, 0
      %303 = vmatpush.bf16.msra.mxu0 0
      %304 = vmatpush.bf16.msra.mxu0 0
      %305 = vmatpush.bf16.msra.mxu0 0
      %306 = vmatpush.bf16.msra.mxu0 0
      %307 = vmatpush.bf16.msra.mxu0 %v282
      %308 = vmatpush.bf16.msra.mxu0 %v281
      %309 = vmatpush.bf16.msra.mxu0 %v280
      %310 = vmatpush.bf16.msra.mxu0 %v279
      %311 = vmatmul.bf16.gmra.mxu0 %v289
      %v312 = vpop.f32.mrf.mxu0
      %v313 = vadd.f32 0.0, %v312
      %v314 = vpop.f32.mrf.mxu0
      %v315 = vadd.f32 0.0, %v314
      %316 = vmatmul.bf16.gmra.mxu0 %v292
      %v317 = vpop.f32.mrf.mxu0
      %v318 = vadd.f32 0.0, %v317
      %v319 = vpop.f32.mrf.mxu0
      %v320 = vadd.f32 0.0, %v319
      %321 = vmatmul.bf16.gmra.mxu0 %v295
      %v322 = vpop.f32.mrf.mxu0
      %v323 = vadd.f32 0.0, %v322
      %v324 = vpop.f32.mrf.mxu0
      %v325 = vadd.f32 0.0, %v324
      %326 = vmatmul.bf16.gmra.mxu0 %v298
      %v327 = vpop.f32.mrf.mxu0
      %v328 = vadd.f32 0.0, %v327
      %v329 = vpop.f32.mrf.mxu0
      %v330 = vadd.f32 0.0, %v329
      %331 = vmatmul.bf16.gmra.mxu0 %v301
      %v332 = vpop.f32.mrf.mxu0
      %v333 = vadd.f32 0.0, %v332
      %v334 = vpop.f32.mrf.mxu0
      %335 = vdwg.mxu0
      %v337 = vunpack.c.l.b16 %v181
      %v338 = vpack.c.b16 %v337, %v337
      %v347 = vunpack.c.l.b16 %v182
      %v348 = vunpack.c.l.b16 %v183
      %v349 = vunpack.c.l.b16 %v184
      %v350 = vunpack.c.l.b16 %v185
      %v351 = vunpack.c.l.b16 %v186
      %v352 = vunpack.c.l.b16 %v187
      %v353 = vunpack.c.l.b16 %v188
      %v354 = vunpack.c.l.b16 %v189
      %v355 = vpack.c.b16 %v348, %v347
      %v356 = vpack.c.b16 %v350, %v349
      %v357 = vpack.c.b16 %v352, %v351
      %v358 = vpack.c.b16 %v354, %v353
      %v363 = vsel %vm287, %v218, 0
      %v365 = vsel %vm287, %v219, 0
      %v367 = vsel %vm287, %v220, 0
      %v369 = vsel %vm287, %v221, 0
      %v372 = vsel %vm287, %v338, 0
      %374 = vmatpush.bf16.msra.mxu0 0
      %375 = vmatpush.bf16.msra.mxu0 0
      %376 = vmatpush.bf16.msra.mxu0 0
      %377 = vmatpush.bf16.msra.mxu0 0
      %378 = vmatpush.bf16.msra.mxu0 %v358
      %379 = vmatpush.bf16.msra.mxu0 %v357
      %380 = vmatpush.bf16.msra.mxu0 %v356
      %381 = vmatpush.bf16.msra.mxu0 %v355
      %382 = vmatmul.bf16.gmra.mxu0 %v363
      %v383 = vpop.f32.mrf.mxu0
      %v384 = vadd.f32 %v313, %v383
      %v385 = vpop.f32.mrf.mxu0
      %v386 = vadd.f32 %v315, %v385
      %387 = vmatmul.bf16.gmra.mxu0 %v365
      %v388 = vpop.f32.mrf.mxu0
      %v389 = vadd.f32 %v318, %v388
      %v390 = vpop.f32.mrf.mxu0
      %v391 = vadd.f32 %v320, %v390
      %392 = vmatmul.bf16.gmra.mxu0 %v367
      %v393 = vpop.f32.mrf.mxu0
      %v394 = vadd.f32 %v323, %v393
      %v395 = vpop.f32.mrf.mxu0
      %v396 = vadd.f32 %v325, %v395
      %397 = vmatmul.bf16.gmra.mxu0 %v369
      %v398 = vpop.f32.mrf.mxu0
      %v399 = vadd.f32 %v328, %v398
      %v400 = vpop.f32.mrf.mxu0
      %v401 = vadd.f32 %v330, %v400
      %402 = vmatmul.bf16.gmra.mxu0 %v372
      %v403 = vpop.f32.mrf.mxu0
      %v404 = vadd.f32 %v333, %v403
      %v405 = vpop.f32.mrf.mxu0
      %406 = vdwg.mxu0
      %v407 = vld [vmem:[%s165] sm:$0xe]
      %s408 = scalar_lea.vmem %s1, 64
      %v409 = vld [vmem:[%s408] sm:$0xf]
      %v410 = vld [vmem:[%s408 + $0x4] sm:$0xf]
      %v411 = vld [vmem:[%s408 + $0x8] sm:$0xf]
      %v412 = vld [vmem:[%s408 + $0xc] sm:$0xf]
      %v413 = vld [vmem:[%s408 + $0x10] sm:$0xf]
      %v414 = vld [vmem:[%s408 + $0x14] sm:$0xf]
      %v415 = vld [vmem:[%s408 + $0x18] sm:$0xf]
      %v416 = vld [vmem:[%s408 + $0x1c] sm:$0xf]
      %v418 = vunpack.c.l.b16 %v407
      %v419 = vpack.c.b16 %v210, %v418
      %vm420 = vcmask 1046528
      %v421 = vrot.slane %v419, 1
      %v422 = vrot.slane %v219, 1
      %v423 = vsel %vm420, %v421, %v422
      %v424 = vrot.slane %v220, 1
      %v425 = vsel %vm420, %v422, %v424
      %v426 = vrot.slane %v221, 1
      %v427 = vsel %vm420, %v424, %v426
      %v428 = vrot.slane %v222, 1
      %v429 = vsel %vm420, %v426, %v428
      %v438 = vunpack.c.l.b16 %v409
      %v439 = vunpack.c.l.b16 %v410
      %v440 = vunpack.c.l.b16 %v411
      %v441 = vunpack.c.l.b16 %v412
      %v442 = vunpack.c.l.b16 %v413
      %v443 = vunpack.c.l.b16 %v414
      %v444 = vunpack.c.l.b16 %v415
      %v445 = vunpack.c.l.b16 %v416
      %v446 = vpack.c.b16 %v439, %v438
      %v447 = vpack.c.b16 %v441, %v440
      %v448 = vpack.c.b16 %v443, %v442
      %v449 = vpack.c.b16 %v445, %v444
      %v455 = vsel %vm287, %v423, 0
      %v458 = vsel %vm287, %v425, 0
      %v461 = vsel %vm287, %v427, 0
      %v464 = vsel %vm287, %v429, 0
      %v467 = vsel %vm287, %v428, 0
      %469 = vmatpush.bf16.msra.mxu0 0
      %470 = vmatpush.bf16.msra.mxu0 0
      %471 = vmatpush.bf16.msra.mxu0 0
      %472 = vmatpush.bf16.msra.mxu0 0
      %473 = vmatpush.bf16.msra.mxu0 %v449
      %474 = vmatpush.bf16.msra.mxu0 %v448
      %475 = vmatpush.bf16.msra.mxu0 %v447
      %476 = vmatpush.bf16.msra.mxu0 %v446
      %477 = vmatmul.bf16.gmra.mxu0 %v455
      %v478 = vpop.f32.mrf.mxu0
      %v479 = vadd.f32 0.0, %v478
      %v480 = vpop.f32.mrf.mxu0
      %v481 = vadd.f32 0.0, %v480
      %482 = vmatmul.bf16.gmra.mxu0 %v458
      %v483 = vpop.f32.mrf.mxu0
      %v484 = vadd.f32 0.0, %v483
      %v485 = vpop.f32.mrf.mxu0
      %v486 = vadd.f32 0.0, %v485
      %487 = vmatmul.bf16.gmra.mxu0 %v461
      %v488 = vpop.f32.mrf.mxu0
      %v489 = vadd.f32 0.0, %v488
      %v490 = vpop.f32.mrf.mxu0
      %v491 = vadd.f32 0.0, %v490
      %492 = vmatmul.bf16.gmra.mxu0 %v464
      %v493 = vpop.f32.mrf.mxu0
      %v494 = vadd.f32 0.0, %v493
      %v495 = vpop.f32.mrf.mxu0
      %v496 = vadd.f32 0.0, %v495
      %497 = vmatmul.bf16.gmra.mxu0 %v467
      %v498 = vpop.f32.mrf.mxu0
      %v499 = vadd.f32 0.0, %v498
      %v500 = vpop.f32.mrf.mxu0
      %501 = vdwg.mxu0
      %v502 = vadd.f32 %v384, %v479
      %v503 = vadd.f32 %v386, %v481
      %v504 = vadd.f32 %v389, %v484
      %v505 = vadd.f32 %v391, %v486
      %v506 = vadd.f32 %v394, %v489
      %v507 = vadd.f32 %v396, %v491
      %v508 = vadd.f32 %v399, %v494
      %v509 = vadd.f32 %v401, %v496
      %v510 = vadd.f32 %v404, %v499
      %v511 = vld [vmem:[%s165 + $0x4] sm:$0xe]
      %v512 = vld [vmem:[%s165 + $0x8] sm:$0xf]
      %v513 = vld [vmem:[%s165 + $0xc] sm:$0xf]
      %v514 = vld [vmem:[%s165 + $0x10] sm:$0xf]
      %v515 = vld [vmem:[%s165 + $0x14] sm:$0xf]
      %v516 = vld [vmem:[%s165 + $0x18] sm:$0xf]
      %v517 = vld [vmem:[%s165 + $0x1c] sm:$0xf]
      %v518 = vld [vmem:[%s165 + $0x20] sm:$0xf]
      %v519 = vld [vmem:[%s165 + $0x24] sm:$0xf]
      %s520 = scalar_lea.vmem %s1, 96
      %v521 = vld [vmem:[%s520] sm:$0xf]
      %v522 = vld [vmem:[%s520 + $0x4] sm:$0xf]
      %v523 = vld [vmem:[%s520 + $0x8] sm:$0xf]
      %v524 = vld [vmem:[%s520 + $0xc] sm:$0xf]
      %v525 = vld [vmem:[%s520 + $0x10] sm:$0xf]
      %v526 = vld [vmem:[%s520 + $0x14] sm:$0xf]
      %v527 = vld [vmem:[%s520 + $0x18] sm:$0xf]
      %v528 = vld [vmem:[%s520 + $0x1c] sm:$0xf]
      %v538 = vunpack.c.l.b16 %v511
      %v539 = vunpack.c.l.b16 %v512
      %v540 = vunpack.c.l.b16 %v513
      %v541 = vunpack.c.l.b16 %v514
      %v542 = vunpack.c.l.b16 %v515
      %v543 = vunpack.c.l.b16 %v516
      %v544 = vunpack.c.l.b16 %v517
      %v545 = vunpack.c.l.b16 %v518
      %v546 = vunpack.c.l.b16 %v519
      %v547 = vpack.c.b16 %v539, %v538
      %v548 = vpack.c.b16 %v541, %v540
      %v549 = vpack.c.b16 %v543, %v542
      %v550 = vpack.c.b16 %v545, %v544
      %v551 = vpack.c.b16 %v546, %v546
      %v552 = vrot.slane %v547, 1
      %v553 = vrot.slane %v548, 1
      %v554 = vsel %vm420, %v552, %v553
      %v555 = vrot.slane %v549, 1
      %v556 = vsel %vm420, %v553, %v555
      %v557 = vrot.slane %v550, 1
      %v558 = vsel %vm420, %v555, %v557
      %v559 = vrot.slane %v551, 1
      %v560 = vsel %vm420, %v557, %v559
      %v569 = vunpack.c.l.b16 %v521
      %v570 = vunpack.c.l.b16 %v522
      %v571 = vunpack.c.l.b16 %v523
      %v572 = vunpack.c.l.b16 %v524
      %v573 = vunpack.c.l.b16 %v525
      %v574 = vunpack.c.l.b16 %v526
      %v575 = vunpack.c.l.b16 %v527
      %v576 = vunpack.c.l.b16 %v528
      %v577 = vpack.c.b16 %v570, %v569
      %v578 = vpack.c.b16 %v572, %v571
      %v579 = vpack.c.b16 %v574, %v573
      %v580 = vpack.c.b16 %v576, %v575
      %v586 = vsel %vm287, %v554, 0
      %v589 = vsel %vm287, %v556, 0
      %v592 = vsel %vm287, %v558, 0
      %v595 = vsel %vm287, %v560, 0
      %v598 = vsel %vm287, %v559, 0
      %600 = vmatpush.bf16.msra.mxu0 0
      %601 = vmatpush.bf16.msra.mxu0 0
      %602 = vmatpush.bf16.msra.mxu0 0
      %603 = vmatpush.bf16.msra.mxu0 0
      %604 = vmatpush.bf16.msra.mxu0 %v580
      %605 = vmatpush.bf16.msra.mxu0 %v579
      %606 = vmatpush.bf16.msra.mxu0 %v578
      %607 = vmatpush.bf16.msra.mxu0 %v577
      %608 = vmatmul.bf16.gmra.mxu0 %v586
      %v609 = vpop.f32.mrf.mxu0
      %v610 = vadd.f32 0.0, %v609
      %v611 = vpop.f32.mrf.mxu0
      %v612 = vadd.f32 0.0, %v611
      %613 = vmatmul.bf16.gmra.mxu0 %v589
      %v614 = vpop.f32.mrf.mxu0
      %v615 = vadd.f32 0.0, %v614
      %v616 = vpop.f32.mrf.mxu0
      %v617 = vadd.f32 0.0, %v616
      %618 = vmatmul.bf16.gmra.mxu0 %v592
      %v619 = vpop.f32.mrf.mxu0
      %v620 = vadd.f32 0.0, %v619
      %v621 = vpop.f32.mrf.mxu0
      %v622 = vadd.f32 0.0, %v621
      %623 = vmatmul.bf16.gmra.mxu0 %v595
      %v624 = vpop.f32.mrf.mxu0
      %v625 = vadd.f32 0.0, %v624
      %v626 = vpop.f32.mrf.mxu0
      %v627 = vadd.f32 0.0, %v626
      %628 = vmatmul.bf16.gmra.mxu0 %v598
      %v629 = vpop.f32.mrf.mxu0
      %v630 = vadd.f32 0.0, %v629
      %v631 = vpop.f32.mrf.mxu0
      %632 = vdwg.mxu0
      %v633 = vadd.f32 %v502, %v610
      %v634 = vadd.f32 %v503, %v612
      %v635 = vadd.f32 %v504, %v615
      %v636 = vadd.f32 %v505, %v617
      %v637 = vadd.f32 %v506, %v620
      %v638 = vadd.f32 %v507, %v622
      %v639 = vadd.f32 %v508, %v625
      %v640 = vadd.f32 %v509, %v627
      %v641 = vadd.f32 %v510, %v630
      %v642 = vld [vmem:[%s165 + $0x4] sm:$0xe]
      %v643 = vld [vmem:[%s165 + $0x8] sm:$0xf]
      %v644 = vld [vmem:[%s165 + $0xc] sm:$0xf]
      %v645 = vld [vmem:[%s165 + $0x10] sm:$0xf]
      %v646 = vld [vmem:[%s165 + $0x14] sm:$0xf]
      %v647 = vld [vmem:[%s165 + $0x18] sm:$0xf]
      %v648 = vld [vmem:[%s165 + $0x1c] sm:$0xf]
      %v649 = vld [vmem:[%s165 + $0x20] sm:$0xf]
      %v650 = vld [vmem:[%s165 + $0x24] sm:$0xf]
      %v651 = vld [vmem:[%s165 + $0x28] sm:$0x1]
      %s652 = scalar_lea.vmem %s1, 128
      %v653 = vld [vmem:[%s652] sm:$0xf]
      %v654 = vld [vmem:[%s652 + $0x4] sm:$0xf]
      %v655 = vld [vmem:[%s652 + $0x8] sm:$0xf]
      %v656 = vld [vmem:[%s652 + $0xc] sm:$0xf]
      %v657 = vld [vmem:[%s652 + $0x10] sm:$0xf]
      %v658 = vld [vmem:[%s652 + $0x14] sm:$0xf]
      %v659 = vld [vmem:[%s652 + $0x18] sm:$0xf]
      %v660 = vld [vmem:[%s652 + $0x1c] sm:$0xf]
      %v671 = vunpack.c.l.b16 %v642
      %v672 = vunpack.c.l.b16 %v643
      %v673 = vunpack.c.l.b16 %v644
      %v674 = vunpack.c.l.b16 %v645
      %v675 = vunpack.c.l.b16 %v646
      %v676 = vunpack.c.l.b16 %v647
      %v677 = vunpack.c.l.b16 %v648
      %v678 = vunpack.c.l.b16 %v649
      %v679 = vunpack.c.l.b16 %v650
      %v680 = vunpack.c.l.b16 %v651
      %v681 = vpack.c.b16 %v672, %v671
      %v682 = vpack.c.b16 %v674, %v673
      %v683 = vpack.c.b16 %v676, %v675
      %v684 = vpack.c.b16 %v678, %v677
      %v685 = vpack.c.b16 %v680, %v679
      %vm686 = vsmask.f32 6400
      %v688 = vshrl.u32 %v681, 16
      %v690 = vrot.slane %v688, 1
      %v691 = vshll.u32 %v681, 16
      %v693 = vrot.slane %v691, 2
      %v694 = vor.u32 %v690, %v693
      %v696 = vshrl.u32 %v682, 16
      %v698 = vrot.slane %v696, 1
      %v699 = vshll.u32 %v682, 16
      %v701 = vrot.slane %v699, 2
      %v702 = vor.u32 %v698, %v701
      %v703 = vsel %vm686, %v694, %v702
      %v705 = vshrl.u32 %v683, 16
      %v707 = vrot.slane %v705, 1
      %v708 = vshll.u32 %v683, 16
      %v710 = vrot.slane %v708, 2
      %v711 = vor.u32 %v707, %v710
      %v712 = vsel %vm686, %v702, %v711
      %v714 = vshrl.u32 %v684, 16
      %v716 = vrot.slane %v714, 1
      %v717 = vshll.u32 %v684, 16
      %v719 = vrot.slane %v717, 2
      %v720 = vor.u32 %v716, %v719
      %v721 = vsel %vm686, %v711, %v720
      %v723 = vshrl.u32 %v685, 16
      %v725 = vrot.slane %v723, 1
      %v726 = vshll.u32 %v685, 16
      %v728 = vrot.slane %v726, 2
      %v729 = vor.u32 %v725, %v728
      %v730 = vsel %vm686, %v720, %v729
      %v739 = vunpack.c.l.b16 %v653
      %v740 = vunpack.c.l.b16 %v654
      %v741 = vunpack.c.l.b16 %v655
      %v742 = vunpack.c.l.b16 %v656
      %v743 = vunpack.c.l.b16 %v657
      %v744 = vunpack.c.l.b16 %v658
      %v745 = vunpack.c.l.b16 %v659
      %v746 = vunpack.c.l.b16 %v660
      %v747 = vpack.c.b16 %v740, %v739
      %v748 = vpack.c.b16 %v742, %v741
      %v749 = vpack.c.b16 %v744, %v743
      %v750 = vpack.c.b16 %v746, %v745
      %v756 = vsel %vm287, %v703, 0
      %v759 = vsel %vm287, %v712, 0
      %v762 = vsel %vm287, %v721, 0
      %v765 = vsel %vm287, %v730, 0
      %v768 = vsel %vm287, %v729, 0
      %770 = vmatpush.bf16.msra.mxu0 0
      %771 = vmatpush.bf16.msra.mxu0 0
      %772 = vmatpush.bf16.msra.mxu0 0
      %773 = vmatpush.bf16.msra.mxu0 0
      %774 = vmatpush.bf16.msra.mxu0 %v750
      %775 = vmatpush.bf16.msra.mxu0 %v749
      %776 = vmatpush.bf16.msra.mxu0 %v748
      %777 = vmatpush.bf16.msra.mxu0 %v747
      %778 = vmatmul.bf16.gmra.mxu0 %v756
      %v779 = vpop.f32.mrf.mxu0
      %v780 = vadd.f32 0.0, %v779
      %v781 = vpop.f32.mrf.mxu0
      %v782 = vadd.f32 0.0, %v781
      %783 = vmatmul.bf16.gmra.mxu0 %v759
      %v784 = vpop.f32.mrf.mxu0
      %v785 = vadd.f32 0.0, %v784
      %v786 = vpop.f32.mrf.mxu0
      %v787 = vadd.f32 0.0, %v786
      %788 = vmatmul.bf16.gmra.mxu0 %v762
      %v789 = vpop.f32.mrf.mxu0
      %v790 = vadd.f32 0.0, %v789
      %v791 = vpop.f32.mrf.mxu0
      %v792 = vadd.f32 0.0, %v791
      %793 = vmatmul.bf16.gmra.mxu0 %v765
      %v794 = vpop.f32.mrf.mxu0
      %v795 = vadd.f32 0.0, %v794
      %v796 = vpop.f32.mrf.mxu0
      %v797 = vadd.f32 0.0, %v796
      %798 = vmatmul.bf16.gmra.mxu0 %v768
      %v799 = vpop.f32.mrf.mxu0
      %v800 = vadd.f32 0.0, %v799
      %v801 = vpop.f32.mrf.mxu0
      %802 = vdwg.mxu0
      %v803 = vadd.f32 %v633, %v780
      %v804 = vadd.f32 %v634, %v782
      %v805 = vadd.f32 %v635, %v785
      %v806 = vadd.f32 %v636, %v787
      %v807 = vadd.f32 %v637, %v790
      %v808 = vadd.f32 %v638, %v792
      %v809 = vadd.f32 %v639, %v795
      %v810 = vadd.f32 %v640, %v797
      %v811 = vadd.f32 %v641, %v800
      %v812 = vld [vmem:[%s165 + $0x4] sm:$0xc]
      %s813 = scalar_lea.vmem %s1, 160
      %v814 = vld [vmem:[%s813] sm:$0xf]
      %v815 = vld [vmem:[%s813 + $0x4] sm:$0xf]
      %v816 = vld [vmem:[%s813 + $0x8] sm:$0xf]
      %v817 = vld [vmem:[%s813 + $0xc] sm:$0xf]
      %v818 = vld [vmem:[%s813 + $0x10] sm:$0xf]
      %v819 = vld [vmem:[%s813 + $0x14] sm:$0xf]
      %v820 = vld [vmem:[%s813 + $0x18] sm:$0xf]
      %v821 = vld [vmem:[%s813 + $0x1c] sm:$0xf]
      %v823 = vunpack.c.l.b16 %v812
      %v824 = vpack.c.b16 %v672, %v823
      %vm825 = vcmask 1045504
      %v826 = vrot.slane %v824, 2
      %v827 = vrot.slane %v682, 2
      %v828 = vsel %vm825, %v826, %v827
      %v829 = vrot.slane %v683, 2
      %v830 = vsel %vm825, %v827, %v829
      %v831 = vrot.slane %v684, 2
      %v832 = vsel %vm825, %v829, %v831
      %v833 = vrot.slane %v685, 2
      %v834 = vsel %vm825, %v831, %v833
      %v843 = vunpack.c.l.b16 %v814
      %v844 = vunpack.c.l.b16 %v815
      %v845 = vunpack.c.l.b16 %v816
      %v846 = vunpack.c.l.b16 %v817
      %v847 = vunpack.c.l.b16 %v818
      %v848 = vunpack.c.l.b16 %v819
      %v849 = vunpack.c.l.b16 %v820
      %v850 = vunpack.c.l.b16 %v821
      %v851 = vpack.c.b16 %v844, %v843
      %v852 = vpack.c.b16 %v846, %v845
      %v853 = vpack.c.b16 %v848, %v847
      %v854 = vpack.c.b16 %v850, %v849
      %v860 = vsel %vm287, %v828, 0
      %v863 = vsel %vm287, %v830, 0
      %v866 = vsel %vm287, %v832, 0
      %v869 = vsel %vm287, %v834, 0
      %v872 = vsel %vm287, %v833, 0
      %874 = vmatpush.bf16.msra.mxu0 0
      %875 = vmatpush.bf16.msra.mxu0 0
      %876 = vmatpush.bf16.msra.mxu0 0
      %877 = vmatpush.bf16.msra.mxu0 0
      %878 = vmatpush.bf16.msra.mxu0 %v854
      %879 = vmatpush.bf16.msra.mxu0 %v853
      %880 = vmatpush.bf16.msra.mxu0 %v852
      %881 = vmatpush.bf16.msra.mxu0 %v851
      %882 = vmatmul.bf16.gmra.mxu0 %v860
      %v883 = vpop.f32.mrf.mxu0
      %v884 = vadd.f32 0.0, %v883
      %v885 = vpop.f32.mrf.mxu0
      %v886 = vadd.f32 0.0, %v885
      %887 = vmatmul.bf16.gmra.mxu0 %v863
      %v888 = vpop.f32.mrf.mxu0
      %v889 = vadd.f32 0.0, %v888
      %v890 = vpop.f32.mrf.mxu0
      %v891 = vadd.f32 0.0, %v890
      %892 = vmatmul.bf16.gmra.mxu0 %v866
      %v893 = vpop.f32.mrf.mxu0
      %v894 = vadd.f32 0.0, %v893
      %v895 = vpop.f32.mrf.mxu0
      %v896 = vadd.f32 0.0, %v895
      %897 = vmatmul.bf16.gmra.mxu0 %v869
      %v898 = vpop.f32.mrf.mxu0
      %v899 = vadd.f32 0.0, %v898
      %v900 = vpop.f32.mrf.mxu0
      %v901 = vadd.f32 0.0, %v900
      %902 = vmatmul.bf16.gmra.mxu0 %v872
      %v903 = vpop.f32.mrf.mxu0
      %v904 = vadd.f32 0.0, %v903
      %v905 = vpop.f32.mrf.mxu0
      %906 = vdwg.mxu0
      %v907 = vadd.f32 %v803, %v884
      %v908 = vadd.f32 %v804, %v886
      %v909 = vadd.f32 %v805, %v889
      %v910 = vadd.f32 %v806, %v891
      %v911 = vadd.f32 %v807, %v894
      %v912 = vadd.f32 %v808, %v896
      %v913 = vadd.f32 %v809, %v899
      %v914 = vadd.f32 %v810, %v901
      %v915 = vadd.f32 %v811, %v904
      %v916 = vld [vmem:[%s165 + $0x8] sm:$0xc]
      %v917 = vld [vmem:[%s165 + $0xc] sm:$0xf]
      %v918 = vld [vmem:[%s165 + $0x10] sm:$0xf]
      %v919 = vld [vmem:[%s165 + $0x14] sm:$0xf]
      %v920 = vld [vmem:[%s165 + $0x18] sm:$0xf]
      %v921 = vld [vmem:[%s165 + $0x1c] sm:$0xf]
      %v922 = vld [vmem:[%s165 + $0x20] sm:$0xf]
      %v923 = vld [vmem:[%s165 + $0x24] sm:$0xf]
      %v924 = vld [vmem:[%s165 + $0x28] sm:$0xf]
      %v925 = vld [vmem:[%s165 + $0x2c] sm:$0x1]
      %s926 = scalar_lea.vmem %s1, 192
      %v927 = vld [vmem:[%s926] sm:$0xf]
      %v928 = vld [vmem:[%s926 + $0x4] sm:$0xf]
      %v929 = vld [vmem:[%s926 + $0x8] sm:$0xf]
      %v930 = vld [vmem:[%s926 + $0xc] sm:$0xf]
      %v931 = vld [vmem:[%s926 + $0x10] sm:$0xf]
      %v932 = vld [vmem:[%s926 + $0x14] sm:$0xf]
      %v933 = vld [vmem:[%s926 + $0x18] sm:$0xf]
      %v934 = vld [vmem:[%s926 + $0x1c] sm:$0xf]
      %v945 = vunpack.c.l.b16 %v916
      %v946 = vunpack.c.l.b16 %v917
      %v947 = vunpack.c.l.b16 %v918
      %v948 = vunpack.c.l.b16 %v919
      %v949 = vunpack.c.l.b16 %v920
      %v950 = vunpack.c.l.b16 %v921
      %v951 = vunpack.c.l.b16 %v922
      %v952 = vunpack.c.l.b16 %v923
      %v953 = vunpack.c.l.b16 %v924
      %v954 = vunpack.c.l.b16 %v925
      %v955 = vpack.c.b16 %v946, %v945
      %v956 = vpack.c.b16 %v948, %v947
      %v957 = vpack.c.b16 %v950, %v949
      %v958 = vpack.c.b16 %v952, %v951
      %v959 = vpack.c.b16 %v954, %v953
      %v960 = vrot.slane %v955, 2
      %v961 = vrot.slane %v956, 2
      %v962 = vsel %vm825, %v960, %v961
      %v963 = vrot.slane %v957, 2
      %v964 = vsel %vm825, %v961, %v963
      %v965 = vrot.slane %v958, 2
      %v966 = vsel %vm825, %v963, %v965
      %v967 = vrot.slane %v959, 2
      %v968 = vsel %vm825, %v965, %v967
      %v977 = vunpack.c.l.b16 %v927
      %v978 = vunpack.c.l.b16 %v928
      %v979 = vunpack.c.l.b16 %v929
      %v980 = vunpack.c.l.b16 %v930
      %v981 = vunpack.c.l.b16 %v931
      %v982 = vunpack.c.l.b16 %v932
      %v983 = vunpack.c.l.b16 %v933
      %v984 = vunpack.c.l.b16 %v934
      %v985 = vpack.c.b16 %v978, %v977
      %v986 = vpack.c.b16 %v980, %v979
      %v987 = vpack.c.b16 %v982, %v981
      %v988 = vpack.c.b16 %v984, %v983
      %v994 = vsel %vm287, %v962, 0
      %v997 = vsel %vm287, %v964, 0
      %v1000 = vsel %vm287, %v966, 0
      %v1003 = vsel %vm287, %v968, 0
      %v1006 = vsel %vm287, %v967, 0
      %1008 = vmatpush.bf16.msra.mxu0 0
      %1009 = vmatpush.bf16.msra.mxu0 0
      %1010 = vmatpush.bf16.msra.mxu0 0
      %1011 = vmatpush.bf16.msra.mxu0 0
      %1012 = vmatpush.bf16.msra.mxu0 %v988
      %1013 = vmatpush.bf16.msra.mxu0 %v987
      %1014 = vmatpush.bf16.msra.mxu0 %v986
      %1015 = vmatpush.bf16.msra.mxu0 %v985
      %1016 = vmatmul.bf16.gmra.mxu0 %v994
      %v1017 = vpop.f32.mrf.mxu0
      %v1018 = vadd.f32 0.0, %v1017
      %v1019 = vpop.f32.mrf.mxu0
      %v1020 = vadd.f32 0.0, %v1019
      %1021 = vmatmul.bf16.gmra.mxu0 %v997
      %v1022 = vpop.f32.mrf.mxu0
      %v1023 = vadd.f32 0.0, %v1022
      %v1024 = vpop.f32.mrf.mxu0
      %v1025 = vadd.f32 0.0, %v1024
      %1026 = vmatmul.bf16.gmra.mxu0 %v1000
      %v1027 = vpop.f32.mrf.mxu0
      %v1028 = vadd.f32 0.0, %v1027
      %v1029 = vpop.f32.mrf.mxu0
      %v1030 = vadd.f32 0.0, %v1029
      %1031 = vmatmul.bf16.gmra.mxu0 %v1003
      %v1032 = vpop.f32.mrf.mxu0
      %v1033 = vadd.f32 0.0, %v1032
      %v1034 = vpop.f32.mrf.mxu0
      %v1035 = vadd.f32 0.0, %v1034
      %1036 = vmatmul.bf16.gmra.mxu0 %v1006
      %v1037 = vpop.f32.mrf.mxu0
      %v1038 = vadd.f32 0.0, %v1037
      %v1039 = vpop.f32.mrf.mxu0
      %1040 = vdwg.mxu0
      %v1041 = vadd.f32 %v907, %v1018
      %v1042 = vadd.f32 %v908, %v1020
      %v1043 = vadd.f32 %v909, %v1023
      %v1044 = vadd.f32 %v910, %v1025
      %v1045 = vadd.f32 %v911, %v1028
      %v1046 = vadd.f32 %v912, %v1030
      %v1047 = vadd.f32 %v913, %v1033
      %v1048 = vadd.f32 %v914, %v1035
      %v1049 = vadd.f32 %v915, %v1038
      %v1050 = vld [vmem:[%s165 + $0x2c] sm:$0x3]
      %s1051 = scalar_lea.vmem %s1, 224
      %v1052 = vld [vmem:[%s1051] sm:$0xf]
      %v1053 = vld [vmem:[%s1051 + $0x4] sm:$0xf]
      %v1054 = vld [vmem:[%s1051 + $0x8] sm:$0xf]
      %v1055 = vld [vmem:[%s1051 + $0xc] sm:$0xf]
      %v1056 = vld [vmem:[%s1051 + $0x10] sm:$0xf]
      %v1057 = vld [vmem:[%s1051 + $0x14] sm:$0xf]
      %v1058 = vld [vmem:[%s1051 + $0x18] sm:$0xf]
      %v1059 = vld [vmem:[%s1051 + $0x1c] sm:$0xf]
      %v1061 = vunpack.c.l.b16 %v1050
      %v1062 = vpack.c.b16 %v1061, %v953
      %vm1063 = vsmask.f32 5376
      %v1065 = vshrl.u32 %v955, 16
      %v1067 = vrot.slane %v1065, 2
      %v1068 = vshll.u32 %v955, 16
      %v1070 = vrot.slane %v1068, 3
      %v1071 = vor.u32 %v1067, %v1070
      %v1073 = vshrl.u32 %v956, 16
      %v1075 = vrot.slane %v1073, 2
      %v1076 = vshll.u32 %v956, 16
      %v1078 = vrot.slane %v1076, 3
      %v1079 = vor.u32 %v1075, %v1078
      %v1080 = vsel %vm1063, %v1071, %v1079
      %v1082 = vshrl.u32 %v957, 16
      %v1084 = vrot.slane %v1082, 2
      %v1085 = vshll.u32 %v957, 16
      %v1087 = vrot.slane %v1085, 3
      %v1088 = vor.u32 %v1084, %v1087
      %v1089 = vsel %vm1063, %v1079, %v1088
      %v1091 = vshrl.u32 %v958, 16
      %v1093 = vrot.slane %v1091, 2
      %v1094 = vshll.u32 %v958, 16
      %v1096 = vrot.slane %v1094, 3
      %v1097 = vor.u32 %v1093, %v1096
      %v1098 = vsel %vm1063, %v1088, %v1097
      %v1100 = vshrl.u32 %v1062, 16
      %v1102 = vrot.slane %v1100, 2
      %v1103 = vshll.u32 %v1062, 16
      %v1105 = vrot.slane %v1103, 3
      %v1106 = vor.u32 %v1102, %v1105
      %v1107 = vsel %vm1063, %v1097, %v1106
      %v1116 = vunpack.c.l.b16 %v1052
      %v1117 = vunpack.c.l.b16 %v1053
      %v1118 = vunpack.c.l.b16 %v1054
      %v1119 = vunpack.c.l.b16 %v1055
      %v1120 = vunpack.c.l.b16 %v1056
      %v1121 = vunpack.c.l.b16 %v1057
      %v1122 = vunpack.c.l.b16 %v1058
      %v1123 = vunpack.c.l.b16 %v1059
      %v1124 = vpack.c.b16 %v1117, %v1116
      %v1125 = vpack.c.b16 %v1119, %v1118
      %v1126 = vpack.c.b16 %v1121, %v1120
      %v1127 = vpack.c.b16 %v1123, %v1122
      %v1133 = vsel %vm287, %v1080, 0
      %v1136 = vsel %vm287, %v1089, 0
      %v1139 = vsel %vm287, %v1098, 0
      %v1142 = vsel %vm287, %v1107, 0
      %v1145 = vsel %vm287, %v1106, 0
      %1147 = vmatpush.bf16.msra.mxu0 0
      %1148 = vmatpush.bf16.msra.mxu0 0
      %1149 = vmatpush.bf16.msra.mxu0 0
      %1150 = vmatpush.bf16.msra.mxu0 0
      %1151 = vmatpush.bf16.msra.mxu0 %v1127
      %1152 = vmatpush.bf16.msra.mxu0 %v1126
      %1153 = vmatpush.bf16.msra.mxu0 %v1125
      %1154 = vmatpush.bf16.msra.mxu0 %v1124
      %1155 = vmatmul.bf16.gmra.mxu0 %v1133
      %v1156 = vpop.f32.mrf.mxu0
      %v1157 = vadd.f32 0.0, %v1156
      %v1158 = vpop.f32.mrf.mxu0
      %v1159 = vadd.f32 0.0, %v1158
      %1160 = vmatmul.bf16.gmra.mxu0 %v1136
      %v1161 = vpop.f32.mrf.mxu0
      %v1162 = vadd.f32 0.0, %v1161
      %v1163 = vpop.f32.mrf.mxu0
      %v1164 = vadd.f32 0.0, %v1163
      %1165 = vmatmul.bf16.gmra.mxu0 %v1139
      %v1166 = vpop.f32.mrf.mxu0
      %v1167 = vadd.f32 0.0, %v1166
      %v1168 = vpop.f32.mrf.mxu0
      %v1169 = vadd.f32 0.0, %v1168
      %1170 = vmatmul.bf16.gmra.mxu0 %v1142
      %v1171 = vpop.f32.mrf.mxu0
      %v1172 = vadd.f32 0.0, %v1171
      %v1173 = vpop.f32.mrf.mxu0
      %v1174 = vadd.f32 0.0, %v1173
      %1175 = vmatmul.bf16.gmra.mxu0 %v1145
      %v1176 = vpop.f32.mrf.mxu0
      %v1177 = vadd.f32 0.0, %v1176
      %v1178 = vpop.f32.mrf.mxu0
      %1179 = vdwg.mxu0
      %v1180 = vadd.f32 %v1041, %v1157
      %v1181 = vadd.f32 %v1042, %v1159
      %v1182 = vadd.f32 %v1043, %v1162
      %v1183 = vadd.f32 %v1044, %v1164
      %v1184 = vadd.f32 %v1045, %v1167
      %v1185 = vadd.f32 %v1046, %v1169
      %v1186 = vadd.f32 %v1047, %v1172
      %v1187 = vadd.f32 %v1048, %v1174
      %v1188 = vadd.f32 %v1049, %v1177
      %v1189 = vld [vmem:[%s165 + $0x8] sm:$0x8]
      %s1190 = scalar_lea.vmem %s1, 256
      %v1191 = vld [vmem:[%s1190] sm:$0xf]
      %v1192 = vld [vmem:[%s1190 + $0x4] sm:$0xf]
      %v1193 = vld [vmem:[%s1190 + $0x8] sm:$0xf]
      %v1194 = vld [vmem:[%s1190 + $0xc] sm:$0xf]
      %v1195 = vld [vmem:[%s1190 + $0x10] sm:$0xf]
      %v1196 = vld [vmem:[%s1190 + $0x14] sm:$0xf]
      %v1197 = vld [vmem:[%s1190 + $0x18] sm:$0xf]
      %v1198 = vld [vmem:[%s1190 + $0x1c] sm:$0xf]
      %v1200 = vunpack.c.l.b16 %v1189
      %v1201 = vpack.c.b16 %v946, %v1200
      %vm1202 = vcmask 1044480
      %v1203 = vrot.slane %v1201, 3
      %v1204 = vrot.slane %v956, 3
      %v1205 = vsel %vm1202, %v1203, %v1204
      %v1206 = vrot.slane %v957, 3
      %v1207 = vsel %vm1202, %v1204, %v1206
      %v1208 = vrot.slane %v958, 3
      %v1209 = vsel %vm1202, %v1206, %v1208
      %v1210 = vrot.slane %v1062, 3
      %v1211 = vsel %vm1202, %v1208, %v1210
      %v1220 = vunpack.c.l.b16 %v1191
      %v1221 = vunpack.c.l.b16 %v1192
      %v1222 = vunpack.c.l.b16 %v1193
      %v1223 = vunpack.c.l.b16 %v1194
      %v1224 = vunpack.c.l.b16 %v1195
      %v1225 = vunpack.c.l.b16 %v1196
      %v1226 = vunpack.c.l.b16 %v1197
      %v1227 = vunpack.c.l.b16 %v1198
      %v1228 = vpack.c.b16 %v1221, %v1220
      %v1229 = vpack.c.b16 %v1223, %v1222
      %v1230 = vpack.c.b16 %v1225, %v1224
      %v1231 = vpack.c.b16 %v1227, %v1226
      %v1237 = vsel %vm287, %v1205, 0
      %v1240 = vsel %vm287, %v1207, 0
      %v1243 = vsel %vm287, %v1209, 0
      %v1246 = vsel %vm287, %v1211, 0
      %v1249 = vsel %vm287, %v1210, 0
      %1251 = vmatpush.bf16.msra.mxu0 0
      %1252 = vmatpush.bf16.msra.mxu0 0
      %1253 = vmatpush.bf16.msra.mxu0 0
      %1254 = vmatpush.bf16.msra.mxu0 0
      %1255 = vmatpush.bf16.msra.mxu0 %v1231
      %1256 = vmatpush.bf16.msra.mxu0 %v1230
      %1257 = vmatpush.bf16.msra.mxu0 %v1229
      %1258 = vmatpush.bf16.msra.mxu0 %v1228
      %1259 = vmatmul.bf16.gmra.mxu0 %v1237
      %v1260 = vpop.f32.mrf.mxu0
      %v1261 = vadd.f32 0.0, %v1260
      %v1262 = vpop.f32.mrf.mxu0
      %v1263 = vadd.f32 0.0, %v1262
      %1264 = vmatmul.bf16.gmra.mxu0 %v1240
      %v1265 = vpop.f32.mrf.mxu0
      %v1266 = vadd.f32 0.0, %v1265
      %v1267 = vpop.f32.mrf.mxu0
      %v1268 = vadd.f32 0.0, %v1267
      %1269 = vmatmul.bf16.gmra.mxu0 %v1243
      %v1270 = vpop.f32.mrf.mxu0
      %v1271 = vadd.f32 0.0, %v1270
      %v1272 = vpop.f32.mrf.mxu0
      %v1273 = vadd.f32 0.0, %v1272
      %1274 = vmatmul.bf16.gmra.mxu0 %v1246
      %v1275 = vpop.f32.mrf.mxu0
      %v1276 = vadd.f32 0.0, %v1275
      %v1277 = vpop.f32.mrf.mxu0
      %v1278 = vadd.f32 0.0, %v1277
      %1279 = vmatmul.bf16.gmra.mxu0 %v1249
      %v1280 = vpop.f32.mrf.mxu0
      %v1281 = vadd.f32 0.0, %v1280
      %v1282 = vpop.f32.mrf.mxu0
      %1283 = vdwg.mxu0
      %v1284 = vadd.f32 %v1180, %v1261
      %v1285 = vadd.f32 %v1181, %v1263
      %v1286 = vadd.f32 %v1182, %v1266
      %v1287 = vadd.f32 %v1183, %v1268
      %v1288 = vadd.f32 %v1184, %v1271
      %v1289 = vadd.f32 %v1185, %v1273
      %v1290 = vadd.f32 %v1186, %v1276
      %v1291 = vadd.f32 %v1187, %v1278
      %v1292 = vadd.f32 %v1188, %v1281
      %v1294 = vperm.slane %v172, 0
      %v1296 = vadd.f32 %v1284, %v1294
      %v1297 = vadd.f32 %v1285, %v1294
      %v1298 = vadd.f32 %v1286, %v1294
      %v1299 = vadd.f32 %v1287, %v1294
      %v1300 = vadd.f32 %v1288, %v1294
      %v1301 = vadd.f32 %v1289, %v1294
      %v1302 = vadd.f32 %v1290, %v1294
      %v1303 = vadd.f32 %v1291, %v1294
      %v1304 = vadd.f32 %v1292, %v1294
      %v1305 = vmax.f32 %v1296, 0.0
      %v1306 = vmax.f32 %v1297, 0.0
      %v1307 = vmax.f32 %v1298, 0.0
      %v1308 = vmax.f32 %v1299, 0.0
      %v1309 = vmax.f32 %v1300, 0.0
      %v1310 = vmax.f32 %v1301, 0.0
      %v1311 = vmax.f32 %v1302, 0.0
      %v1312 = vmax.f32 %v1303, 0.0
      %v1313 = vmax.f32 %v1304, 0.0
      %v1314 = vpack.c.bf16 %v1305, %v1305
      %v1315 = vpack.c.bf16 %v1306, %v1306
      %v1316 = vpack.c.bf16 %v1307, %v1307
      %v1317 = vpack.c.bf16 %v1308, %v1308
      %v1318 = vpack.c.bf16 %v1309, %v1309
      %v1319 = vpack.c.bf16 %v1310, %v1310
      %v1320 = vpack.c.bf16 %v1311, %v1311
      %v1321 = vpack.c.bf16 %v1312, %v1312
      %v1322 = vpack.c.bf16 %v1313, %v1313
      %vm1323 = vcmask 519168
      %1324 = vst.msk [vmem:[%s170] sm:$0xf] %vm1323, %v1314
      %1325 = vst.msk [vmem:[%s170 + $0x4] sm:$0xf] %vm1323, %v1315
      %1326 = vst.msk [vmem:[%s170 + $0x8] sm:$0xf] %vm1323, %v1316
      %1327 = vst.msk [vmem:[%s170 + $0xc] sm:$0xf] %vm1323, %v1317
      %1328 = vst.msk [vmem:[%s170 + $0x10] sm:$0xf] %vm1323, %v1318
      %1329 = vst.msk [vmem:[%s170 + $0x14] sm:$0xf] %vm1323, %v1319
      %1330 = vst.msk [vmem:[%s170 + $0x18] sm:$0xf] %vm1323, %v1320
      %1331 = vst.msk [vmem:[%s170 + $0x1c] sm:$0xf] %vm1323, %v1321
      %vm1332 = vcmask 518144
      %1333 = vst.msk [vmem:[%s170 + $0x20] sm:$0x7] %vm1332, %v1322
      %p1334 = scmp.lt.s32.totalorder %s14, 1
      %s1335 = scalar_select %p1334, %s14, 1
      %s1336 = smul.addr %s1335, 9
      %s1337 = smul.addr %s1336, 4
      %s1338 = scalar_lea.vmem %s3, %s1337
      // Predicated region
      $region33: #{da2qn_forward.6} parent=31 // pred_check
        %p1339 = pneg %p100
      $region34: #{da2qn_forward.6} parent=31 // pred_check_branch
        %1341 = sbr.rel (%p1339) target = $region36
      $region35: #{da2qn_forward.6} parent=31 // pred_region
        _
      $region36: #{da2qn_forward.6} parent=31 // pred_fallthru
        _
    $region32: #{da2qn_forward.6} parent=5 // pred_fallthru
      _
    %p1342 = scmp.le.s32.totalorder 2, %s9
    // Predicated region
    $region37: #{da2qn_forward.6} parent=5 // pred_check
      %p1343 = pneg %p1342
    $region38: #{da2qn_forward.6} parent=5 // pred_check_branch
      %1345 = sbr.rel (%p1343) target = $region40
    $region39: #{da2qn_forward.6} parent=5 // pred_region
      %s1346 = ssub.s32 %s9, 2
      // Predicated region
      $region41: #{da2qn_forward.6} parent=39 // pred_check
        %p1347 = pneg %p106
      $region42: #{da2qn_forward.6} parent=39 // pred_check_branch
        %1349 = sbr.rel (%p1347) target = $region44
      $region43: #{da2qn_forward.6} parent=39 // pred_region
        %p1350 = scmp.lt.s32.totalorder %s15, 1
        %s1351 = scalar_select %p1350, %s15, 1
        %s1352 = smul.addr %s1351, 9
        %s1353 = smul.addr %s1352, 4
        %s1354 = scalar_lea.vmem %s3, %s1353
      $region44: #{da2qn_forward.6} parent=39 // pred_fallthru
        _
    $region40: #{da2qn_forward.6} parent=5 // pred_fallthru
      _
  $region6: #{da2qn_forward.6} parent=0 // loop_footer
    %s13 = sadd.s32 1, %s9
  $region7: #{da2qn_forward.6} parent=0 // loop_footer_branch
    %8 = sbr.rel target = $region3
  $region8: #{da2qn_forward.6} parent=0 // loop_exit
    _

// kernel: da2qn_forward.7
$region0: #{da2qn_forward.7}
  #allocation0 [shape = 'u32[]', space=smem, size = 0x4, offset = 0x4, fixed_abs, tag = 'smem constant byte address 0x4 - core index']
  #allocation1 [shape = 'u32[72,128]{1,0:T(1,128)}', space=vmem, size = 0x9000, scoped, tag = 'internal scratch']
  #allocation2 [shape = 'f32[1,64]{1,0:T(1,128)}', space=vmem, size = 0x200, scoped, tag = 'scratch operand']
  %s0 = inlined_call_operand.vmem [shape: bf16[2,49,64], index: 0, kind: input, shape index: {}]
  %s1 = inlined_call_operand.vmem [shape: f32[2,1,8], index: 1, kind: input, shape index: {}]
  %s2 = inlined_call_operand.vmem [shape: f32[64,96], index: 2, kind: input, shape index: {}]
  %s3 = inlined_call_operand.vmem [shape: f32[1,96], index: 3, kind: input, shape index: {}]
  %s4 = inlined_call_operand.vmem [shape: f32[32,64], index: 4, kind: input, shape index: {}]
  %s5 = inlined_call_operand.vmem [shape: f32[1,64], index: 5, kind: input, shape index: {}]
  %s6 = inlined_call_operand.vmem [shape: f32[32,32], index: 6, kind: input, shape index: {}]
  %s7 = inlined_call_operand.vmem [shape: f32[1,32], index: 7, kind: input, shape index: {}]
  %s8 = inlined_call_operand.vmem [shape: f32[8,32], index: 8, kind: input, shape index: {}]
  %s9 = inlined_call_operand.vmem [shape: f32[1,32], index: 9, kind: input, shape index: {}]
  %s10 = inlined_call_operand.vmem [shape: f32[64,512], index: 10, kind: input, shape index: {}]
  %s11 = inlined_call_operand.vmem [shape: f32[1,512], index: 11, kind: input, shape index: {}]
  %s12 = inlined_call_operand.vmem [shape: f32[512,18], index: 12, kind: input, shape index: {}]
  %s13 = inlined_call_operand.vmem [shape: f32[8,18], index: 13, kind: input, shape index: {}]
  %s14 = inlined_call_operand.vmem [shape: f32[1,18], index: 14, kind: input, shape index: {}]
  %s15 = inlined_call_operand.hbm [shape: f32[2,1,18], index: 15, kind: output, shape index: {0}]
  %s16 = inlined_call_operand.hbm [shape: f32[2,1,49], index: 16, kind: output, shape index: {1}]
  %17 = xla_tuple %s15, %s16
  %s18 = sld [smem:[#allocation0]]
  $region101: #{da2qn_forward.7} parent=0
    _
  %s20 = ssub.s32 1, %s18
  %s21 = scalar_select 0, %s20, %s18
  $region1: #{da2qn_forward.7} parent=0
    #allocation3 [shape = 'u8[1024]{0}', space=vmem, size = 0x400, scoped, tag = 'output window, operand 0']
    #allocation4 [shape = 's32[2]{0}', space=sflag, size = 0x8, scoped, tag = 'scoped memory for da2qn_forward.7']
    #allocation5 [shape = 'u8[1024]{0}', space=vmem, size = 0x400, scoped, tag = 'output window, operand 1']
    #allocation6 [shape = 's32[2]{0}', space=sflag, size = 0x8, scoped, tag = 'scoped memory for da2qn_forward.7']
    %22 = vsyncpa [#allocation4], 0
    %s23 = scalar_lea.sflag [#allocation4], 1
    %24 = vsyncpa %s23, 0
    %25 = vsyncpa [#allocation6], 0
    %s26 = scalar_lea.sflag [#allocation6], 1
    %27 = vsyncpa %s26, 0
    loop: start=0, step=1, limit=4
    $region2: #{da2qn_forward.7} parent=1 // loop_pre_header
      _
    $region3: #{da2qn_forward.7} parent=1 // loop_header
      %s29 = sphi 0, %s33
      %p30 = scmp.ge.s32.totalorder %s29, 4
      %s39 = sphi 0, %s41
      %s42 = sphi 0, %s39
      %s43 = sphi 0, %s42
      %s59 = sphi 0, %s43
      %s65 = sphi 0, %s67
      %s68 = sphi 0, %s65
      %s69 = sphi 0, %s68
      %s85 = sphi 0, %s69
      %s89 = sphi 0, %s89
      %s91 = sphi 0, %s89
      %s92 = sphi 0, %s91
      %s106 = sphi 0, %s92
      %s110 = sphi 0, %s110
      %s112 = sphi 0, %s110
      %s113 = sphi 0, %s112
      %s127 = sphi 0, %s113
      %s131 = sphi 0, %s131
      %s133 = sphi 0, %s131
      %s134 = sphi 0, %s133
      %s148 = sphi 0, %s134
      %s152 = sphi 0, %s152
      %s154 = sphi 0, %s152
      %s155 = sphi 0, %s154
      %s169 = sphi 0, %s155
      %s173 = sphi 0, %s173
      %s175 = sphi 0, %s173
      %s176 = sphi 0, %s175
      %s190 = sphi 0, %s176
      %s194 = sphi 0, %s194
      %s196 = sphi 0, %s194
      %s197 = sphi 0, %s196
      %s211 = sphi 0, %s197
      %s215 = sphi 0, %s215
      %s217 = sphi 0, %s215
      %s218 = sphi 0, %s217
      %s232 = sphi 0, %s218
      %s236 = sphi 0, %s236
      %s238 = sphi 0, %s236
      %s239 = sphi 0, %s238
      %s253 = sphi 0, %s239
      %s257 = sphi 0, %s257
      %s259 = sphi 0, %s257
      %s260 = sphi 0, %s259
      %s274 = sphi 0, %s260
      %s278 = sphi 0, %s278
      %s280 = sphi 0, %s278
      %s281 = sphi 0, %s280
      %s295 = sphi 0, %s281
      %s299 = sphi 0, %s299
      %s301 = sphi 0, %s299
      %s302 = sphi 0, %s301
      %s316 = sphi 0, %s302
      %s320 = sphi 0, %s320
      %s322 = sphi 0, %s320
      %s323 = sphi 0, %s322
      %s337 = sphi 0, %s323
      %s341 = sphi 0, %s341
      %s343 = sphi 0, %s341
      %s344 = sphi 0, %s343
      %s358 = sphi 0, %s344
      %s364 = sphi 0, %s366
      %s367 = sphi 0, %s364
      %s368 = sphi 0, %s367
      %s384 = sphi 0, %s368
      %s390 = sphi 0, %s392
      %s393 = sphi 0, %s390
      %s394 = sphi 0, %s393
      %s410 = sphi 0, %s394
    $region4: #{da2qn_forward.7} parent=1 // loop_header_branch
      %32 = sbr.rel (%p30) target = $region8
    $region5: #{da2qn_forward.7} parent=1 // loop_body
      %s34 = ssub.s32 %s29, 1
      %s35 = ssub.s32 %s29, 2
      %s36 = sadd.s32 %s29, 1
      %s37 = ssub.s32 %s29, %s36
      %p38 = scmp.eq.s32.totalorder %s37, 0
      %s40 = sadd.s32 %s39, 1
      %s41 = scalar_select %p38, %s39, %s40
      %p44 = pneg %p38
      %p45 = scmp.eq.s32.totalorder %s29, 1
      %p46 = por %p44, %p45
      %p47 = scmp.ne.s32.totalorder %s39, %s42
      %p48 = scmp.eq.s32.totalorder %s29, 0
      %p49 = por %p47, %p48
      %p50 = scmp.ne.s32.totalorder %s39, %s42
      %p51 = scmp.eq.s32.totalorder %s34, 1
      %p52 = por %p50, %p51
      %p53 = scmp.ne.s32.totalorder %s42, %s43
      %p54 = scmp.eq.s32.totalorder %s34, 0
      %p55 = por %p53, %p54
      %p56 = scmp.ne.s32.totalorder %s42, %s43
      %p57 = scmp.eq.s32.totalorder %s35, 1
      %p58 = por %p56, %p57
      %p60 = scmp.ne.s32.totalorder %s43, %s59
      %p61 = scmp.eq.s32.totalorder %s35, 0
      %p62 = por %p60, %p61
      %s63 = ssub.s32 %s29, %s36
      %p64 = scmp.eq.s32.totalorder %s63, 0
      %s66 = sadd.s32 %s65, 1
      %s67 = scalar_select %p64, %s65, %s66
      %p70 = pneg %p64
      %p71 = scmp.eq.s32.totalorder %s29, 1
      %p72 = por %p70, %p71
      %p73 = scmp.ne.s32.totalorder %s65, %s68
      %p74 = scmp.eq.s32.totalorder %s29, 0
      %p75 = por %p73, %p74
      %p76 = scmp.ne.s32.totalorder %s65, %s68
      %p77 = scmp.eq.s32.totalorder %s34, 1
      %p78 = por %p76, %p77
      %p79 = scmp.ne.s32.totalorder %s68, %s69
      %p80 = scmp.eq.s32.totalorder %s34, 0
      %p81 = por %p79, %p80
      %p82 = scmp.ne.s32.totalorder %s68, %s69
      %p83 = scmp.eq.s32.totalorder %s35, 1
      %p84 = por %p82, %p83
      %p86 = scmp.ne.s32.totalorder %s69, %s85
      %p87 = scmp.eq.s32.totalorder %s35, 0
      %p88 = por %p86, %p87
      %s90 = sadd.s32 %s89, 1
      %p93 = scmp.eq.s32.totalorder %s29, 1
      %p94 = scmp.ne.s32.totalorder %s89, %s91
      %p95 = scmp.eq.s32.totalorder %s29, 0
      %p96 = por %p94, %p95
      %p97 = scmp.ne.s32.totalorder %s89, %s91
      %p98 = scmp.eq.s32.totalorder %s34, 1
      %p99 = por %p97, %p98
      %p100 = scmp.ne.s32.totalorder %s91, %s92
      %p101 = scmp.eq.s32.totalorder %s34, 0
      %p102 = por %p100, %p101
      %p103 = scmp.ne.s32.totalorder %s91, %s92
      %p104 = scmp.eq.s32.totalorder %s35, 1
      %p105 = por %p103, %p104
      %p107 = scmp.ne.s32.totalorder %s92, %s106
      %p108 = scmp.eq.s32.totalorder %s35, 0
      %p109 = por %p107, %p108
      %s111 = sadd.s32 %s110, 1
      %p114 = scmp.eq.s32.totalorder %s29, 1
      %p115 = scmp.ne.s32.totalorder %s110, %s112
      %p116 = scmp.eq.s32.totalorder %s29, 0
      %p117 = por %p115, %p116
      %p118 = scmp.ne.s32.totalorder %s110, %s112
      %p119 = scmp.eq.s32.totalorder %s34, 1
      %p120 = por %p118, %p119
      %p121 = scmp.ne.s32.totalorder %s112, %s113
      %p122 = scmp.eq.s32.totalorder %s34, 0
      %p123 = por %p121, %p122
      %p124 = scmp.ne.s32.totalorder %s112, %s113
      %p125 = scmp.eq.s32.totalorder %s35, 1
      %p126 = por %p124, %p125
      %p128 = scmp.ne.s32.totalorder %s113, %s127
      %p129 = scmp.eq.s32.totalorder %s35, 0
      %p130 = por %p128, %p129
      %s132 = sadd.s32 %s131, 1
      %p135 = scmp.eq.s32.totalorder %s29, 1
      %p136 = scmp.ne.s32.totalorder %s131, %s133
      %p137 = scmp.eq.s32.totalorder %s29, 0
      %p138 = por %p136, %p137
      %p139 = scmp.ne.s32.totalorder %s131, %s133
      %p140 = scmp.eq.s32.totalorder %s34, 1
      %p141 = por %p139, %p140
      %p142 = scmp.ne.s32.totalorder %s133, %s134
      %p143 = scmp.eq.s32.totalorder %s34, 0
      %p144 = por %p142, %p143
      %p145 = scmp.ne.s32.totalorder %s133, %s134
      %p146 = scmp.eq.s32.totalorder %s35, 1
      %p147 = por %p145, %p146
      %p149 = scmp.ne.s32.totalorder %s134, %s148
      %p150 = scmp.eq.s32.totalorder %s35, 0
      %p151 = por %p149, %p150
      %s153 = sadd.s32 %s152, 1
      %p156 = scmp.eq.s32.totalorder %s29, 1
      %p157 = scmp.ne.s32.totalorder %s152, %s154
      %p158 = scmp.eq.s32.totalorder %s29, 0
      %p159 = por %p157, %p158
      %p160 = scmp.ne.s32.totalorder %s152, %s154
      %p161 = scmp.eq.s32.totalorder %s34, 1
      %p162 = por %p160, %p161
      %p163 = scmp.ne.s32.totalorder %s154, %s155
      %p164 = scmp.eq.s32.totalorder %s34, 0
      %p165 = por %p163, %p164
      %p166 = scmp.ne.s32.totalorder %s154, %s155
      %p167 = scmp.eq.s32.totalorder %s35, 1
      %p168 = por %p166, %p167
      %p170 = scmp.ne.s32.totalorder %s155, %s169
      %p171 = scmp.eq.s32.totalorder %s35, 0
      %p172 = por %p170, %p171
      %s174 = sadd.s32 %s173, 1
      %p177 = scmp.eq.s32.totalorder %s29, 1
      %p178 = scmp.ne.s32.totalorder %s173, %s175
      %p179 = scmp.eq.s32.totalorder %s29, 0
      %p180 = por %p178, %p179
      %p181 = scmp.ne.s32.totalorder %s173, %s175
      %p182 = scmp.eq.s32.totalorder %s34, 1
      %p183 = por %p181, %p182
      %p184 = scmp.ne.s32.totalorder %s175, %s176
      %p185 = scmp.eq.s32.totalorder %s34, 0
      %p186 = por %p184, %p185
      %p187 = scmp.ne.s32.totalorder %s175, %s176
      %p188 = scmp.eq.s32.totalorder %s35, 1
      %p189 = por %p187, %p188
      %p191 = scmp.ne.s32.totalorder %s176, %s190
      %p192 = scmp.eq.s32.totalorder %s35, 0
      %p193 = por %p191, %p192
      %s195 = sadd.s32 %s194, 1
      %p198 = scmp.eq.s32.totalorder %s29, 1
      %p199 = scmp.ne.s32.totalorder %s194, %s196
      %p200 = scmp.eq.s32.totalorder %s29, 0
      %p201 = por %p199, %p200
      %p202 = scmp.ne.s32.totalorder %s194, %s196
      %p203 = scmp.eq.s32.totalorder %s34, 1
      %p204 = por %p202, %p203
      %p205 = scmp.ne.s32.totalorder %s196, %s197
      %p206 = scmp.eq.s32.totalorder %s34, 0
      %p207 = por %p205, %p206
      %p208 = scmp.ne.s32.totalorder %s196, %s197
      %p209 = scmp.eq.s32.totalorder %s35, 1
      %p210 = por %p208, %p209
      %p212 = scmp.ne.s32.totalorder %s197, %s211
      %p213 = scmp.eq.s32.totalorder %s35, 0
      %p214 = por %p212, %p213
      %s216 = sadd.s32 %s215, 1
      %p219 = scmp.eq.s32.totalorder %s29, 1
      %p220 = scmp.ne.s32.totalorder %s215, %s217
      %p221 = scmp.eq.s32.totalorder %s29, 0
      %p222 = por %p220, %p221
      %p223 = scmp.ne.s32.totalorder %s215, %s217
      %p224 = scmp.eq.s32.totalorder %s34, 1
      %p225 = por %p223, %p224
      %p226 = scmp.ne.s32.totalorder %s217, %s218
      %p227 = scmp.eq.s32.totalorder %s34, 0
      %p228 = por %p226, %p227
      %p229 = scmp.ne.s32.totalorder %s217, %s218
      %p230 = scmp.eq.s32.totalorder %s35, 1
      %p231 = por %p229, %p230
      %p233 = scmp.ne.s32.totalorder %s218, %s232
      %p234 = scmp.eq.s32.totalorder %s35, 0
      %p235 = por %p233, %p234
      %s237 = sadd.s32 %s236, 1
      %p240 = scmp.eq.s32.totalorder %s29, 1
      %p241 = scmp.ne.s32.totalorder %s236, %s238
      %p242 = scmp.eq.s32.totalorder %s29, 0
      %p243 = por %p241, %p242
      %p244 = scmp.ne.s32.totalorder %s236, %s238
      %p245 = scmp.eq.s32.totalorder %s34, 1
      %p246 = por %p244, %p245
      %p247 = scmp.ne.s32.totalorder %s238, %s239
      %p248 = scmp.eq.s32.totalorder %s34, 0
      %p249 = por %p247, %p248
      %p250 = scmp.ne.s32.totalorder %s238, %s239
      %p251 = scmp.eq.s32.totalorder %s35, 1
      %p252 = por %p250, %p251
      %p254 = scmp.ne.s32.totalorder %s239, %s253
      %p255 = scmp.eq.s32.totalorder %s35, 0
      %p256 = por %p254, %p255
      %s258 = sadd.s32 %s257, 1
      %p261 = scmp.eq.s32.totalorder %s29, 1
      %p262 = scmp.ne.s32.totalorder %s257, %s259
      %p263 = scmp.eq.s32.totalorder %s29, 0
      %p264 = por %p262, %p263
      %p265 = scmp.ne.s32.totalorder %s257, %s259
      %p266 = scmp.eq.s32.totalorder %s34, 1
      %p267 = por %p265, %p266
      %p268 = scmp.ne.s32.totalorder %s259, %s260
      %p269 = scmp.eq.s32.totalorder %s34, 0
      %p270 = por %p268, %p269
      %p271 = scmp.ne.s32.totalorder %s259, %s260
      %p272 = scmp.eq.s32.totalorder %s35, 1
      %p273 = por %p271, %p272
      %p275 = scmp.ne.s32.totalorder %s260, %s274
      %p276 = scmp.eq.s32.totalorder %s35, 0
      %p277 = por %p275, %p276
      %s279 = sadd.s32 %s278, 1
      %p282 = scmp.eq.s32.totalorder %s29, 1
      %p283 = scmp.ne.s32.totalorder %s278, %s280
      %p284 = scmp.eq.s32.totalorder %s29, 0
      %p285 = por %p283, %p284
      %p286 = scmp.ne.s32.totalorder %s278, %s280
      %p287 = scmp.eq.s32.totalorder %s34, 1
      %p288 = por %p286, %p287
      %p289 = scmp.ne.s32.totalorder %s280, %s281
      %p290 = scmp.eq.s32.totalorder %s34, 0
      %p291 = por %p289, %p290
      %p292 = scmp.ne.s32.totalorder %s280, %s281
      %p293 = scmp.eq.s32.totalorder %s35, 1
      %p294 = por %p292, %p293
      %p296 = scmp.ne.s32.totalorder %s281, %s295
      %p297 = scmp.eq.s32.totalorder %s35, 0
      %p298 = por %p296, %p297
      %s300 = sadd.s32 %s299, 1
      %p303 = scmp.eq.s32.totalorder %s29, 1
      %p304 = scmp.ne.s32.totalorder %s299, %s301
      %p305 = scmp.eq.s32.totalorder %s29, 0
      %p306 = por %p304, %p305
      %p307 = scmp.ne.s32.totalorder %s299, %s301
      %p308 = scmp.eq.s32.totalorder %s34, 1
      %p309 = por %p307, %p308
      %p310 = scmp.ne.s32.totalorder %s301, %s302
      %p311 = scmp.eq.s32.totalorder %s34, 0
      %p312 = por %p310, %p311
      %p313 = scmp.ne.s32.totalorder %s301, %s302
      %p314 = scmp.eq.s32.totalorder %s35, 1
      %p315 = por %p313, %p314
      %p317 = scmp.ne.s32.totalorder %s302, %s316
      %p318 = scmp.eq.s32.totalorder %s35, 0
      %p319 = por %p317, %p318
      %s321 = sadd.s32 %s320, 1
      %p324 = scmp.eq.s32.totalorder %s29, 1
      %p325 = scmp.ne.s32.totalorder %s320, %s322
      %p326 = scmp.eq.s32.totalorder %s29, 0
      %p327 = por %p325, %p326
      %p328 = scmp.ne.s32.totalorder %s320, %s322
      %p329 = scmp.eq.s32.totalorder %s34, 1
      %p330 = por %p328, %p329
      %p331 = scmp.ne.s32.totalorder %s322, %s323
      %p332 = scmp.eq.s32.totalorder %s34, 0
      %p333 = por %p331, %p332
      %p334 = scmp.ne.s32.totalorder %s322, %s323
      %p335 = scmp.eq.s32.totalorder %s35, 1
      %p336 = por %p334, %p335
      %p338 = scmp.ne.s32.totalorder %s323, %s337
      %p339 = scmp.eq.s32.totalorder %s35, 0
      %p340 = por %p338, %p339
      %s342 = sadd.s32 %s341, 1
      %p345 = scmp.eq.s32.totalorder %s29, 1
      %p346 = scmp.ne.s32.totalorder %s341, %s343
      %p347 = scmp.eq.s32.totalorder %s29, 0
      %p348 = por %p346, %p347
      %p349 = scmp.ne.s32.totalorder %s341, %s343
      %p350 = scmp.eq.s32.totalorder %s34, 1
      %p351 = por %p349, %p350
      %p352 = scmp.ne.s32.totalorder %s343, %s344
      %p353 = scmp.eq.s32.totalorder %s34, 0
      %p354 = por %p352, %p353
      %p355 = scmp.ne.s32.totalorder %s343, %s344
      %p356 = scmp.eq.s32.totalorder %s35, 1
      %p357 = por %p355, %p356
      %p359 = scmp.ne.s32.totalorder %s344, %s358
      %p360 = scmp.eq.s32.totalorder %s35, 0
      %p361 = por %p359, %p360
      %s362 = ssub.s32 %s29, %s36
      %p363 = scmp.eq.s32.totalorder %s362, 0
      %s365 = sadd.s32 %s364, 1
      %s366 = scalar_select %p363, %s364, %s365
      %p369 = pneg %p363
      %p370 = scmp.eq.s32.totalorder %s29, 1
      %p371 = por %p369, %p370
      %p372 = scmp.ne.s32.totalorder %s364, %s367
      %p373 = scmp.eq.s32.totalorder %s29, 0
      %p374 = por %p372, %p373
      %p375 = scmp.ne.s32.totalorder %s364, %s367
      %p376 = scmp.eq.s32.totalorder %s34, 1
      %p377 = por %p375, %p376
      %p378 = scmp.ne.s32.totalorder %s367, %s368
      %p379 = scmp.eq.s32.totalorder %s34, 0
      %p380 = por %p378, %p379
      %p381 = scmp.ne.s32.totalorder %s367, %s368
      %p382 = scmp.eq.s32.totalorder %s35, 1
      %p383 = por %p381, %p382
      %p385 = scmp.ne.s32.totalorder %s368, %s384
      %p386 = scmp.eq.s32.totalorder %s35, 0
      %p387 = por %p385, %p386
      %s388 = ssub.s32 %s29, %s36
      %p389 = scmp.eq.s32.totalorder %s388, 0
      %s391 = sadd.s32 %s390, 1
      %s392 = scalar_select %p389, %s390, %s391
      %p395 = pneg %p389
      %p396 = scmp.eq.s32.totalorder %s29, 1
      %p397 = por %p395, %p396
      %p398 = scmp.ne.s32.totalorder %s390, %s393
      %p399 = scmp.eq.s32.totalorder %s29, 0
      %p400 = por %p398, %p399
      %p401 = scmp.ne.s32.totalorder %s390, %s393
      %p402 = scmp.eq.s32.totalorder %s34, 1
      %p403 = por %p401, %p402
      %p404 = scmp.ne.s32.totalorder %s393, %s394
      %p405 = scmp.eq.s32.totalorder %s34, 0
      %p406 = por %p404, %p405
      %p407 = scmp.ne.s32.totalorder %s393, %s394
      %p408 = scmp.eq.s32.totalorder %s35, 1
      %p409 = por %p407, %p408
      %p411 = scmp.ne.s32.totalorder %s394, %s410
      %p412 = scmp.eq.s32.totalorder %s35, 0
      %p413 = por %p411, %p412
      %p414 = scmp.le.s32.totalorder 1, %s29
      %p415 = scmp.lt.s32.totalorder %s29, 3
      %p416 = pnand %p414, %p415
      %p417 = pneg %p416
      // Predicated region
      $region9: #{da2qn_forward.7} parent=5 // pred_check
        _
      $region10: #{da2qn_forward.7} parent=5 // pred_check_branch
        %419 = sbr.rel (%p416) target = $region12
      $region11: #{da2qn_forward.7} parent=5 // pred_region
        %s420 = ssub.s32 %s29, 1
        // Predicated region
        $region13: #{da2qn_forward.7} parent=11 // pred_check
          %p421 = pneg %p102
        $region14: #{da2qn_forward.7} parent=11 // pred_check_branch
          %423 = sbr.rel (%p421) target = $region16
        $region15: #{da2qn_forward.7} parent=11 // pred_region
          _
        $region16: #{da2qn_forward.7} parent=11 // pred_fallthru
          _
        // Predicated region
        $region17: #{da2qn_forward.7} parent=11 // pred_check
          %p424 = pneg %p123
        $region18: #{da2qn_forward.7} parent=11 // pred_check_branch
          %426 = sbr.rel (%p424) target = $region20
        $region19: #{da2qn_forward.7} parent=11 // pred_region
          _
        $region20: #{da2qn_forward.7} parent=11 // pred_fallthru
          _
        // Predicated region
        $region21: #{da2qn_forward.7} parent=11 // pred_check
          %p427 = pneg %p144
        $region22: #{da2qn_forward.7} parent=11 // pred_check_branch
          %429 = sbr.rel (%p427) target = $region24
        $region23: #{da2qn_forward.7} parent=11 // pred_region
          _
        $region24: #{da2qn_forward.7} parent=11 // pred_fallthru
          _
        // Predicated region
        $region25: #{da2qn_forward.7} parent=11 // pred_check
          %p430 = pneg %p165
        $region26: #{da2qn_forward.7} parent=11 // pred_check_branch
          %432 = sbr.rel (%p430) target = $region28
        $region27: #{da2qn_forward.7} parent=11 // pred_region
          _
        $region28: #{da2qn_forward.7} parent=11 // pred_fallthru
          _
        // Predicated region
        $region29: #{da2qn_forward.7} parent=11 // pred_check
          %p433 = pneg %p186
        $region30: #{da2qn_forward.7} parent=11 // pred_check_branch
          %435 = sbr.rel (%p433) target = $region32
        $region31: #{da2qn_forward.7} parent=11 // pred_region
          _
        $region32: #{da2qn_forward.7} parent=11 // pred_fallthru
          _
        // Predicated region
        $region33: #{da2qn_forward.7} parent=11 // pred_check
          %p436 = pneg %p207
        $region34: #{da2qn_forward.7} parent=11 // pred_check_branch
          %438 = sbr.rel (%p436) target = $region36
        $region35: #{da2qn_forward.7} parent=11 // pred_region
          _
        $region36: #{da2qn_forward.7} parent=11 // pred_fallthru
          _
        // Predicated region
        $region37: #{da2qn_forward.7} parent=11 // pred_check
          %p439 = pneg %p228
        $region38: #{da2qn_forward.7} parent=11 // pred_check_branch
          %441 = sbr.rel (%p439) target = $region40
        $region39: #{da2qn_forward.7} parent=11 // pred_region
          _
        $region40: #{da2qn_forward.7} parent=11 // pred_fallthru
          _
        // Predicated region
        $region41: #{da2qn_forward.7} parent=11 // pred_check
          %p442 = pneg %p249
        $region42: #{da2qn_forward.7} parent=11 // pred_check_branch
          %444 = sbr.rel (%p442) target = $region44
        $region43: #{da2qn_forward.7} parent=11 // pred_region
          _
        $region44: #{da2qn_forward.7} parent=11 // pred_fallthru
          _
        // Predicated region
        $region45: #{da2qn_forward.7} parent=11 // pred_check
          %p445 = pneg %p270
        $region46: #{da2qn_forward.7} parent=11 // pred_check_branch
          %447 = sbr.rel (%p445) target = $region48
        $region47: #{da2qn_forward.7} parent=11 // pred_region
          _
        $region48: #{da2qn_forward.7} parent=11 // pred_fallthru
          _
        // Predicated region
        $region49: #{da2qn_forward.7} parent=11 // pred_check
          %p448 = pneg %p291
        $region50: #{da2qn_forward.7} parent=11 // pred_check_branch
          %450 = sbr.rel (%p448) target = $region52
        $region51: #{da2qn_forward.7} parent=11 // pred_region
          _
        $region52: #{da2qn_forward.7} parent=11 // pred_fallthru
          _
        // Predicated region
        $region53: #{da2qn_forward.7} parent=11 // pred_check
          %p451 = pneg %p312
        $region54: #{da2qn_forward.7} parent=11 // pred_check_branch
          %453 = sbr.rel (%p451) target = $region56
        $region55: #{da2qn_forward.7} parent=11 // pred_region
          _
        $region56: #{da2qn_forward.7} parent=11 // pred_fallthru
          _
        // Predicated region
        $region57: #{da2qn_forward.7} parent=11 // pred_check
          %p454 = pneg %p333
        $region58: #{da2qn_forward.7} parent=11 // pred_check_branch
          %456 = sbr.rel (%p454) target = $region60
        $region59: #{da2qn_forward.7} parent=11 // pred_region
          _
        $region60: #{da2qn_forward.7} parent=11 // pred_fallthru
          _
        // Predicated region
        $region61: #{da2qn_forward.7} parent=11 // pred_check
          %p457 = pneg %p354
        $region62: #{da2qn_forward.7} parent=11 // pred_check_branch
          %459 = sbr.rel (%p457) target = $region64
        $region63: #{da2qn_forward.7} parent=11 // pred_region
          _
        $region64: #{da2qn_forward.7} parent=11 // pred_fallthru
          _
      $region12: #{da2qn_forward.7} parent=5 // pred_fallthru
        _
      %p460 = scmp.lt.s32.totalorder %s29, 2
      // Predicated region
      $region65: #{da2qn_forward.7} parent=5 // pred_check
        %p461 = pneg %p460
      $region66: #{da2qn_forward.7} parent=5 // pred_check_branch
        %463 = sbr.rel (%p461) target = $region68
      $region67: #{da2qn_forward.7} parent=5 // pred_region
        // Predicated region
        $region69: #{da2qn_forward.7} parent=67 // pred_check
          %p464 = pneg %p49
        $region70: #{da2qn_forward.7} parent=67 // pred_check_branch
          %466 = sbr.rel (%p464) target = $region72
        $region71: #{da2qn_forward.7} parent=67 // pred_region
          %p467 = scmp.lt.s32.totalorder %s29, 1
          %s468 = scalar_select %p467, %s29, 1
          %s469 = smul.addr %s468, 7
          %s470 = smul.addr %s469, 4
          %s471 = scalar_lea.vmem %s0, %s470
        $region72: #{da2qn_forward.7} parent=67 // pred_fallthru
          _
        // Predicated region
        $region73: #{da2qn_forward.7} parent=67 // pred_check
          %p472 = pneg %p75
        $region74: #{da2qn_forward.7} parent=67 // pred_check_branch
          %474 = sbr.rel (%p472) target = $region76
        $region75: #{da2qn_forward.7} parent=67 // pred_region
          %p475 = scmp.lt.s32.totalorder %s29, 1
          %s476 = scalar_select %p475, %s29, 1
          %s477 = scalar_lea.vmem %s1, %s476
        $region76: #{da2qn_forward.7} parent=67 // pred_fallthru
          _
      $region68: #{da2qn_forward.7} parent=5 // pred_fallthru
        _
      %p478 = scmp.le.s32.totalorder 1, %s29
      %p479 = scmp.lt.s32.totalorder %s29, 3
      %p480 = pnand %p478, %p479
      %p481 = pneg %p480
      // Predicated region
      $region77: #{da2qn_forward.7} parent=5 // pred_check
        _
      $region78: #{da2qn_forward.7} parent=5 // pred_check_branch
        %483 = sbr.rel (%p480) target = $region80
      $region79: #{da2qn_forward.7} parent=5 // pred_region
        %s484 = ssub.s32 %s29, 1
        %p485 = scmp.lt.s32.totalorder %s34, 1
        %s486 = scalar_select %p485, %s34, 1
        %s487 = smul.addr %s486, 7
        %s488 = smul.addr %s487, 4
        %s489 = scalar_lea.vmem %s0, %s488
        %p490 = pneg %p55
        %p491 = pneg %p52
        %p492 = scmp.lt.s32.totalorder %s34, 1
        %s493 = scalar_select %p492, %s34, 1
        %s494 = scalar_lea.vmem %s1, %s493
        %p495 = pneg %p81
        %p496 = pneg %p78
        %p497 = pneg %p102
        %p498 = pneg %p99
        %p499 = pneg %p123
        %p500 = pneg %p120
        %p501 = pneg %p144
        %p502 = pneg %p141
        %p503 = pneg %p165
        %p504 = pneg %p162
        %p505 = pneg %p186
        %p506 = pneg %p183
        %p507 = pneg %p207
        %p508 = pneg %p204
        %p509 = pneg %p228
        %p510 = pneg %p225
        %p511 = pneg %p249
        %p512 = pneg %p246
        %p513 = pneg %p270
        %p514 = pneg %p267
        %p515 = pneg %p291
        %p516 = pneg %p288
        %p517 = pneg %p312
        %p518 = pneg %p309
        %p519 = pneg %p333
        %p520 = pneg %p330
        %p521 = pneg %p354
        %p522 = pneg %p351
        %p523 = pneg %p380
        %p524 = pneg %p377
        %s525 = sand.u32 %s367, 1
        %s526 = scalar_lea.sflag [#allocation4], %s525
        %s527 = sand.u32 %s367, 1
        %s528 = scalar_lea.vmem [#allocation3], %s527
        %p529 = pneg %p406
        %p530 = pneg %p403
        %s531 = sand.u32 %s393, 1
        %s532 = scalar_lea.sflag [#allocation6], %s531
        %s533 = sand.u32 %s393, 1
        %s534 = scalar_lea.vmem [#allocation5], %s533
        %p535 = scmp.lt.s32.totalorder %s34, 1
        %s536 = scalar_select %p535, %s34, 1
        %s537 = smul.addr %s536, 7
        %s538 = smul.addr %s537, 4
        %s539 = scalar_lea.vmem %s0, %s538
        %p540 = scmp.lt.s32.totalorder %s34, 1
        %s541 = scalar_select %p540, %s34, 1
        %s542 = scalar_lea.vmem %s1, %s541
        %v543 = vld [vmem:[%s539] sm:$0xf]
        %v544 = vld [vmem:[%s539 + $0x4] sm:$0xf]
        %v545 = vld [vmem:[%s539 + $0x8] sm:$0xf]
        %v546 = vld [vmem:[%s539 + $0xc] sm:$0xf]
        %v547 = vld [vmem:[%s539 + $0x10] sm:$0xf]
        %v548 = vld [vmem:[%s539 + $0x14] sm:$0xf]
        %v549 = vld [vmem:[%s539 + $0x18] sm:$0x1]
        %v550 = vunpack.c.l.bf16 %v543
        %v551 = vunpack.c.l.bf16 %v544
        %v552 = vunpack.c.l.bf16 %v545
        %v553 = vunpack.c.l.bf16 %v546
        %v554 = vunpack.c.l.bf16 %v547
        %v555 = vunpack.c.l.bf16 %v548
        %v556 = vunpack.c.l.bf16 %v549
        %v557 = vld [vmem:[%s542] sm:$0x1]
        %v558 = vld [vmem:[%s2] sm:$0xff]
        %v559 = vld [vmem:[%s2 + $0x8] sm:$0xff]
        %v560 = vld [vmem:[%s2 + $0x10] sm:$0xff]
        %v561 = vld [vmem:[%s2 + $0x18] sm:$0xff]
        %v562 = vld [vmem:[%s2 + $0x20] sm:$0xff]
        %v563 = vld [vmem:[%s2 + $0x28] sm:$0xff]
        %v564 = vld [vmem:[%s2 + $0x30] sm:$0xff]
        %v565 = vld [vmem:[%s2 + $0x38] sm:$0xff]
        %v566 = vld [vmem:[%s3] sm:$0x1]
        %v568 = vperm.slane %v566, 0
        %vm570 = vcmask 523264
        %v572 = vsel %vm570, %v550, 0
        %v575 = vsel %vm570, %v551, 0
        %v578 = vsel %vm570, %v552, 0
        %v581 = vsel %vm570, %v553, 0
        %v584 = vsel %vm570, %v554, 0
        %v587 = vsel %vm570, %v555, 0
        %v590 = vsel %vm570, %v556, 0
        %592 = vmatpush.msra.mxu0 0.0
        %593 = vmatpush.msra.mxu0 0.0
        %594 = vmatpush.msra.mxu0 0.0
        %595 = vmatpush.msra.mxu0 0.0
        %596 = vmatpush.msra.mxu0 0.0
        %597 = vmatpush.msra.mxu0 0.0
        %598 = vmatpush.msra.mxu0 0.0
        %599 = vmatpush.msra.mxu0 0.0
        %600 = vmatpush.msra.mxu0 %v565
        %601 = vmatpush.msra.mxu0 %v564
        %602 = vmatpush.msra.mxu0 %v563
        %603 = vmatpush.msra.mxu0 %v562
        %604 = vmatpush.msra.mxu0 %v561
        %605 = vmatpush.msra.mxu0 %v560
        %606 = vmatpush.msra.mxu0 %v559
        %607 = vmatpush.msra.mxu0 %v558
        %608 = vmatmul.f32.gmra.mxu0 %v572
        %v609 = vpop.f32.mrf.mxu0
        %v610 = vadd.f32 %v568, %v609
        %611 = vmatmul.f32.gmra.mxu0 %v575
        %v612 = vpop.f32.mrf.mxu0
        %v613 = vadd.f32 %v568, %v612
        %614 = vmatmul.f32.gmra.mxu0 %v578
        %v615 = vpop.f32.mrf.mxu0
        %v616 = vadd.f32 %v568, %v615
        %617 = vmatmul.f32.gmra.mxu0 %v581
        %v618 = vpop.f32.mrf.mxu0
        %v619 = vadd.f32 %v568, %v618
        %620 = vmatmul.f32.gmra.mxu0 %v584
        %v621 = vpop.f32.mrf.mxu0
        %v622 = vadd.f32 %v568, %v621
        %623 = vmatmul.f32.gmra.mxu0 %v587
        %v624 = vpop.f32.mrf.mxu0
        %v625 = vadd.f32 %v568, %v624
        %626 = vmatmul.f32.gmra.mxu0 %v590
        %v627 = vpop.f32.mrf.mxu0
        %v628 = vadd.f32 %v568, %v627
        %629 = vdwg.mxu0
        %v630 = vld [vmem:[%s8] sm:$0xff]
        %v631 = vld [vmem:[%s9] sm:$0x1]
        %vm632 = vcmask 64512
        %v634 = vsel %vm632, %v557, 0
        %636 = vmatpush.msra.mxu0 0.0
        %637 = vmatpush.msra.mxu0 0.0
        %638 = vmatpush.msra.mxu0 0.0
        %639 = vmatpush.msra.mxu0 0.0
        %640 = vmatpush.msra.mxu0 0.0
        %641 = vmatpush.msra.mxu0 0.0
        %642 = vmatpush.msra.mxu0 0.0
        %643 = vmatpush.msra.mxu0 0.0
        %644 = vmatpush.msra.mxu0 0.0
        %645 = vmatpush.msra.mxu0 0.0
        %646 = vmatpush.msra.mxu0 0.0
        %647 = vmatpush.msra.mxu0 0.0
        %648 = vmatpush.msra.mxu0 0.0
        %649 = vmatpush.msra.mxu0 0.0
        %650 = vmatpush.msra.mxu0 0.0
        %651 = vmatpush.msra.mxu0 %v630
        %652 = vmatmul.f32.gmra.mxu0 %v634
        %v653 = vpop.f32.mrf.mxu0
        %v654 = vadd.f32 %v631, %v653
        %655 = vdwg.mxu0
        %v656 = vld [vmem:[%s4] sm:$0xff]
        %v657 = vld [vmem:[%s4 + $0x8] sm:$0xff]
        %v658 = vld [vmem:[%s4 + $0x10] sm:$0xff]
        %v659 = vld [vmem:[%s4 + $0x18] sm:$0xff]
        %v660 = vld [vmem:[%s5] sm:$0x1]
        %v661 = vld [vmem:[%s6] sm:$0xff]
        %v662 = vld [vmem:[%s6 + $0x8] sm:$0xff]
        %v663 = vld [vmem:[%s6 + $0x10] sm:$0xff]
        %v664 = vld [vmem:[%s6 + $0x18] sm:$0xff]
        %v665 = vld [vmem:[%s7] sm:$0x1]
        %673 = vrot.lane.b32.xlu0 %v610, 96
        %v674 = vpop.permute.xlu0 %673
        %675 = vrot.lane.b32.xlu0 %v613, 96
        %v676 = vpop.permute.xlu0 %675
        %677 = vrot.lane.b32.xlu0 %v616, 96
        %v678 = vpop.permute.xlu0 %677
        %679 = vrot.lane.b32.xlu0 %v619, 96
        %v680 = vpop.permute.xlu0 %679
        %681 = vrot.lane.b32.xlu0 %v622, 96
        %v682 = vpop.permute.xlu0 %681
        %683 = vrot.lane.b32.xlu0 %v625, 96
        %v684 = vpop.permute.xlu0 %683
        %685 = vrot.lane.b32.xlu0 %v628, 96
        %v686 = vpop.permute.xlu0 %685
        %vm687 = vcmask 261120
        %v688 = vsel %vm687, %v610, 0
        %v690 = vsel %vm687, %v613, 0
        %v692 = vsel %vm687, %v616, 0
        %v694 = vsel %vm687, %v619, 0
        %v696 = vsel %vm687, %v622, 0
        %v698 = vsel %vm687, %v625, 0
        %v700 = vsel %vm687, %v628, 0
        %v702 = vsel %vm687, %v674, 0
        %v704 = vsel %vm687, %v676, 0
        %v706 = vsel %vm687, %v678, 0
        %v708 = vsel %vm687, %v680, 0
        %v710 = vsel %vm687, %v682, 0
        %v712 = vsel %vm687, %v684, 0
        %v714 = vsel %vm687, %v686, 0
        %716 = vmatpush.xpose.msra.mxu0 0.0
        %717 = vmatpush.xpose.msra.mxu0 0.0
        %718 = vmatpush.xpose.msra.mxu0 0.0
        %719 = vmatpush.xpose.msra.mxu0 0.0
        %720 = vmatpush.xpose.msra.mxu0 0.0
        %721 = vmatpush.xpose.msra.mxu0 0.0
        %722 = vmatpush.xpose.msra.mxu0 0.0
        %723 = vmatpush.xpose.msra.mxu0 0.0
        %724 = vmatpush.xpose.msra.mxu0 0.0
        %725 = vmatpush.xpose.msra.mxu0 %v714
        %726 = vmatpush.xpose.msra.mxu0 %v712
        %727 = vmatpush.xpose.msra.mxu0 %v710
        %728 = vmatpush.xpose.msra.mxu0 %v708
        %729 = vmatpush.xpose.msra.mxu0 %v706
        %730 = vmatpush.xpose.msra.mxu0 %v704
        %731 = vmatpush.xpose.msra.mxu0 %v702
        %732 = vmatmul.f32.gmra.mxu0 %v688
        %v733 = vpop.f32.mrf.mxu0
        %v734 = vadd.f32 0.0, %v733
        %735 = vmatmul.f32.gmra.mxu0 %v690
        %v736 = vpop.f32.mrf.mxu0
        %v737 = vadd.f32 0.0, %v736
        %738 = vmatmul.f32.gmra.mxu0 %v692
        %v739 = vpop.f32.mrf.mxu0
        %v740 = vadd.f32 0.0, %v739
        %741 = vmatmul.f32.gmra.mxu0 %v694
        %v742 = vpop.f32.mrf.mxu0
        %v743 = vadd.f32 0.0, %v742
        %744 = vmatmul.f32.gmra.mxu0 %v696
        %v745 = vpop.f32.mrf.mxu0
        %v746 = vadd.f32 0.0, %v745
        %747 = vmatmul.f32.gmra.mxu0 %v698
        %v748 = vpop.f32.mrf.mxu0
        %v749 = vadd.f32 0.0, %v748
        %750 = vmatmul.f32.gmra.mxu0 %v700
        %v751 = vpop.f32.mrf.mxu0
        %v752 = vadd.f32 0.0, %v751
        %753 = vdwg.mxu0
        %vm754 = vcmask 400384
        %v755 = vsel %vm754, %v734, -inf
        %756 = vmax.xlane.f32.xlu0 %v755
        %v757 = vpop.xlane.xlu0 %756
        %v758 = vsel %vm754, %v737, -inf
        %759 = vmax.xlane.f32.xlu0 %v758
        %v760 = vpop.xlane.xlu0 %759
        %v761 = vsel %vm754, %v740, -inf
        %762 = vmax.xlane.f32.xlu0 %v761
        %v763 = vpop.xlane.xlu0 %762
        %v764 = vsel %vm754, %v743, -inf
        %765 = vmax.xlane.f32.xlu0 %v764
        %v766 = vpop.xlane.xlu0 %765
        %v767 = vsel %vm754, %v746, -inf
        %768 = vmax.xlane.f32.xlu0 %v767
        %v769 = vpop.xlane.xlu0 %768
        %v770 = vsel %vm754, %v749, -inf
        %771 = vmax.xlane.f32.xlu0 %v770
        %v772 = vpop.xlane.xlu0 %771
        %vm773 = vcmask 393216
        %v774 = vsel %vm773, %v752, -inf
        %775 = vmax.xlane.f32.xlu0 %v774
        %v776 = vpop.xlane.xlu0 %775
        %v777 = vsub.f32 %v734, %v757
        %v778 = vsub.f32 %v737, %v760
        %v779 = vsub.f32 %v740, %v763
        %v780 = vsub.f32 %v743, %v766
        %v781 = vsub.f32 %v746, %v769
        %v782 = vsub.f32 %v749, %v772
        %v783 = vsub.f32 %v752, %v776
        %v784 = vmul.f32 %v777, 1.442695
        %v785 = vpow.pop %v784
        %v786 = vmul.f32 %v778, 1.442695
        %v787 = vpow.pop %v786
        %v788 = vmul.f32 %v779, 1.442695
        %v789 = vpow.pop %v788
        %v790 = vmul.f32 %v780, 1.442695
        %v791 = vpow.pop %v790
        %v792 = vmul.f32 %v781, 1.442695
        %v793 = vpow.pop %v792
        %v794 = vmul.f32 %v782, 1.442695
        %v795 = vpow.pop %v794
        %v796 = vmul.f32 %v783, 1.442695
        %v797 = vpow.pop %v796
        %v798 = vsel %vm754, %v785, 0.0
        %799 = vadd.xlane.f32.xlu0 %v798
        %v800 = vpop.xlane.xlu0 %799
        %v801 = vsel %vm754, %v787, 0.0
        %802 = vadd.xlane.f32.xlu0 %v801
        %v803 = vpop.xlane.xlu0 %802
        %v804 = vsel %vm754, %v789, 0.0
        %805 = vadd.xlane.f32.xlu0 %v804
        %v806 = vpop.xlane.xlu0 %805
        %v807 = vsel %vm754, %v791, 0.0
        %808 = vadd.xlane.f32.xlu0 %v807
        %v809 = vpop.xlane.xlu0 %808
        %v810 = vsel %vm754, %v793, 0.0
        %811 = vadd.xlane.f32.xlu0 %v810
        %v812 = vpop.xlane.xlu0 %811
        %v813 = vsel %vm754, %v795, 0.0
        %814 = vadd.xlane.f32.xlu0 %v813
        %v815 = vpop.xlane.xlu0 %814
        %v816 = vsel %vm773, %v797, 0.0
        %817 = vadd.xlane.f32.xlu0 %v816
        %v818 = vpop.xlane.xlu0 %817
        %v819 = vrcp.pop %v800
        %v820 = vrcp.pop %v803
        %v821 = vrcp.pop %v806
        %v822 = vrcp.pop %v809
        %v823 = vrcp.pop %v812
        %v824 = vrcp.pop %v815
        %v825 = vrcp.pop %v818
        %v826 = vmul.f32 %v785, %v819
        %v827 = vmul.f32 %v787, %v820
        %v828 = vmul.f32 %v789, %v821
        %v829 = vmul.f32 %v791, %v822
        %v830 = vmul.f32 %v793, %v823
        %v831 = vmul.f32 %v795, %v824
        %v832 = vmul.f32 %v797, %v825
        %833 = vrot.lane.b32.xlu0 %v610, 64
        %v834 = vpop.permute.xlu0 %833
        %835 = vrot.lane.b32.xlu0 %v613, 64
        %v836 = vpop.permute.xlu0 %835
        %837 = vrot.lane.b32.xlu0 %v616, 64
        %v838 = vpop.permute.xlu0 %837
        %839 = vrot.lane.b32.xlu0 %v619, 64
        %v840 = vpop.permute.xlu0 %839
        %841 = vrot.lane.b32.xlu0 %v622, 64
        %v842 = vpop.permute.xlu0 %841
        %843 = vrot.lane.b32.xlu0 %v625, 64
        %v844 = vpop.permute.xlu0 %843
        %845 = vrot.lane.b32.xlu0 %v628, 64
        %v846 = vpop.permute.xlu0 %845
        %v854 = vsel %vm754, %v826, 0
        %v857 = vsel %vm754, %v827, 0
        %v860 = vsel %vm754, %v828, 0
        %v863 = vsel %vm754, %v829, 0
        %v866 = vsel %vm754, %v830, 0
        %v869 = vsel %vm754, %v831, 0
        %v872 = vsel %vm754, %v832, 0
        %vm874 = vcmask 1040384
        %v875 = vsel %vm874, %v846, 0
        %877 = vmatpush.msra.mxu0 0.0
        %878 = vmatpush.msra.mxu0 0.0
        %879 = vmatpush.msra.mxu0 0.0
        %880 = vmatpush.msra.mxu0 0.0
        %881 = vmatpush.msra.mxu0 0.0
        %882 = vmatpush.msra.mxu0 0.0
        %883 = vmatpush.msra.mxu0 0.0
        %884 = vmatpush.msra.mxu0 0.0
        %885 = vmatpush.msra.mxu0 0.0
        %886 = vmatpush.msra.mxu0 %v875
        %887 = vmatpush.msra.mxu0 %v844
        %888 = vmatpush.msra.mxu0 %v842
        %889 = vmatpush.msra.mxu0 %v840
        %890 = vmatpush.msra.mxu0 %v838
        %891 = vmatpush.msra.mxu0 %v836
        %892 = vmatpush.msra.mxu0 %v834
        %893 = vmatmul.f32.gmra.mxu0 %v854
        %v894 = vpop.f32.mrf.mxu0
        %v895 = vadd.f32 0.0, %v894
        %896 = vmatmul.f32.gmra.mxu0 %v857
        %v897 = vpop.f32.mrf.mxu0
        %v898 = vadd.f32 0.0, %v897
        %899 = vmatmul.f32.gmra.mxu0 %v860
        %v900 = vpop.f32.mrf.mxu0
        %v901 = vadd.f32 0.0, %v900
        %902 = vmatmul.f32.gmra.mxu0 %v863
        %v903 = vpop.f32.mrf.mxu0
        %v904 = vadd.f32 0.0, %v903
        %905 = vmatmul.f32.gmra.mxu0 %v866
        %v906 = vpop.f32.mrf.mxu0
        %v907 = vadd.f32 0.0, %v906
        %908 = vmatmul.f32.gmra.mxu0 %v869
        %v909 = vpop.f32.mrf.mxu0
        %v910 = vadd.f32 0.0, %v909
        %911 = vmatmul.f32.gmra.mxu0 %v872
        %v912 = vpop.f32.mrf.mxu0
        %v913 = vadd.f32 0.0, %v912
        %914 = vdwg.mxu0
        %v916 = vperm.slane %v660, 0
        %v919 = vsel %vm687, %v895, 0
        %v922 = vsel %vm687, %v898, 0
        %v925 = vsel %vm687, %v901, 0
        %v928 = vsel %vm687, %v904, 0
        %v931 = vsel %vm687, %v907, 0
        %v934 = vsel %vm687, %v910, 0
        %v937 = vsel %vm687, %v913, 0
        %939 = vmatpush.msra.mxu0 0.0
        %940 = vmatpush.msra.mxu0 0.0
        %941 = vmatpush.msra.mxu0 0.0
        %942 = vmatpush.msra.mxu0 0.0
        %943 = vmatpush.msra.mxu0 0.0
        %944 = vmatpush.msra.mxu0 0.0
        %945 = vmatpush.msra.mxu0 0.0
        %946 = vmatpush.msra.mxu0 0.0
        %947 = vmatpush.msra.mxu0 0.0
        %948 = vmatpush.msra.mxu0 0.0
        %949 = vmatpush.msra.mxu0 0.0
        %950 = vmatpush.msra.mxu0 0.0
        %951 = vmatpush.msra.mxu0 %v659
        %952 = vmatpush.msra.mxu0 %v658
        %953 = vmatpush.msra.mxu0 %v657
        %954 = vmatpush.msra.mxu0 %v656
        %955 = vmatmul.f32.gmra.mxu0 %v919
        %v956 = vpop.f32.mrf.mxu0
        %v957 = vadd.f32 %v916, %v956
        %958 = vmatmul.f32.gmra.mxu0 %v922
        %v959 = vpop.f32.mrf.mxu0
        %v960 = vadd.f32 %v916, %v959
        %961 = vmatmul.f32.gmra.mxu0 %v925
        %v962 = vpop.f32.mrf.mxu0
        %v963 = vadd.f32 %v916, %v962
        %964 = vmatmul.f32.gmra.mxu0 %v928
        %v965 = vpop.f32.mrf.mxu0
        %v966 = vadd.f32 %v916, %v965
        %967 = vmatmul.f32.gmra.mxu0 %v931
        %v968 = vpop.f32.mrf.mxu0
        %v969 = vadd.f32 %v916, %v968
        %970 = vmatmul.f32.gmra.mxu0 %v934
        %v971 = vpop.f32.mrf.mxu0
        %v972 = vadd.f32 %v916, %v971
        %973 = vmatmul.f32.gmra.mxu0 %v937
        %v974 = vpop.f32.mrf.mxu0
        %v975 = vadd.f32 %v916, %v974
        %976 = vdwg.mxu0
        %v978 = vperm.slane %v665, 0
        %980 = vmatpush.msra.mxu0 0.0
        %981 = vmatpush.msra.mxu0 0.0
        %982 = vmatpush.msra.mxu0 0.0
        %983 = vmatpush.msra.mxu0 0.0
        %984 = vmatpush.msra.mxu0 0.0
        %985 = vmatpush.msra.mxu0 0.0
        %986 = vmatpush.msra.mxu0 0.0
        %987 = vmatpush.msra.mxu0 0.0
        %988 = vmatpush.msra.mxu0 0.0
        %989 = vmatpush.msra.mxu0 0.0
        %990 = vmatpush.msra.mxu0 0.0
        %991 = vmatpush.msra.mxu0 0.0
        %992 = vmatpush.msra.mxu0 %v664
        %993 = vmatpush.msra.mxu0 %v663
        %994 = vmatpush.msra.mxu0 %v662
        %995 = vmatpush.msra.mxu0 %v661
        %996 = vmatmul.f32.gmra.mxu0 %v919
        %v997 = vpop.f32.mrf.mxu0
        %v998 = vadd.f32 %v978, %v997
        %999 = vmatmul.f32.gmra.mxu0 %v922
        %v1000 = vpop.f32.mrf.mxu0
        %v1001 = vadd.f32 %v978, %v1000
        %1002 = vmatmul.f32.gmra.mxu0 %v925
        %v1003 = vpop.f32.mrf.mxu0
        %v1004 = vadd.f32 %v978, %v1003
        %1005 = vmatmul.f32.gmra.mxu0 %v928
        %v1006 = vpop.f32.mrf.mxu0
        %v1007 = vadd.f32 %v978, %v1006
        %1008 = vmatmul.f32.gmra.mxu0 %v931
        %v1009 = vpop.f32.mrf.mxu0
        %v1010 = vadd.f32 %v978, %v1009
        %1011 = vmatmul.f32.gmra.mxu0 %v934
        %v1012 = vpop.f32.mrf.mxu0
        %v1013 = vadd.f32 %v978, %v1012
        %1014 = vmatmul.f32.gmra.mxu0 %v937
        %v1015 = vpop.f32.mrf.mxu0
        %v1016 = vadd.f32 %v978, %v1015
        %1017 = vdwg.mxu0
        %v1019 = vsel %vm687, %v654, 0
        %v1022 = vsel %vm687, %v998, 0
        %v1025 = vsel %vm687, %v1001, 0
        %v1028 = vsel %vm687, %v1004, 0
        %v1031 = vsel %vm687, %v1007, 0
        %v1034 = vsel %vm687, %v1010, 0
        %v1037 = vsel %vm687, %v1013, 0
        %v1040 = vsel %vm687, %v1016, 0
        %1042 = vmatpush.xpose.msra.mxu0 0.0
        %1043 = vmatpush.xpose.msra.mxu0 0.0
        %1044 = vmatpush.xpose.msra.mxu0 0.0
        %1045 = vmatpush.xpose.msra.mxu0 0.0
        %1046 = vmatpush.xpose.msra.mxu0 0.0
        %1047 = vmatpush.xpose.msra.mxu0 0.0
        %1048 = vmatpush.xpose.msra.mxu0 0.0
        %1049 = vmatpush.xpose.msra.mxu0 0.0
        %1050 = vmatpush.xpose.msra.mxu0 0.0
        %1051 = vmatpush.xpose.msra.mxu0 %v1040
        %1052 = vmatpush.xpose.msra.mxu0 %v1037
        %1053 = vmatpush.xpose.msra.mxu0 %v1034
        %1054 = vmatpush.xpose.msra.mxu0 %v1031
        %1055 = vmatpush.xpose.msra.mxu0 %v1028
        %1056 = vmatpush.xpose.msra.mxu0 %v1025
        %1057 = vmatpush.xpose.msra.mxu0 %v1022
        %1058 = vmatmul.f32.gmra.mxu0 %v1019
        %v1059 = vpop.f32.mrf.mxu0
        %v1060 = vadd.f32 0.0, %v1059
        %1061 = vdwg.mxu0
        %v1062 = vsel %vm773, %v1060, -inf
        %1063 = vmax.xlane.f32.xlu0 %v1062
        %v1064 = vpop.xlane.xlu0 %1063
        %v1065 = vsub.f32 %v1060, %v1064
        %v1066 = vmul.f32 %v1065, 1.442695
        %v1067 = vpow.pop %v1066
        %v1068 = vsel %vm773, %v1067, 0.0
        %1069 = vadd.xlane.f32.xlu0 %v1068
        %v1070 = vpop.xlane.xlu0 %1069
        %v1071 = vrcp.pop %v1070
        %v1072 = vmul.f32 %v1070, %v1071
        %v1073 = vsub.f32 1.0, %v1072
        %v1074 = vmul.f32 %v1071, %v1073
        %v1075 = vadd.f32 %v1071, %v1074
        %vm1076 = vweird.f32 %v1070
        %vm1077 = vweird.f32 %v1071
        %vm1078 = vmor %vm1076, %vm1077
        %v1079 = vsel %vm1078, %v1071, %v1075
        %v1080 = vand.u32 2147483647, %v1070
        %vm1081 = vcmp.eq.f32.partialorder %v1080, 8.507059e+37
        %v1082 = vand.u32 %v1070, 2147483648
        %v1083 = vor.u32 1.1754944e-38, %v1082
        %v1084 = vsel %vm1081, %v1083, %v1079
        %v1085 = vmul.f32 %v1067, %v1084
        %v1087 = vsel %vm754, %v1085, 0
        %v1090 = vsel %vm874, %v975, 0
        %1092 = vmatpush.msra.mxu0 0.0
        %1093 = vmatpush.msra.mxu0 0.0
        %1094 = vmatpush.msra.mxu0 0.0
        %1095 = vmatpush.msra.mxu0 0.0
        %1096 = vmatpush.msra.mxu0 0.0
        %1097 = vmatpush.msra.mxu0 0.0
        %1098 = vmatpush.msra.mxu0 0.0
        %1099 = vmatpush.msra.mxu0 0.0
        %1100 = vmatpush.msra.mxu0 0.0
        %1101 = vmatpush.msra.mxu0 %v1090
        %1102 = vmatpush.msra.mxu0 %v972
        %1103 = vmatpush.msra.mxu0 %v969
        %1104 = vmatpush.msra.mxu0 %v966
        %1105 = vmatpush.msra.mxu0 %v963
        %1106 = vmatpush.msra.mxu0 %v960
        %1107 = vmatpush.msra.mxu0 %v957
        %1108 = vmatmul.f32.gmra.mxu0 %v1087
        %v1109 = vpop.f32.mrf.mxu0
        %v1110 = vadd.f32 0.0, %v1109
        %1111 = vdwg.mxu0
        %vm1112 = vcmask 516096
        %1113 = vst.msk [vmem:[#allocation2] sm:$0x1] %vm1112, %v1110
        %1114 = vst.msk [vmem:[%s534] sm:$0x1] %vm773, %v1085
        %v1115 = vld [vmem:[#allocation2] sm:$0x1]
        %v1116 = vld [vmem:[%s10] sm:$0xff]
        %v1117 = vld [vmem:[%s10 + $0x8] sm:$0xff]
        %v1118 = vld [vmem:[%s10 + $0x10] sm:$0xff]
        %v1119 = vld [vmem:[%s10 + $0x18] sm:$0xff]
        %v1120 = vld [vmem:[%s10 + $0x20] sm:$0xff]
        %v1121 = vld [vmem:[%s10 + $0x28] sm:$0xff]
        %v1122 = vld [vmem:[%s10 + $0x30] sm:$0xff]
        %v1123 = vld [vmem:[%s10 + $0x38] sm:$0xff]
        %v1124 = vld [vmem:[%s10 + $0x40] sm:$0xff]
        %v1125 = vld [vmem:[%s10 + $0x48] sm:$0xff]
        %v1126 = vld [vmem:[%s10 + $0x50] sm:$0xff]
        %v1127 = vld [vmem:[%s10 + $0x58] sm:$0xff]
        %v1128 = vld [vmem:[%s10 + $0x60] sm:$0xff]
        %v1129 = vld [vmem:[%s10 + $0x68] sm:$0xff]
        %v1130 = vld [vmem:[%s10 + $0x70] sm:$0xff]
        %v1131 = vld [vmem:[%s10 + $0x78] sm:$0xff]
        %v1132 = vld [vmem:[%s10 + $0x80] sm:$0xff]
        %v1133 = vld [vmem:[%s10 + $0x88] sm:$0xff]
        %v1134 = vld [vmem:[%s10 + $0x90] sm:$0xff]
        %v1135 = vld [vmem:[%s10 + $0x98] sm:$0xff]
        %v1136 = vld [vmem:[%s10 + $0xa0] sm:$0xff]
        %v1137 = vld [vmem:[%s10 + $0xa8] sm:$0xff]
        %v1138 = vld [vmem:[%s10 + $0xb0] sm:$0xff]
        %v1139 = vld [vmem:[%s10 + $0xb8] sm:$0xff]
        %v1140 = vld [vmem:[%s10 + $0xc0] sm:$0xff]
        %v1141 = vld [vmem:[%s10 + $0xc8] sm:$0xff]
        %v1142 = vld [vmem:[%s10 + $0xd0] sm:$0xff]
        %v1143 = vld [vmem:[%s10 + $0xd8] sm:$0xff]
        %v1144 = vld [vmem:[%s10 + $0xe0] sm:$0xff]
        %v1145 = vld [vmem:[%s10 + $0xe8] sm:$0xff]
        %v1146 = vld [vmem:[%s10 + $0xf0] sm:$0xff]
        %v1147 = vld [vmem:[%s10 + $0xf8] sm:$0xff]
        %v1148 = vld [vmem:[%s11] sm:$0xf]
        %v1150 = vperm.slane %v1148, 0
        %v1151 = vperm.slane %v1148, 1
        %v1152 = vperm.slane %v1148, 2
        %v1153 = vperm.slane %v1148, 3
        %v1159 = vsel %vm570, %v1115, 0
        %1161 = vmatpush.msra.mxu0 0.0
        %1162 = vmatpush.msra.mxu0 0.0
        %1163 = vmatpush.msra.mxu0 0.0
        %1164 = vmatpush.msra.mxu0 0.0
        %1165 = vmatpush.msra.mxu0 0.0
        %1166 = vmatpush.msra.mxu0 0.0
        %1167 = vmatpush.msra.mxu0 0.0
        %1168 = vmatpush.msra.mxu0 0.0
        %1169 = vmatpush.msra.mxu0 %v1144
        %1170 = vmatpush.msra.mxu0 %v1140
        %1171 = vmatpush.msra.mxu0 %v1136
        %1172 = vmatpush.msra.mxu0 %v1132
        %1173 = vmatpush.msra.mxu0 %v1128
        %1174 = vmatpush.msra.mxu0 %v1124
        %1175 = vmatpush.msra.mxu0 %v1120
        %1176 = vmatpush.msra.mxu0 %v1116
        %1177 = vmatmul.f32.gmra.mxu0 %v1159
        %v1178 = vpop.f32.mrf.mxu0
        %v1179 = vadd.f32 %v1150, %v1178
        %1180 = vdwg.mxu0
        %1181 = vmatpush.msra.mxu0 0.0
        %1182 = vmatpush.msra.mxu0 0.0
        %1183 = vmatpush.msra.mxu0 0.0
        %1184 = vmatpush.msra.mxu0 0.0
        %1185 = vmatpush.msra.mxu0 0.0
        %1186 = vmatpush.msra.mxu0 0.0
        %1187 = vmatpush.msra.mxu0 0.0
        %1188 = vmatpush.msra.mxu0 0.0
        %1189 = vmatpush.msra.mxu0 %v1145
        %1190 = vmatpush.msra.mxu0 %v1141
        %1191 = vmatpush.msra.mxu0 %v1137
        %1192 = vmatpush.msra.mxu0 %v1133
        %1193 = vmatpush.msra.mxu0 %v1129
        %1194 = vmatpush.msra.mxu0 %v1125
        %1195 = vmatpush.msra.mxu0 %v1121
        %1196 = vmatpush.msra.mxu0 %v1117
        %1197 = vmatmul.f32.gmra.mxu0 %v1159
        %v1198 = vpop.f32.mrf.mxu0
        %v1199 = vadd.f32 %v1151, %v1198
        %1200 = vdwg.mxu0
        %1201 = vmatpush.msra.mxu0 0.0
        %1202 = vmatpush.msra.mxu0 0.0
        %1203 = vmatpush.msra.mxu0 0.0
        %1204 = vmatpush.msra.mxu0 0.0
        %1205 = vmatpush.msra.mxu0 0.0
        %1206 = vmatpush.msra.mxu0 0.0
        %1207 = vmatpush.msra.mxu0 0.0
        %1208 = vmatpush.msra.mxu0 0.0
        %1209 = vmatpush.msra.mxu0 %v1146
        %1210 = vmatpush.msra.mxu0 %v1142
        %1211 = vmatpush.msra.mxu0 %v1138
        %1212 = vmatpush.msra.mxu0 %v1134
        %1213 = vmatpush.msra.mxu0 %v1130
        %1214 = vmatpush.msra.mxu0 %v1126
        %1215 = vmatpush.msra.mxu0 %v1122
        %1216 = vmatpush.msra.mxu0 %v1118
        %1217 = vmatmul.f32.gmra.mxu0 %v1159
        %v1218 = vpop.f32.mrf.mxu0
        %v1219 = vadd.f32 %v1152, %v1218
        %1220 = vdwg.mxu0
        %1221 = vmatpush.msra.mxu0 0.0
        %1222 = vmatpush.msra.mxu0 0.0
        %1223 = vmatpush.msra.mxu0 0.0
        %1224 = vmatpush.msra.mxu0 0.0
        %1225 = vmatpush.msra.mxu0 0.0
        %1226 = vmatpush.msra.mxu0 0.0
        %1227 = vmatpush.msra.mxu0 0.0
        %1228 = vmatpush.msra.mxu0 0.0
        %1229 = vmatpush.msra.mxu0 %v1147
        %1230 = vmatpush.msra.mxu0 %v1143
        %1231 = vmatpush.msra.mxu0 %v1139
        %1232 = vmatpush.msra.mxu0 %v1135
        %1233 = vmatpush.msra.mxu0 %v1131
        %1234 = vmatpush.msra.mxu0 %v1127
        %1235 = vmatpush.msra.mxu0 %v1123
        %1236 = vmatpush.msra.mxu0 %v1119
        %1237 = vmatmul.f32.gmra.mxu0 %v1159
        %v1238 = vpop.f32.mrf.mxu0
        %v1239 = vadd.f32 %v1153, %v1238
        %1240 = vdwg.mxu0
        %v1241 = vmax.f32 %v1179, 0.0
        %v1242 = vmax.f32 %v1199, 0.0
        %v1243 = vmax.f32 %v1219, 0.0
        %v1244 = vmax.f32 %v1239, 0.0
        %v1245 = vld [vmem:[%s12] sm:$0xff]
        %v1246 = vld [vmem:[%s12 + $0x8] sm:$0xff]
        %v1247 = vld [vmem:[%s12 + $0x10] sm:$0xff]
        %v1248 = vld [vmem:[%s12 + $0x18] sm:$0xff]
        %v1249 = vld [vmem:[%s12 + $0x20] sm:$0xff]
        %v1250 = vld [vmem:[%s12 + $0x28] sm:$0xff]
        %v1251 = vld [vmem:[%s12 + $0x30] sm:$0xff]
        %v1252 = vld [vmem:[%s12 + $0x38] sm:$0xff]
        %v1253 = vld [vmem:[%s12 + $0x40] sm:$0xff]
        %v1254 = vld [vmem:[%s12 + $0x48] sm:$0xff]
        %v1255 = vld [vmem:[%s12 + $0x50] sm:$0xff]
        %v1256 = vld [vmem:[%s12 + $0x58] sm:$0xff]
        %v1257 = vld [vmem:[%s12 + $0x60] sm:$0xff]
        %v1258 = vld [vmem:[%s12 + $0x68] sm:$0xff]
        %v1259 = vld [vmem:[%s12 + $0x70] sm:$0xff]
        %v1260 = vld [vmem:[%s12 + $0x78] sm:$0xff]
        %v1261 = vld [vmem:[%s12 + $0x80] sm:$0xff]
        %v1262 = vld [vmem:[%s12 + $0x88] sm:$0xff]
        %v1263 = vld [vmem:[%s12 + $0x90] sm:$0xff]
        %v1264 = vld [vmem:[%s12 + $0x98] sm:$0xff]
        %v1265 = vld [vmem:[%s12 + $0xa0] sm:$0xff]
        %v1266 = vld [vmem:[%s12 + $0xa8] sm:$0xff]
        %v1267 = vld [vmem:[%s12 + $0xb0] sm:$0xff]
        %v1268 = vld [vmem:[%s12 + $0xb8] sm:$0xff]
        %v1269 = vld [vmem:[%s12 + $0xc0] sm:$0xff]
        %v1270 = vld [vmem:[%s12 + $0xc8] sm:$0xff]
        %v1271 = vld [vmem:[%s12 + $0xd0] sm:$0xff]
        %v1272 = vld [vmem:[%s12 + $0xd8] sm:$0xff]
        %v1273 = vld [vmem:[%s12 + $0xe0] sm:$0xff]
        %v1274 = vld [vmem:[%s12 + $0xe8] sm:$0xff]
        %v1275 = vld [vmem:[%s12 + $0xf0] sm:$0xff]
        %v1276 = vld [vmem:[%s12 + $0xf8] sm:$0xff]
        %v1277 = vld [vmem:[%s12 + $0x100] sm:$0xff]
        %v1278 = vld [vmem:[%s12 + $0x108] sm:$0xff]
        %v1279 = vld [vmem:[%s12 + $0x110] sm:$0xff]
        %v1280 = vld [vmem:[%s12 + $0x118] sm:$0xff]
        %v1281 = vld [vmem:[%s12 + $0x120] sm:$0xff]
        %v1282 = vld [vmem:[%s12 + $0x128] sm:$0xff]
        %v1283 = vld [vmem:[%s12 + $0x130] sm:$0xff]
        %v1284 = vld [vmem:[%s12 + $0x138] sm:$0xff]
        %v1285 = vld [vmem:[%s12 + $0x140] sm:$0xff]
        %v1286 = vld [vmem:[%s12 + $0x148] sm:$0xff]
        %v1287 = vld [vmem:[%s12 + $0x150] sm:$0xff]
        %v1288 = vld [vmem:[%s12 + $0x158] sm:$0xff]
        %v1289 = vld [vmem:[%s12 + $0x160] sm:$0xff]
        %v1290 = vld [vmem:[%s12 + $0x168] sm:$0xff]
        %v1291 = vld [vmem:[%s12 + $0x170] sm:$0xff]
        %v1292 = vld [vmem:[%s12 + $0x178] sm:$0xff]
        %v1293 = vld [vmem:[%s12 + $0x180] sm:$0xff]
        %v1294 = vld [vmem:[%s12 + $0x188] sm:$0xff]
        %v1295 = vld [vmem:[%s12 + $0x190] sm:$0xff]
        %v1296 = vld [vmem:[%s12 + $0x198] sm:$0xff]
        %v1297 = vld [vmem:[%s12 + $0x1a0] sm:$0xff]
        %v1298 = vld [vmem:[%s12 + $0x1a8] sm:$0xff]
        %v1299 = vld [vmem:[%s12 + $0x1b0] sm:$0xff]
        %v1300 = vld [vmem:[%s12 + $0x1b8] sm:$0xff]
        %v1301 = vld [vmem:[%s12 + $0x1c0] sm:$0xff]
        %v1302 = vld [vmem:[%s12 + $0x1c8] sm:$0xff]
        %v1303 = vld [vmem:[%s12 + $0x1d0] sm:$0xff]
        %v1304 = vld [vmem:[%s12 + $0x1d8] sm:$0xff]
        %v1305 = vld [vmem:[%s12 + $0x1e0] sm:$0xff]
        %v1306 = vld [vmem:[%s12 + $0x1e8] sm:$0xff]
        %v1307 = vld [vmem:[%s12 + $0x1f0] sm:$0xff]
        %v1308 = vld [vmem:[%s12 + $0x1f8] sm:$0xff]
        %v1309 = vld [vmem:[%s13] sm:$0xff]
        %1310 = vmatpush.msra.mxu0 0.0
        %1311 = vmatpush.msra.mxu0 0.0
        %1312 = vmatpush.msra.mxu0 0.0
        %1313 = vmatpush.msra.mxu0 0.0
        %1314 = vmatpush.msra.mxu0 0.0
        %1315 = vmatpush.msra.mxu0 0.0
        %1316 = vmatpush.msra.mxu0 0.0
        %1317 = vmatpush.msra.mxu0 0.0
        %1318 = vmatpush.msra.mxu0 0.0
        %1319 = vmatpush.msra.mxu0 0.0
        %1320 = vmatpush.msra.mxu0 0.0
        %1321 = vmatpush.msra.mxu0 0.0
        %1322 = vmatpush.msra.mxu0 0.0
        %1323 = vmatpush.msra.mxu0 0.0
        %1324 = vmatpush.msra.mxu0 0.0
        %1325 = vmatpush.msra.mxu0 %v1309
        %1326 = vmatmul.f32.gmra.mxu0 %v634
        %v1327 = vpop.f32.mrf.mxu0
        %v1328 = vadd.f32 0.0, %v1327
        %1329 = vdwg.mxu0
        %1330 = vmatpush.msra.mxu0 %v1260
        %1331 = vmatpush.msra.mxu0 %v1259
        %1332 = vmatpush.msra.mxu0 %v1258
        %1333 = vmatpush.msra.mxu0 %v1257
        %1334 = vmatpush.msra.mxu0 %v1256
        %1335 = vmatpush.msra.mxu0 %v1255
        %1336 = vmatpush.msra.mxu0 %v1254
        %1337 = vmatpush.msra.mxu0 %v1253
        %1338 = vmatpush.msra.mxu0 %v1252
        %1339 = vmatpush.msra.mxu0 %v1251
        %1340 = vmatpush.msra.mxu0 %v1250
        %1341 = vmatpush.msra.mxu0 %v1249
        %1342 = vmatpush.msra.mxu0 %v1248
        %1343 = vmatpush.msra.mxu0 %v1247
        %1344 = vmatpush.msra.mxu0 %v1246
        %1345 = vmatpush.msra.mxu0 %v1245
        %1346 = vmatmul.f32.gmra.mxu0 %v1241
        %v1347 = vpop.f32.mrf.mxu0
        %v1348 = vadd.f32 %v1328, %v1347
        %1349 = vdwg.mxu0
        %1350 = vmatpush.msra.mxu0 %v1276
        %1351 = vmatpush.msra.mxu0 %v1275
        %1352 = vmatpush.msra.mxu0 %v1274
        %1353 = vmatpush.msra.mxu0 %v1273
        %1354 = vmatpush.msra.mxu0 %v1272
        %1355 = vmatpush.msra.mxu0 %v1271
        %1356 = vmatpush.msra.mxu0 %v1270
        %1357 = vmatpush.msra.mxu0 %v1269
        %1358 = vmatpush.msra.mxu0 %v1268
        %1359 = vmatpush.msra.mxu0 %v1267
        %1360 = vmatpush.msra.mxu0 %v1266
        %1361 = vmatpush.msra.mxu0 %v1265
        %1362 = vmatpush.msra.mxu0 %v1264
        %1363 = vmatpush.msra.mxu0 %v1263
        %1364 = vmatpush.msra.mxu0 %v1262
        %1365 = vmatpush.msra.mxu0 %v1261
        %1366 = vmatmul.f32.gmra.mxu0 %v1242
        %v1367 = vpop.f32.mrf.mxu0
        %v1368 = vadd.f32 %v1348, %v1367
        %1369 = vdwg.mxu0
        %1370 = vmatpush.msra.mxu0 %v1292
        %1371 = vmatpush.msra.mxu0 %v1291
        %1372 = vmatpush.msra.mxu0 %v1290
        %1373 = vmatpush.msra.mxu0 %v1289
        %1374 = vmatpush.msra.mxu0 %v1288
        %1375 = vmatpush.msra.mxu0 %v1287
        %1376 = vmatpush.msra.mxu0 %v1286
        %1377 = vmatpush.msra.mxu0 %v1285
        %1378 = vmatpush.msra.mxu0 %v1284
        %1379 = vmatpush.msra.mxu0 %v1283
        %1380 = vmatpush.msra.mxu0 %v1282
        %1381 = vmatpush.msra.mxu0 %v1281
        %1382 = vmatpush.msra.mxu0 %v1280
        %1383 = vmatpush.msra.mxu0 %v1279
        %1384 = vmatpush.msra.mxu0 %v1278
        %1385 = vmatpush.msra.mxu0 %v1277
        %1386 = vmatmul.f32.gmra.mxu0 %v1243
        %v1387 = vpop.f32.mrf.mxu0
        %v1388 = vadd.f32 %v1368, %v1387
        %1389 = vdwg.mxu0
        %1390 = vmatpush.msra.mxu0 %v1308
        %1391 = vmatpush.msra.mxu0 %v1307
        %1392 = vmatpush.msra.mxu0 %v1306
        %1393 = vmatpush.msra.mxu0 %v1305
        %1394 = vmatpush.msra.mxu0 %v1304
        %1395 = vmatpush.msra.mxu0 %v1303
        %1396 = vmatpush.msra.mxu0 %v1302
        %1397 = vmatpush.msra.mxu0 %v1301
        %1398 = vmatpush.msra.mxu0 %v1300
        %1399 = vmatpush.msra.mxu0 %v1299
        %1400 = vmatpush.msra.mxu0 %v1298
        %1401 = vmatpush.msra.mxu0 %v1297
        %1402 = vmatpush.msra.mxu0 %v1296
        %1403 = vmatpush.msra.mxu0 %v1295
        %1404 = vmatpush.msra.mxu0 %v1294
        %1405 = vmatpush.msra.mxu0 %v1293
        %1406 = vmatmul.f32.gmra.mxu0 %v1244
        %v1407 = vpop.f32.mrf.mxu0
        %v1408 = vadd.f32 %v1388, %v1407
        %1409 = vdwg.mxu0
        %v1410 = vld [vmem:[%s14] sm:$0x1]
        %v1411 = vadd.f32 %v1408, %v1410
        %vm1412 = vcmask 139264
        %1413 = vst.msk [vmem:[%s528] sm:$0x1] %vm1412, %v1411
        %s1414 = sand.u32 %s367, 1
        %s1415 = scalar_lea.sflag [#allocation4], %s1414
        %s1416 = sand.u32 %s367, 1
        %s1417 = scalar_lea.vmem [#allocation3], %s1416
        %s1418 = sand.u32 %s393, 1
        %s1419 = scalar_lea.sflag [#allocation6], %s1418
        %s1420 = sand.u32 %s393, 1
        %s1421 = scalar_lea.vmem [#allocation5], %s1420
        // Predicated region
        $region81: #{da2qn_forward.7} parent=79 // pred_check
          %p1422 = pneg %p377
        $region82: #{da2qn_forward.7} parent=79 // pred_check_branch
          %1424 = sbr.rel (%p1422) target = $region84
        $region83: #{da2qn_forward.7} parent=79 // pred_region
          %1426 = vsyncadd %s1415, 0
          %s1427 = scalar_lea.hbm %s15, %s34
          %s1429 = sshll.u32 %s1417, 4
          %s1430 = int_to_ptr.vmem [resolvable:$true] %s1429
          %s1431 = sshll.u32 %s1427, 4
          %s1432 = int_to_ptr.hbm [resolvable:$true] %s1431
          %1434 = dma.vmem_to_hbm [thread:$0]  %s1430, 16, %s1432, %s1415
        $region84: #{da2qn_forward.7} parent=79 // pred_fallthru
          _
        // Predicated region
        $region85: #{da2qn_forward.7} parent=79 // pred_check
          %p1435 = pneg %p403
        $region86: #{da2qn_forward.7} parent=79 // pred_check_branch
          %1437 = sbr.rel (%p1435) target = $region88
        $region87: #{da2qn_forward.7} parent=79 // pred_region
          %1439 = vsyncadd %s1419, 0
          %s1440 = scalar_lea.hbm %s16, %s34
          %s1442 = sshll.u32 %s1421, 4
          %s1443 = int_to_ptr.vmem [resolvable:$true] %s1442
          %s1444 = sshll.u32 %s1440, 4
          %s1445 = int_to_ptr.hbm [resolvable:$true] %s1444
          %1447 = dma.vmem_to_hbm [thread:$0]  %s1443, 16, %s1445, %s1419
        $region88: #{da2qn_forward.7} parent=79 // pred_fallthru
          _
      $region80: #{da2qn_forward.7} parent=5 // pred_fallthru
        _
      %p1448 = scmp.le.s32.totalorder 2, %s29
      // Predicated region
      $region89: #{da2qn_forward.7} parent=5 // pred_check
        %p1449 = pneg %p1448
      $region90: #{da2qn_forward.7} parent=5 // pred_check_branch
        %1451 = sbr.rel (%p1449) target = $region92
      $region91: #{da2qn_forward.7} parent=5 // pred_region
        %s1452 = ssub.s32 %s29, 2
        // Predicated region
        $region93: #{da2qn_forward.7} parent=91 // pred_check
          %p1453 = pneg %p383
        $region94: #{da2qn_forward.7} parent=91 // pred_check_branch
          %1455 = sbr.rel (%p1453) target = $region96
        $region95: #{da2qn_forward.7} parent=91 // pred_region
          %s1456 = sand.u32 %s368, 1
          %s1457 = scalar_lea.sflag [#allocation4], %s1456
          %s1458 = sand.u32 %s368, 1
          %s1459 = scalar_lea.vmem [#allocation3], %s1458
          %1461 = dma.done %s1457, 16
        $region96: #{da2qn_forward.7} parent=91 // pred_fallthru
          _
        // Predicated region
        $region97: #{da2qn_forward.7} parent=91 // pred_check
          %p1462 = pneg %p409
        $region98: #{da2qn_forward.7} parent=91 // pred_check_branch
          %1464 = sbr.rel (%p1462) target = $region100
        $region99: #{da2qn_forward.7} parent=91 // pred_region
          %s1465 = sand.u32 %s394, 1
          %s1466 = scalar_lea.sflag [#allocation6], %s1465
          %s1467 = sand.u32 %s394, 1
          %s1468 = scalar_lea.vmem [#allocation5], %s1467
          %1470 = dma.done %s1466, 16
        $region100: #{da2qn_forward.7} parent=91 // pred_fallthru
          _
      $region92: #{da2qn_forward.7} parent=5 // pred_fallthru
        _
    $region6: #{da2qn_forward.7} parent=1 // loop_footer
      %s33 = sadd.s32 1, %s29
    $region7: #{da2qn_forward.7} parent=1 // loop_footer_branch
      %28 = sbr.rel target = $region3
    $region8: #{da2qn_forward.7} parent=1 // loop_exit
      _
    %1471 = vsyncpa [#allocation4], 1
    %s1472 = scalar_lea.sflag [#allocation4], 1
    %1473 = vsyncpa %s1472, 1
    %1474 = vsyncpa [#allocation6], 1
    %s1475 = scalar_lea.sflag [#allocation6], 1
    %1476 = vsyncpa %s1475, 1

</llo_original>
